<compile_context>
chip_gen: v7x
topology: tpu7x:2x2x1
jax: 0.10.0
libtpu: 0.0.40
codegen_flags: <defaults>
</compile_context>

<pallas_src>
import functools

import jax
import jax.numpy as jnp
import numpy as np
from jax.experimental import pallas as pl
from jax.experimental.pallas import tpu as pltpu

EMB = 64  # embedding_dim from the module default


def _choose_b_blk(batch, n_nodes):
    """Generation-aware batch-block size."""
    kind = ""
    try:
        kind = jax.devices()[0].device_kind.lower()
    except Exception:
        pass
    single_tc = ("v5" in kind) or ("v6" in kind)

    # VMEM gate: ~3 live f32 [b_blk, N, N] temporaries (dots / exp / products)
    # must stay well inside the default scoped-VMEM limit on every generation
    # (16 MiB on v5e is the tightest).
    budget = 8 * 1024 * 1024
    cap = max(8, budget // max(1, 3 * 4 * n_nodes * n_nodes))

    if single_tc:
        # One TensorCore: grid steps are pure serial overhead -> one big block.
        target = batch
    else:
        # v7x (2 TCs) / unknown: keep >= 2 parallel grid steps when batch allows,
        # while still filling one MXU pass (>= 256 fused-MLP rows).
        target = max(batch // 2, -(-256 // max(1, n_nodes)))

    b_blk = min(batch, target, cap)
    return max(8, (b_blk // 8) * 8)


def _action_kernel(N, B_BLK, NP,
                   x_ref, idx_ref, mask_ref,
                   wvb_ref, w1_ref, w2_ref, w3_ref, b12_ref, b3_ref,
                   out_ref):
    inv_sqrt2 = np.float32(1.0 / np.sqrt(2.0))

    # Channel planes, node axis lane-major.
    x0 = x_ref[0]                                   # [B_BLK, N] f32
    x1 = x_ref[1]
    p = x_ref[2]

    # q = k = loc / ||loc||  (EUP rsqrt). Precondition: loc != (0, 0)
    # (reference also produces NaN there).
    inv_norm = jax.lax.rsqrt(x0 * x0 + x1 * x1)
    qx = x0 * inv_norm
    qy = x1 * inv_norm

    # dots[b,i,j] = cos(theta_ij)/sqrt(2) in [-0.71, 0.71] -> exp is safe with
    # no max-subtraction (mathematically identical softmax).
    dots = (qx[:, :, None] * qx[:, None, :]
            + qy[:, :, None] * qy[:, None, :]) * inv_sqrt2        # [B_BLK, N, N]
    e = jnp.exp(dots)

    # T=1, rank-1 W_V, softmax rows sum to 1:
    #   attn @ (p*wv + bv) == (attn @ p) * wv + bv
    # so the bmm collapses to a weighted sum of p per row (exact reciprocal so
    # the row-sum-to-1 identity holds to fp accuracy).
    numer = jnp.sum(e * p[:, None, :], axis=-1, keepdims=True)    # [B_BLK, N, 1]
    denom = jnp.sum(e, axis=-1, keepdims=True)                    # [B_BLK, N, 1]
    s3 = numer * pl.reciprocal(denom, approx=False)               # == attn @ p

    # Current-node scalar per batch row (gather -> one-hot select on sublanes).
    # Precondition (as in PyTorch): 0 <= context[:,0] < N.
    idx = idx_ref[...]                                            # [B_BLK, 1] int32
    node_ids = jax.lax.broadcasted_iota(jnp.int32, (B_BLK, N, 1), 1)
    sel = node_ids == idx[:, :, None]
    s_cur = jnp.sum(jnp.where(sel, s3, 0.0), axis=1)              # [B_BLK, 1]

    # Fused MLP: append the B_BLK null-head rows to the B_BLK*N node rows and
    # run both heads through 3 MXU passes with block-packed weights.
    s_all = jnp.concatenate([s3.reshape(B_BLK * N, 1), s_cur], axis=0)  # [R, 1]
    wv = wvb_ref[0:1, :]                                          # [1, EMB] f32
    bv = wvb_ref[1:2, :]
    emb = s_all * wv + bv                                         # [R, EMB] flat

    def dense(h, w_ref, b):
        return jnp.dot(h.astype(jnp.bfloat16), w_ref[...],
                       preferred_element_type=jnp.float32) + b

    h = jnp.maximum(dense(emb, w1_ref, b12_ref[0:1, :]), 0.0)     # [R, 2*EMB]
    h = jnp.maximum(dense(h, w2_ref, b12_ref[1:2, :]), 0.0)       # [R, 2*EMB]
    q = dense(h, w3_ref, b3_ref[...])                             # [R, 2]

    q_nodes = q[: B_BLK * N, 0:1].reshape(B_BLK, N)               # [B_BLK, N] lanes
    q_null = q[B_BLK * N:, 1:2]                                   # [B_BLK, 1]

    # Assemble lane-dense [B_BLK, NP] block: mask the valid N+1 lanes, pad the
    # rest with zeros, single unmasked full-width store.
    q_valid = jnp.concatenate([q_nodes, q_null], axis=-1)         # [B_BLK, N+1]
    q_valid = jnp.where(mask_ref[...] != 0, -jnp.inf, q_valid)
    if NP > N + 1:
        pad = jnp.zeros((B_BLK, NP - (N + 1)), jnp.float32)
        q_valid = jnp.concatenate([q_valid, pad], axis=-1)
    out_ref[...] = q_valid


def action_network_forward(x, context, mask, packed, *, b_blk=None):
    """x: [B, N, 3], context: [B, 2] (float node indices), mask: [B, N+1] bool.

    `packed` is the output of pack_params() (built once, outside the hot path).
    """
    B, N, _ = x.shape
    if b_blk is None:
        b_blk = _choose_b_blk(B, N)
    B_pad = -(-B // b_blk) * b_blk
    NP = max(128, -(-(N + 1) // 128) * 128)      # lane-dense padded output width

    # Channel-plane relayout (node axis lane-major); tiny compared to the
    # per-vreg savings inside the kernel.
    xT = jnp.transpose(x, (2, 0, 1))                              # [3, B, N]
    idx = context[:, 0].astype(jnp.int32)[:, None]                # [B, 1]
    # TODO(synk): idx could move to SMEM scalar prefetch, but the one-hot select
    # needs a vector compare; the [b_blk, 1] int32 DMA is negligible.
    mask_i8 = mask.astype(jnp.int8)                               # [B, N+1]

    if B_pad != B:  # pad only when needed (pad loc with 1s to avoid 0-norm NaNs)
        xT = jnp.pad(xT, ((0, 0), (0, B_pad - B), (0, 0)), constant_values=1.0)
        idx = jnp.pad(idx, ((0, B_pad - B), (0, 0)))
        mask_i8 = jnp.pad(mask_i8, ((0, B_pad - B), (0, 0)))

    emb = packed['wvb'].shape[-1]
    grid_spec = pltpu.PrefetchScalarGridSpec(
        num_scalar_prefetch=0,
        grid=(B_pad // b_blk,),
        in_specs=[
            pl.BlockSpec((3, b_blk, N), lambda i: (0, i, 0)),       # x planes
            pl.BlockSpec((b_blk, 1), lambda i: (i, 0)),             # idx
            pl.BlockSpec((b_blk, N + 1), lambda i: (i, 0)),         # mask int8
            pl.BlockSpec((2, emb), lambda i: (0, 0)),               # [wv; bv]  f32
            pl.BlockSpec((emb, 2 * emb), lambda i: (0, 0)),         # W1p bf16
            pl.BlockSpec((2 * emb, 2 * emb), lambda i: (0, 0)),     # W2p bf16
            pl.BlockSpec((2 * emb, 2), lambda i: (0, 0)),           # W3p bf16
            pl.BlockSpec((2, 2 * emb), lambda i: (0, 0)),           # [b1p; b2p] f32
            pl.BlockSpec((1, 2), lambda i: (0, 0)),                 # b3p f32
        ],
        out_specs=pl.BlockSpec((b_blk, NP), lambda i: (i, 0)),
    )

    out = pl.pallas_call(
        functools.partial(_action_kernel, N, b_blk, NP),
        out_shape=jax.ShapeDtypeStruct((B_pad, NP), jnp.float32),
        grid_spec=grid_spec,
        compiler_params=pltpu.CompilerParams(dimension_semantics=("parallel",)),
    )(xT, idx, mask_i8,
      packed['wvb'], packed['w1'], packed['w2'], packed['w3'],
      packed['b12'], packed['b3'])

    return out[:B, :N + 1][:, :, None]


def make_params(key, emb=EMB):
    """Deterministic PyTorch-Linear-style init; weights stored as [in, out]."""
    def lin(k, fan_in, fan_out):
        k1, k2 = jax.random.split(k)
        stdv = 1.0 / np.sqrt(fan_in)
        w = jax.random.uniform(k1, (fan_in, fan_out), jnp.float32, -stdv, stdv)
        b = jax.random.uniform(k2, (1, fan_out), jnp.float32, -stdv, stdv)
        return w, b

    keys = jax.random.split(key, 7)
    P = {}
    # TODO(synk): W_K, W_Q, W2_K, W2_Q, W2_V exist in __init__ but are unused in forward(); omitted.
    P['wv'], P['bv'] = lin(keys[0], 1, emb)        # W_V: Linear(node_dim-2=1, emb)
    P['w1'], P['b1'] = lin(keys[1], emb, emb)      # fc[0]
    P['w2'], P['b2'] = lin(keys[2], emb, emb)      # fc[2]
    P['w3'], P['b3'] = lin(keys[3], emb, 1)        # fc[4]
    P['n1'], P['nb1'] = lin(keys[4], emb, emb)     # fc_null[0]
    P['n2'], P['nb2'] = lin(keys[5], emb, emb)     # fc_null[2]
    P['n3'], P['nb3'] = lin(keys[6], emb, 1)       # fc_null[4]
    return P


def pack_params(P):
    """Pack the 14 weight/bias tensors into 6 resident kernel slabs (done ONCE)."""
    emb = P['w1'].shape[0]
    z = jnp.zeros((emb, emb), jnp.float32)
    z1 = jnp.zeros((emb, 1), jnp.float32)
    w1p = jnp.concatenate([P['w1'], P['n1']], axis=1)                       # [64, 128]
    w2p = jnp.concatenate([jnp.concatenate([P['w2'], z], axis=1),
                           jnp.concatenate([z, P['n2']], axis=1)], axis=0)  # [128, 128] block-diag
    w3p = jnp.concatenate([jnp.concatenate([P['w3'], z1], axis=1),
                           jnp.concatenate([z1, P['n3']], axis=1)], axis=0)  # [128, 2] block-diag
    return dict(
        wvb=jnp.concatenate([P['wv'], P['bv']], axis=0),                    # [2, 64]  f32
        w1=w1p.astype(jnp.bfloat16),
        w2=w2p.astype(jnp.bfloat16),
        w3=w3p.astype(jnp.bfloat16),
        b12=jnp.concatenate([jnp.concatenate([P['b1'], P['nb1']], axis=1),
                             jnp.concatenate([P['b2'], P['nb2']], axis=1)],
                            axis=0),                                        # [2, 128] f32
        b3=jnp.concatenate([P['b3'], P['nb3']], axis=1),                    # [1, 2]   f32
    )


def ref_forward(x, context, mask, P):
    """Pure-JAX f32 reference of the PyTorch forward, for validation."""
    B, N, _ = x.shape
    loc = x[:, :, :2]
    p = x[:, :, 2:3]
    qn = loc / jnp.linalg.norm(loc, axis=-1, keepdims=True)
    dots = jnp.einsum('bnd,bmd->bnm', qn, qn) / jnp.sqrt(2.0)
    attn = jax.nn.softmax(dots, axis=-1)
    v = p @ P['wv'] + P['bv']
    emb = jnp.einsum('bnm,bme->bne', attn, v)
    h = jax.nn.relu(emb @ P['w1'] + P['b1'])
    h = jax.nn.relu(h @ P['w2'] + P['b2'])
    qv = h @ P['w3'] + P['b3']
    idx = context[:, 0].astype(jnp.int32)
    row = emb[jnp.arange(B), idx][:, None, :]
    hn = jax.nn.relu(row @ P['n1'] + P['nb1'])
    hn = jax.nn.relu(hn @ P['n2'] + P['nb2'])
    q_null = hn @ P['n3'] + P['nb3']
    q = jnp.concatenate([qv, q_null], axis=1)
    return jnp.where(mask[:, :, None], -jnp.inf, q)


if __name__ == "__main__":
    key = jax.random.PRNGKey(0)
    kx, kc, km, kp = jax.random.split(key, 4)

    # Small shapes, batch large enough to exercise batch-blocking:
    # B=64, N=8 -> v7x: b_blk=32 (grid=2, both TCs busy); v5e/v6e: b_blk=64 (grid=1).
    B, N = 64, 8
    x = jax.random.normal(kx, (B, N, 3), jnp.float32)
    ctx_nodes = jax.random.randint(kc, (B, 2), 0, N)
    context = ctx_nodes.astype(jnp.float32)                # [B, 2], like the PyTorch module
    mask = jax.random.bernoulli(km, 0.2, (B, N + 1))        # [B, N+1] bool

    params = make_params(kp)
    packed = pack_params(params)                            # packed once, reused every call

    fwd = jax.jit(action_network_forward)
    out = fwd(x, context, mask, packed)
    out = jax.block_until_ready(out)
    assert out.shape == (B, N + 1, 1)

    ref = ref_forward(x, context, mask, params)
    # Loose tolerance: kernel uses bf16 MXU operands (f32 accumulation); the
    # softmax itself is done in f32 with an exact reciprocal.
    np.testing.assert_allclose(np.asarray(out), np.asarray(ref), rtol=5e-2, atol=5e-2)

    print("KERNEL_OK")
</pallas_src>

<mosaic_0001>
module attributes {stable_mosaic.version = 11 : i64} {
  func.func @_action_kernel(%arg0: i32, %arg1: memref<3x32x8xf32, #tpu.memory_space<vmem>>, %arg2: memref<32x1xi32, #tpu.memory_space<vmem>>, %arg3: memref<32x9xi8, #tpu.memory_space<vmem>>, %arg4: memref<2x64xf32, #tpu.memory_space<vmem>>, %arg5: memref<64x128xbf16, #tpu.memory_space<vmem>>, %arg6: memref<128x128xbf16, #tpu.memory_space<vmem>>, %arg7: memref<128x2xbf16, #tpu.memory_space<vmem>>, %arg8: memref<2x128xf32, #tpu.memory_space<vmem>>, %arg9: memref<1x2xf32, #tpu.memory_space<vmem>>, %arg10: memref<32x128xf32, #tpu.memory_space<vmem>>) attributes {dimension_semantics = [#tpu.dimension_semantics<parallel>], iteration_bounds = array<i64: 2>, scalar_prefetch = 0 : i64, scratch_operands = 0 : i64, tpu.core_type = #tpu.core_type<tc>, window_params = [{transform_indices = @transform_0, window_bounds = array<i64: 3, 32, 8>}, {transform_indices = @transform_1, window_bounds = array<i64: 32, 1>}, {transform_indices = @transform_2, window_bounds = array<i64: 32, 9>}, {pipeline_mode = #tpu.pipeline_mode<synchronous>, transform_indices = @transform_3, window_bounds = array<i64: 2, 64>}, {pipeline_mode = #tpu.pipeline_mode<synchronous>, transform_indices = @transform_4, window_bounds = array<i64: 64, 128>}, {pipeline_mode = #tpu.pipeline_mode<synchronous>, transform_indices = @transform_5, window_bounds = array<i64: 128, 128>}, {pipeline_mode = #tpu.pipeline_mode<synchronous>, transform_indices = @transform_6, window_bounds = array<i64: 128, 2>}, {pipeline_mode = #tpu.pipeline_mode<synchronous>, transform_indices = @transform_7, window_bounds = array<i64: 2, 128>}, {pipeline_mode = #tpu.pipeline_mode<synchronous>, transform_indices = @transform_8, window_bounds = array<i64: 1, 2>}, {transform_indices = @transform_9, window_bounds = array<i64: 32, 128>}]} {
    %c0 = arith.constant 0 : index
    %c0_0 = arith.constant 0 : index
    %c0_1 = arith.constant 0 : index
    %0 = vector.load %arg1[%c0, %c0_0, %c0_1] : memref<3x32x8xf32, #tpu.memory_space<vmem>>, vector<1x32x8xf32>
    %1 = vector.shape_cast %0 : vector<1x32x8xf32> to vector<32x8xf32>
    %c1 = arith.constant 1 : index
    %c0_2 = arith.constant 0 : index
    %c0_3 = arith.constant 0 : index
    %2 = vector.load %arg1[%c1, %c0_2, %c0_3] : memref<3x32x8xf32, #tpu.memory_space<vmem>>, vector<1x32x8xf32>
    %3 = vector.shape_cast %2 : vector<1x32x8xf32> to vector<32x8xf32>
    %c2 = arith.constant 2 : index
    %c0_4 = arith.constant 0 : index
    %c0_5 = arith.constant 0 : index
    %4 = vector.load %arg1[%c2, %c0_4, %c0_5] : memref<3x32x8xf32, #tpu.memory_space<vmem>>, vector<1x32x8xf32>
    %5 = vector.shape_cast %4 : vector<1x32x8xf32> to vector<32x8xf32>
    %6 = arith.mulf %1, %1 : vector<32x8xf32>
    %7 = arith.mulf %3, %3 : vector<32x8xf32>
    %8 = arith.addf %6, %7 : vector<32x8xf32>
    %9 = math.rsqrt %8 : vector<32x8xf32>
    %10 = arith.mulf %1, %9 : vector<32x8xf32>
    %11 = arith.mulf %3, %9 : vector<32x8xf32>
    %12 = vector.shape_cast %10 : vector<32x8xf32> to vector<32x8x1xf32>
    %13 = vector.shape_cast %10 : vector<32x8xf32> to vector<32x1x8xf32>
    %14 = vector.broadcast %12 : vector<32x8x1xf32> to vector<32x8x8xf32>
    %15 = vector.broadcast %13 : vector<32x1x8xf32> to vector<32x8x8xf32>
    %16 = arith.mulf %14, %15 : vector<32x8x8xf32>
    %17 = vector.shape_cast %11 : vector<32x8xf32> to vector<32x8x1xf32>
    %18 = vector.shape_cast %11 : vector<32x8xf32> to vector<32x1x8xf32>
    %19 = vector.broadcast %17 : vector<32x8x1xf32> to vector<32x8x8xf32>
    %20 = vector.broadcast %18 : vector<32x1x8xf32> to vector<32x8x8xf32>
    %21 = arith.mulf %19, %20 : vector<32x8x8xf32>
    %22 = arith.addf %16, %21 : vector<32x8x8xf32>
    %cst = arith.constant 0.707106769 : f32
    %23 = vector.broadcast %cst : f32 to vector<32x8x8xf32>
    %24 = arith.mulf %22, %23 : vector<32x8x8xf32>
    %25 = math.exp %24 : vector<32x8x8xf32>
    %26 = vector.shape_cast %5 : vector<32x8xf32> to vector<32x1x8xf32>
    %27 = vector.broadcast %26 : vector<32x1x8xf32> to vector<32x8x8xf32>
    %28 = arith.mulf %25, %27 : vector<32x8x8xf32>
    %cst_6 = arith.constant dense<0.000000e+00> : vector<32x8xf32>
    %29 = vector.multi_reduction <add>, %28, %cst_6 [2] : vector<32x8x8xf32> to vector<32x8xf32>
    %30 = vector.shape_cast %29 : vector<32x8xf32> to vector<32x8x1xf32>
    %cst_7 = arith.constant dense<0.000000e+00> : vector<32x8xf32>
    %31 = vector.multi_reduction <add>, %25, %cst_7 [2] : vector<32x8x8xf32> to vector<32x8xf32>
    %32 = vector.shape_cast %31 : vector<32x8xf32> to vector<32x8x1xf32>
    %33 = tpu.reciprocal %32 : vector<32x8x1xf32> -> vector<32x8x1xf32>
    %34 = arith.mulf %30, %33 : vector<32x8x1xf32>
    %c0_8 = arith.constant 0 : index
    %c0_9 = arith.constant 0 : index
    %35 = vector.load %arg2[%c0_8, %c0_9] : memref<32x1xi32, #tpu.memory_space<vmem>>, vector<32x1xi32>
    %36 = tpu.iota {dimensions = array<i32: 1>} : vector<32x8x1xi32>
    %37 = vector.shape_cast %35 : vector<32x1xi32> to vector<32x1x1xi32>
    %38 = vector.broadcast %37 : vector<32x1x1xi32> to vector<32x8x1xi32>
    %39 = arith.cmpi eq, %36, %38 : vector<32x8x1xi32>
    %cst_10 = arith.constant 0.000000e+00 : f32
    %40 = vector.broadcast %cst_10 : f32 to vector<32x8x1xf32>
    %41 = arith.select %39, %34, %40 : vector<32x8x1xi1>, vector<32x8x1xf32>
    %cst_11 = arith.constant dense<0.000000e+00> : vector<32x1xf32>
    %42 = vector.multi_reduction <add>, %41, %cst_11 [1] : vector<32x8x1xf32> to vector<32x1xf32>
    %43 = vector.shape_cast %34 : vector<32x8x1xf32> to vector<256x1xf32>
    %44 = tpu.concatenate %43, %42 in 0 : vector<256x1xf32>, vector<32x1xf32> -> vector<288x1xf32>
    %c0_12 = arith.constant 0 : index
    %c0_13 = arith.constant 0 : index
    %45 = vector.load %arg4[%c0_12, %c0_13] : memref<2x64xf32, #tpu.memory_space<vmem>>, vector<1x64xf32>
    %c1_14 = arith.constant 1 : index
    %c0_15 = arith.constant 0 : index
    %46 = vector.load %arg4[%c1_14, %c0_15] : memref<2x64xf32, #tpu.memory_space<vmem>>, vector<1x64xf32>
    %47 = vector.broadcast %44 : vector<288x1xf32> to vector<288x64xf32>
    %48 = vector.broadcast %45 : vector<1x64xf32> to vector<288x64xf32>
    %49 = arith.mulf %47, %48 : vector<288x64xf32>
    %50 = vector.broadcast %46 : vector<1x64xf32> to vector<288x64xf32>
    %51 = arith.addf %49, %50 : vector<288x64xf32>
    %c0_16 = arith.constant 0 : index
    %c0_17 = arith.constant 0 : index
    %52 = vector.load %arg8[%c0_16, %c0_17] : memref<2x128xf32, #tpu.memory_space<vmem>>, vector<1x128xf32>
    %53 = arith.truncf %51 : vector<288x64xf32> to vector<288x64xbf16>
    %c0_18 = arith.constant 0 : index
    %c0_19 = arith.constant 0 : index
    %54 = vector.load %arg5[%c0_18, %c0_19] : memref<64x128xbf16, #tpu.memory_space<vmem>>, vector<64x128xbf16>
    %cst_20 = arith.constant dense<0.000000e+00> : vector<288x128xf32>
    %55 = tpu.matmul %53, %54, %cst_20 {dimension_numbers = #tpu.dot_dimension_numbers<[1], [0], [0], [1], [0, 0, 1, 1], [], []>} : vector<288x64xbf16>, vector<64x128xbf16>, vector<288x128xf32> -> vector<288x128xf32>
    %56 = vector.broadcast %52 : vector<1x128xf32> to vector<288x128xf32>
    %57 = arith.addf %55, %56 : vector<288x128xf32>
    %cst_21 = arith.constant 0.000000e+00 : f32
    %58 = vector.broadcast %cst_21 : f32 to vector<288x128xf32>
    %59 = arith.maximumf %57, %58 : vector<288x128xf32>
    %c1_22 = arith.constant 1 : index
    %c0_23 = arith.constant 0 : index
    %60 = vector.load %arg8[%c1_22, %c0_23] : memref<2x128xf32, #tpu.memory_space<vmem>>, vector<1x128xf32>
    %61 = arith.truncf %59 : vector<288x128xf32> to vector<288x128xbf16>
    %c0_24 = arith.constant 0 : index
    %c0_25 = arith.constant 0 : index
    %62 = vector.load %arg6[%c0_24, %c0_25] : memref<128x128xbf16, #tpu.memory_space<vmem>>, vector<128x128xbf16>
    %cst_26 = arith.constant dense<0.000000e+00> : vector<288x128xf32>
    %63 = tpu.matmul %61, %62, %cst_26 {dimension_numbers = #tpu.dot_dimension_numbers<[1], [0], [0], [1], [0, 0, 1, 1], [], []>} : vector<288x128xbf16>, vector<128x128xbf16>, vector<288x128xf32> -> vector<288x128xf32>
    %64 = vector.broadcast %60 : vector<1x128xf32> to vector<288x128xf32>
    %65 = arith.addf %63, %64 : vector<288x128xf32>
    %cst_27 = arith.constant 0.000000e+00 : f32
    %66 = vector.broadcast %cst_27 : f32 to vector<288x128xf32>
    %67 = arith.maximumf %65, %66 : vector<288x128xf32>
    %c0_28 = arith.constant 0 : index
    %c0_29 = arith.constant 0 : index
    %68 = vector.load %arg9[%c0_28, %c0_29] : memref<1x2xf32, #tpu.memory_space<vmem>>, vector<1x2xf32>
    %69 = arith.truncf %67 : vector<288x128xf32> to vector<288x128xbf16>
    %c0_30 = arith.constant 0 : index
    %c0_31 = arith.constant 0 : index
    %70 = vector.load %arg7[%c0_30, %c0_31] : memref<128x2xbf16, #tpu.memory_space<vmem>>, vector<128x2xbf16>
    %cst_32 = arith.constant dense<0.000000e+00> : vector<288x2xf32>
    %71 = tpu.matmul %69, %70, %cst_32 {dimension_numbers = #tpu.dot_dimension_numbers<[1], [0], [0], [1], [0, 0, 1, 1], [], []>} : vector<288x128xbf16>, vector<128x2xbf16>, vector<288x2xf32> -> vector<288x2xf32>
    %72 = vector.broadcast %68 : vector<1x2xf32> to vector<288x2xf32>
    %73 = arith.addf %71, %72 : vector<288x2xf32>
    %74 = vector.extract_strided_slice %73 {offsets = [0, 0], sizes = [256, 1], strides = [1, 1]} : vector<288x2xf32> to vector<256x1xf32>
    %75 = vector.shape_cast %74 : vector<256x1xf32> to vector<32x8xf32>
    %76 = vector.extract_strided_slice %73 {offsets = [256, 1], sizes = [32, 1], strides = [1, 1]} : vector<288x2xf32> to vector<32x1xf32>
    %77 = tpu.concatenate %75, %76 in 1 : vector<32x8xf32>, vector<32x1xf32> -> vector<32x9xf32>
    %c0_33 = arith.constant 0 : index
    %c0_34 = arith.constant 0 : index
    %78 = vector.load %arg3[%c0_33, %c0_34] : memref<32x9xi8, #tpu.memory_space<vmem>>, vector<32x9xi8>
    %c0_i8 = arith.constant 0 : i8
    %79 = vector.broadcast %c0_i8 : i8 to vector<32x9xi8>
    %80 = arith.cmpi ne, %78, %79 : vector<32x9xi8>
    %cst_35 = arith.constant 0xFF800000 : f32
    %81 = vector.broadcast %cst_35 : f32 to vector<32x9xf32>
    %82 = arith.select %80, %81, %77 : vector<32x9xi1>, vector<32x9xf32>
    %cst_36 = arith.constant 0.000000e+00 : f32
    %83 = vector.broadcast %cst_36 : f32 to vector<32x119xf32>
    %84 = tpu.concatenate %82, %83 in 1 : vector<32x9xf32>, vector<32x119xf32> -> vector<32x128xf32>
    %c0_37 = arith.constant 0 : index
    %c0_38 = arith.constant 0 : index
    %85 = vector.load %arg10[%c0_37, %c0_38] : memref<32x128xf32, #tpu.memory_space<vmem>>, vector<32x128xf32>
    tpu.vector_store %arg10[%c0_37, %c0_38], %84 {strides = array<i32>} : memref<32x128xf32, #tpu.memory_space<vmem>>, vector<32x128xf32>,
    return
  }
  func.func @transform_0(%arg0: i32) -> (i32, i32, i32) {
    %c0_i32 = arith.constant 0 : i32
    %c0_i32_0 = arith.constant 0 : i32
    %c0_i32_1 = arith.constant 0 : i32
    return %c0_i32, %arg0, %c0_i32_0 : i32, i32, i32
  }
  func.func @transform_1(%arg0: i32) -> (i32, i32) {
    %c0_i32 = arith.constant 0 : i32
    %c0_i32_0 = arith.constant 0 : i32
    return %arg0, %c0_i32 : i32, i32
  }
  func.func @transform_2(%arg0: i32) -> (i32, i32) {
    %c0_i32 = arith.constant 0 : i32
    %c0_i32_0 = arith.constant 0 : i32
    return %arg0, %c0_i32 : i32, i32
  }
  func.func @transform_3(%arg0: i32) -> (i32, i32) {
    %c0_i32 = arith.constant 0 : i32
    %c0_i32_0 = arith.constant 0 : i32
    %c0_i32_1 = arith.constant 0 : i32
    return %c0_i32, %c0_i32_0 : i32, i32
  }
  func.func @transform_4(%arg0: i32) -> (i32, i32) {
    %c0_i32 = arith.constant 0 : i32
    %c0_i32_0 = arith.constant 0 : i32
    %c0_i32_1 = arith.constant 0 : i32
    return %c0_i32, %c0_i32_0 : i32, i32
  }
  func.func @transform_5(%arg0: i32) -> (i32, i32) {
    %c0_i32 = arith.constant 0 : i32
    %c0_i32_0 = arith.constant 0 : i32
    %c0_i32_1 = arith.constant 0 : i32
    return %c0_i32, %c0_i32_0 : i32, i32
  }
  func.func @transform_6(%arg0: i32) -> (i32, i32) {
    %c0_i32 = arith.constant 0 : i32
    %c0_i32_0 = arith.constant 0 : i32
    %c0_i32_1 = arith.constant 0 : i32
    return %c0_i32, %c0_i32_0 : i32, i32
  }
  func.func @transform_7(%arg0: i32) -> (i32, i32) {
    %c0_i32 = arith.constant 0 : i32
    %c0_i32_0 = arith.constant 0 : i32
    %c0_i32_1 = arith.constant 0 : i32
    return %c0_i32, %c0_i32_0 : i32, i32
  }
  func.func @transform_8(%arg0: i32) -> (i32, i32) {
    %c0_i32 = arith.constant 0 : i32
    %c0_i32_0 = arith.constant 0 : i32
    %c0_i32_1 = arith.constant 0 : i32
    return %c0_i32, %c0_i32_0 : i32, i32
  }
  func.func @transform_9(%arg0: i32) -> (i32, i32) {
    %c0_i32 = arith.constant 0 : i32
    %c0_i32_0 = arith.constant 0 : i32
    return %arg0, %c0_i32 : i32, i32
  }
}

</mosaic_0001>

<llo_original>
// kernel: action_network_forward.1
$region0: #{action_network_forward.1}
  #allocation0 [shape = 'u32[]', space=smem, size = 0x4, offset = 0x4, fixed_abs, tag = 'smem constant byte address 0x4 - core index']
  #allocation1 [shape = 'u32[144,128]{1,0:T(1,128)}', space=vmem, size = 0x12000, scoped, tag = 'internal scratch']
  %s0 = inlined_call_operand.vmem [shape: f32[3,64,8], index: 0, kind: input, shape index: {}]
  %s1 = inlined_call_operand.vmem [shape: s32[64,1], index: 1, kind: input, shape index: {}]
  %s2 = inlined_call_operand.vmem [shape: s8[64,9], index: 2, kind: input, shape index: {}]
  %s3 = inlined_call_operand.vmem [shape: f32[2,64], index: 3, kind: input, shape index: {}]
  %s4 = inlined_call_operand.vmem [shape: bf16[64,128], index: 4, kind: input, shape index: {}]
  %s5 = inlined_call_operand.vmem [shape: bf16[128,128], index: 5, kind: input, shape index: {}]
  %s6 = inlined_call_operand.vmem [shape: bf16[128,2], index: 6, kind: input, shape index: {}]
  %s7 = inlined_call_operand.vmem [shape: f32[2,128], index: 7, kind: input, shape index: {}]
  %s8 = inlined_call_operand.vmem [shape: f32[1,2], index: 8, kind: input, shape index: {}]
  %s9 = inlined_call_operand.vmem [shape: f32[64,128], index: 9, kind: output, shape index: {}]
  %s10 = sld [smem:[#allocation0]]
  $region107: #{action_network_forward.1} parent=0
    _
  %s12 = ssub.s32 1, %s10
  %s13 = scalar_select 0, %s12, %s10
  $region1: #{action_network_forward.1} parent=0
    #allocation2 [shape = 'u8[98304]{0}', space=vmem, size = 0x18000, scoped, tag = 'input window, operand 0']
    loop: start=0, step=1, limit=4
    $region2: #{action_network_forward.1} parent=1 // loop_pre_header
      _
    $region3: #{action_network_forward.1} parent=1 // loop_header
      %s15 = sphi 0, %s19
      %p16 = scmp.ge.s32.totalorder %s15, 4
      %s25 = sphi 0, %s27
      %s28 = sphi 0, %s25
      %s29 = sphi 0, %s28
      %s45 = sphi 0, %s29
      %s51 = sphi 0, %s53
      %s54 = sphi 0, %s51
      %s55 = sphi 0, %s54
      %s71 = sphi 0, %s55
      %s77 = sphi 0, %s79
      %s80 = sphi 0, %s77
      %s81 = sphi 0, %s80
      %s97 = sphi 0, %s81
      %s101 = sphi 0, %s101
      %s103 = sphi 0, %s101
      %s104 = sphi 0, %s103
      %s118 = sphi 0, %s104
      %s122 = sphi 0, %s122
      %s124 = sphi 0, %s122
      %s125 = sphi 0, %s124
      %s139 = sphi 0, %s125
      %s143 = sphi 0, %s143
      %s145 = sphi 0, %s143
      %s146 = sphi 0, %s145
      %s160 = sphi 0, %s146
      %s164 = sphi 0, %s164
      %s166 = sphi 0, %s164
      %s167 = sphi 0, %s166
      %s181 = sphi 0, %s167
      %s185 = sphi 0, %s185
      %s187 = sphi 0, %s185
      %s188 = sphi 0, %s187
      %s202 = sphi 0, %s188
      %s206 = sphi 0, %s206
      %s208 = sphi 0, %s206
      %s209 = sphi 0, %s208
      %s223 = sphi 0, %s209
      %s229 = sphi 0, %s231
      %s232 = sphi 0, %s229
      %s233 = sphi 0, %s232
      %s249 = sphi 0, %s233
    $region4: #{action_network_forward.1} parent=1 // loop_header_branch
      %18 = sbr.rel (%p16) target = $region8
    $region5: #{action_network_forward.1} parent=1 // loop_body
      %s20 = ssub.s32 %s15, 1
      %s21 = ssub.s32 %s15, 2
      %s22 = sadd.s32 %s15, 1
      %s23 = ssub.s32 %s15, %s22
      %p24 = scmp.eq.s32.totalorder %s23, 0
      %s26 = sadd.s32 %s25, 1
      %s27 = scalar_select %p24, %s25, %s26
      %p30 = pneg %p24
      %p31 = scmp.eq.s32.totalorder %s15, 1
      %p32 = por %p30, %p31
      %p33 = scmp.ne.s32.totalorder %s25, %s28
      %p34 = scmp.eq.s32.totalorder %s15, 0
      %p35 = por %p33, %p34
      %p36 = scmp.ne.s32.totalorder %s25, %s28
      %p37 = scmp.eq.s32.totalorder %s20, 1
      %p38 = por %p36, %p37
      %p39 = scmp.ne.s32.totalorder %s28, %s29
      %p40 = scmp.eq.s32.totalorder %s20, 0
      %p41 = por %p39, %p40
      %p42 = scmp.ne.s32.totalorder %s28, %s29
      %p43 = scmp.eq.s32.totalorder %s21, 1
      %p44 = por %p42, %p43
      %p46 = scmp.ne.s32.totalorder %s29, %s45
      %p47 = scmp.eq.s32.totalorder %s21, 0
      %p48 = por %p46, %p47
      %s49 = ssub.s32 %s15, %s22
      %p50 = scmp.eq.s32.totalorder %s49, 0
      %s52 = sadd.s32 %s51, 1
      %s53 = scalar_select %p50, %s51, %s52
      %p56 = pneg %p50
      %p57 = scmp.eq.s32.totalorder %s15, 1
      %p58 = por %p56, %p57
      %p59 = scmp.ne.s32.totalorder %s51, %s54
      %p60 = scmp.eq.s32.totalorder %s15, 0
      %p61 = por %p59, %p60
      %p62 = scmp.ne.s32.totalorder %s51, %s54
      %p63 = scmp.eq.s32.totalorder %s20, 1
      %p64 = por %p62, %p63
      %p65 = scmp.ne.s32.totalorder %s54, %s55
      %p66 = scmp.eq.s32.totalorder %s20, 0
      %p67 = por %p65, %p66
      %p68 = scmp.ne.s32.totalorder %s54, %s55
      %p69 = scmp.eq.s32.totalorder %s21, 1
      %p70 = por %p68, %p69
      %p72 = scmp.ne.s32.totalorder %s55, %s71
      %p73 = scmp.eq.s32.totalorder %s21, 0
      %p74 = por %p72, %p73
      %s75 = ssub.s32 %s15, %s22
      %p76 = scmp.eq.s32.totalorder %s75, 0
      %s78 = sadd.s32 %s77, 1
      %s79 = scalar_select %p76, %s77, %s78
      %p82 = pneg %p76
      %p83 = scmp.eq.s32.totalorder %s15, 1
      %p84 = por %p82, %p83
      %p85 = scmp.ne.s32.totalorder %s77, %s80
      %p86 = scmp.eq.s32.totalorder %s15, 0
      %p87 = por %p85, %p86
      %p88 = scmp.ne.s32.totalorder %s77, %s80
      %p89 = scmp.eq.s32.totalorder %s20, 1
      %p90 = por %p88, %p89
      %p91 = scmp.ne.s32.totalorder %s80, %s81
      %p92 = scmp.eq.s32.totalorder %s20, 0
      %p93 = por %p91, %p92
      %p94 = scmp.ne.s32.totalorder %s80, %s81
      %p95 = scmp.eq.s32.totalorder %s21, 1
      %p96 = por %p94, %p95
      %p98 = scmp.ne.s32.totalorder %s81, %s97
      %p99 = scmp.eq.s32.totalorder %s21, 0
      %p100 = por %p98, %p99
      %s102 = sadd.s32 %s101, 1
      %p105 = scmp.eq.s32.totalorder %s15, 1
      %p106 = scmp.ne.s32.totalorder %s101, %s103
      %p107 = scmp.eq.s32.totalorder %s15, 0
      %p108 = por %p106, %p107
      %p109 = scmp.ne.s32.totalorder %s101, %s103
      %p110 = scmp.eq.s32.totalorder %s20, 1
      %p111 = por %p109, %p110
      %p112 = scmp.ne.s32.totalorder %s103, %s104
      %p113 = scmp.eq.s32.totalorder %s20, 0
      %p114 = por %p112, %p113
      %p115 = scmp.ne.s32.totalorder %s103, %s104
      %p116 = scmp.eq.s32.totalorder %s21, 1
      %p117 = por %p115, %p116
      %p119 = scmp.ne.s32.totalorder %s104, %s118
      %p120 = scmp.eq.s32.totalorder %s21, 0
      %p121 = por %p119, %p120
      %s123 = sadd.s32 %s122, 1
      %p126 = scmp.eq.s32.totalorder %s15, 1
      %p127 = scmp.ne.s32.totalorder %s122, %s124
      %p128 = scmp.eq.s32.totalorder %s15, 0
      %p129 = por %p127, %p128
      %p130 = scmp.ne.s32.totalorder %s122, %s124
      %p131 = scmp.eq.s32.totalorder %s20, 1
      %p132 = por %p130, %p131
      %p133 = scmp.ne.s32.totalorder %s124, %s125
      %p134 = scmp.eq.s32.totalorder %s20, 0
      %p135 = por %p133, %p134
      %p136 = scmp.ne.s32.totalorder %s124, %s125
      %p137 = scmp.eq.s32.totalorder %s21, 1
      %p138 = por %p136, %p137
      %p140 = scmp.ne.s32.totalorder %s125, %s139
      %p141 = scmp.eq.s32.totalorder %s21, 0
      %p142 = por %p140, %p141
      %s144 = sadd.s32 %s143, 1
      %p147 = scmp.eq.s32.totalorder %s15, 1
      %p148 = scmp.ne.s32.totalorder %s143, %s145
      %p149 = scmp.eq.s32.totalorder %s15, 0
      %p150 = por %p148, %p149
      %p151 = scmp.ne.s32.totalorder %s143, %s145
      %p152 = scmp.eq.s32.totalorder %s20, 1
      %p153 = por %p151, %p152
      %p154 = scmp.ne.s32.totalorder %s145, %s146
      %p155 = scmp.eq.s32.totalorder %s20, 0
      %p156 = por %p154, %p155
      %p157 = scmp.ne.s32.totalorder %s145, %s146
      %p158 = scmp.eq.s32.totalorder %s21, 1
      %p159 = por %p157, %p158
      %p161 = scmp.ne.s32.totalorder %s146, %s160
      %p162 = scmp.eq.s32.totalorder %s21, 0
      %p163 = por %p161, %p162
      %s165 = sadd.s32 %s164, 1
      %p168 = scmp.eq.s32.totalorder %s15, 1
      %p169 = scmp.ne.s32.totalorder %s164, %s166
      %p170 = scmp.eq.s32.totalorder %s15, 0
      %p171 = por %p169, %p170
      %p172 = scmp.ne.s32.totalorder %s164, %s166
      %p173 = scmp.eq.s32.totalorder %s20, 1
      %p174 = por %p172, %p173
      %p175 = scmp.ne.s32.totalorder %s166, %s167
      %p176 = scmp.eq.s32.totalorder %s20, 0
      %p177 = por %p175, %p176
      %p178 = scmp.ne.s32.totalorder %s166, %s167
      %p179 = scmp.eq.s32.totalorder %s21, 1
      %p180 = por %p178, %p179
      %p182 = scmp.ne.s32.totalorder %s167, %s181
      %p183 = scmp.eq.s32.totalorder %s21, 0
      %p184 = por %p182, %p183
      %s186 = sadd.s32 %s185, 1
      %p189 = scmp.eq.s32.totalorder %s15, 1
      %p190 = scmp.ne.s32.totalorder %s185, %s187
      %p191 = scmp.eq.s32.totalorder %s15, 0
      %p192 = por %p190, %p191
      %p193 = scmp.ne.s32.totalorder %s185, %s187
      %p194 = scmp.eq.s32.totalorder %s20, 1
      %p195 = por %p193, %p194
      %p196 = scmp.ne.s32.totalorder %s187, %s188
      %p197 = scmp.eq.s32.totalorder %s20, 0
      %p198 = por %p196, %p197
      %p199 = scmp.ne.s32.totalorder %s187, %s188
      %p200 = scmp.eq.s32.totalorder %s21, 1
      %p201 = por %p199, %p200
      %p203 = scmp.ne.s32.totalorder %s188, %s202
      %p204 = scmp.eq.s32.totalorder %s21, 0
      %p205 = por %p203, %p204
      %s207 = sadd.s32 %s206, 1
      %p210 = scmp.eq.s32.totalorder %s15, 1
      %p211 = scmp.ne.s32.totalorder %s206, %s208
      %p212 = scmp.eq.s32.totalorder %s15, 0
      %p213 = por %p211, %p212
      %p214 = scmp.ne.s32.totalorder %s206, %s208
      %p215 = scmp.eq.s32.totalorder %s20, 1
      %p216 = por %p214, %p215
      %p217 = scmp.ne.s32.totalorder %s208, %s209
      %p218 = scmp.eq.s32.totalorder %s20, 0
      %p219 = por %p217, %p218
      %p220 = scmp.ne.s32.totalorder %s208, %s209
      %p221 = scmp.eq.s32.totalorder %s21, 1
      %p222 = por %p220, %p221
      %p224 = scmp.ne.s32.totalorder %s209, %s223
      %p225 = scmp.eq.s32.totalorder %s21, 0
      %p226 = por %p224, %p225
      %s227 = ssub.s32 %s15, %s22
      %p228 = scmp.eq.s32.totalorder %s227, 0
      %s230 = sadd.s32 %s229, 1
      %s231 = scalar_select %p228, %s229, %s230
      %p234 = pneg %p228
      %p235 = scmp.eq.s32.totalorder %s15, 1
      %p236 = por %p234, %p235
      %p237 = scmp.ne.s32.totalorder %s229, %s232
      %p238 = scmp.eq.s32.totalorder %s15, 0
      %p239 = por %p237, %p238
      %p240 = scmp.ne.s32.totalorder %s229, %s232
      %p241 = scmp.eq.s32.totalorder %s20, 1
      %p242 = por %p240, %p241
      %p243 = scmp.ne.s32.totalorder %s232, %s233
      %p244 = scmp.eq.s32.totalorder %s20, 0
      %p245 = por %p243, %p244
      %p246 = scmp.ne.s32.totalorder %s232, %s233
      %p247 = scmp.eq.s32.totalorder %s21, 1
      %p248 = por %p246, %p247
      %p250 = scmp.ne.s32.totalorder %s233, %s249
      %p251 = scmp.eq.s32.totalorder %s21, 0
      %p252 = por %p250, %p251
      %p253 = scmp.le.s32.totalorder 1, %s15
      %p254 = scmp.lt.s32.totalorder %s15, 3
      %p255 = pnand %p253, %p254
      %p256 = pneg %p255
      // Predicated region
      $region9: #{action_network_forward.1} parent=5 // pred_check
        _
      $region10: #{action_network_forward.1} parent=5 // pred_check_branch
        %258 = sbr.rel (%p255) target = $region12
      $region11: #{action_network_forward.1} parent=5 // pred_region
        %s259 = ssub.s32 %s15, 1
        // Predicated region
        $region13: #{action_network_forward.1} parent=11 // pred_check
          %p260 = pneg %p114
        $region14: #{action_network_forward.1} parent=11 // pred_check_branch
          %262 = sbr.rel (%p260) target = $region16
        $region15: #{action_network_forward.1} parent=11 // pred_region
          _
        $region16: #{action_network_forward.1} parent=11 // pred_fallthru
          _
        // Predicated region
        $region17: #{action_network_forward.1} parent=11 // pred_check
          %p263 = pneg %p135
        $region18: #{action_network_forward.1} parent=11 // pred_check_branch
          %265 = sbr.rel (%p263) target = $region20
        $region19: #{action_network_forward.1} parent=11 // pred_region
          _
        $region20: #{action_network_forward.1} parent=11 // pred_fallthru
          _
        // Predicated region
        $region21: #{action_network_forward.1} parent=11 // pred_check
          %p266 = pneg %p156
        $region22: #{action_network_forward.1} parent=11 // pred_check_branch
          %268 = sbr.rel (%p266) target = $region24
        $region23: #{action_network_forward.1} parent=11 // pred_region
          _
        $region24: #{action_network_forward.1} parent=11 // pred_fallthru
          _
        // Predicated region
        $region25: #{action_network_forward.1} parent=11 // pred_check
          %p269 = pneg %p177
        $region26: #{action_network_forward.1} parent=11 // pred_check_branch
          %271 = sbr.rel (%p269) target = $region28
        $region27: #{action_network_forward.1} parent=11 // pred_region
          _
        $region28: #{action_network_forward.1} parent=11 // pred_fallthru
          _
        // Predicated region
        $region29: #{action_network_forward.1} parent=11 // pred_check
          %p272 = pneg %p198
        $region30: #{action_network_forward.1} parent=11 // pred_check_branch
          %274 = sbr.rel (%p272) target = $region32
        $region31: #{action_network_forward.1} parent=11 // pred_region
          _
        $region32: #{action_network_forward.1} parent=11 // pred_fallthru
          _
        // Predicated region
        $region33: #{action_network_forward.1} parent=11 // pred_check
          %p275 = pneg %p219
        $region34: #{action_network_forward.1} parent=11 // pred_check_branch
          %277 = sbr.rel (%p275) target = $region36
        $region35: #{action_network_forward.1} parent=11 // pred_region
          _
        $region36: #{action_network_forward.1} parent=11 // pred_fallthru
          _
      $region12: #{action_network_forward.1} parent=5 // pred_fallthru
        _
      %p278 = scmp.lt.s32.totalorder %s15, 2
      // Predicated region
      $region37: #{action_network_forward.1} parent=5 // pred_check
        %p279 = pneg %p278
      $region38: #{action_network_forward.1} parent=5 // pred_check_branch
        %281 = sbr.rel (%p279) target = $region40
      $region39: #{action_network_forward.1} parent=5 // pred_region
        // Predicated region
        $region41: #{action_network_forward.1} parent=39 // pred_check
          %p282 = pneg %p35
        $region42: #{action_network_forward.1} parent=39 // pred_check_branch
          %284 = sbr.rel (%p282) target = $region44
        $region43: #{action_network_forward.1} parent=39 // pred_region
          %s285 = sand.u32 %s25, 1
          %s286 = sand.u32 %s25, 1
          %s287 = smul.addr %s286, 96
          %s288 = scalar_lea.vmem [#allocation2], %s287
          %s289 = smul.u32 4, %s15
          %s290 = smul.addr %s289, 8
          %s291 = scalar_lea.vmem %s0, %s290
          // Predicated region
          $region45: #{action_network_forward.1} parent=43 // pred_check
            _
          $region46: #{action_network_forward.1} parent=43 // pred_check_branch
            %293 = sbr.rel (0) target = $region48
          $region47: #{action_network_forward.1} parent=43 // pred_region
            // Predicated region
            $region49: #{action_network_forward.1} parent=47 // pred_check
              _
            $region50: #{action_network_forward.1} parent=47 // pred_check_branch
              %295 = sbr.rel (0) target = $region52
            $region51: #{action_network_forward.1} parent=47 // pred_region
              // Predicated region
              $region64: #{action_network_forward.1} parent=51 // pred_check
                _
              $region65: #{action_network_forward.1} parent=51 // pred_check_branch
                %332 = sbr.rel (0) target = $region67
              $region66: #{action_network_forward.1} parent=51 // pred_region
                loop: start=0, step=1, limit=1
                $region68: #{action_network_forward.1} parent=66 // loop_pre_header
                  _
                $region69: #{action_network_forward.1} parent=66 // loop_header
                  %s334 = sphi 0, %s338
                  %p335 = scmp.ge.s32.totalorder %s334, 1
                  %s339 = sphi %s291, %s291
                  %s340 = sphi %s288, %s288
                $region70: #{action_network_forward.1} parent=66 // loop_header_branch
                  %337 = sbr.rel (%p335) target = $region74
                $region71: #{action_network_forward.1} parent=66 // loop_body
                  %v341 = vld [vmem:[%s339] sm:$0xff]
                  %342 = vst [vmem:[%s340] sm:$0xff] %v341
                  %v343 = vld [vmem:[%s339 + $0x8] sm:$0xff]
                  %344 = vst [vmem:[%s340 + $0x8] sm:$0xff] %v343
                  %v345 = vld [vmem:[%s339 + $0x10] sm:$0xff]
                  %346 = vst [vmem:[%s340 + $0x10] sm:$0xff] %v345
                  %v347 = vld [vmem:[%s339 + $0x18] sm:$0xff]
                  %348 = vst [vmem:[%s340 + $0x18] sm:$0xff] %v347
                  %v349 = vld [vmem:[%s339 + $0x40] sm:$0xff]
                  %350 = vst [vmem:[%s340 + $0x20] sm:$0xff] %v349
                  %v351 = vld [vmem:[%s339 + $0x48] sm:$0xff]
                  %352 = vst [vmem:[%s340 + $0x28] sm:$0xff] %v351
                  %v353 = vld [vmem:[%s339 + $0x50] sm:$0xff]
                  %354 = vst [vmem:[%s340 + $0x30] sm:$0xff] %v353
                  %v355 = vld [vmem:[%s339 + $0x58] sm:$0xff]
                  %356 = vst [vmem:[%s340 + $0x38] sm:$0xff] %v355
                  %v357 = vld [vmem:[%s339 + $0x80] sm:$0xff]
                  %358 = vst [vmem:[%s340 + $0x40] sm:$0xff] %v357
                  %v359 = vld [vmem:[%s339 + $0x88] sm:$0xff]
                  %360 = vst [vmem:[%s340 + $0x48] sm:$0xff] %v359
                  %v361 = vld [vmem:[%s339 + $0x90] sm:$0xff]
                  %362 = vst [vmem:[%s340 + $0x50] sm:$0xff] %v361
                  %v363 = vld [vmem:[%s339 + $0x98] sm:$0xff]
                  %364 = vst [vmem:[%s340 + $0x58] sm:$0xff] %v363
                $region72: #{action_network_forward.1} parent=66 // loop_footer
                  %s338 = sadd.s32 1, %s334
                $region73: #{action_network_forward.1} parent=66 // loop_footer_branch
                  %333 = sbr.rel target = $region69
                $region74: #{action_network_forward.1} parent=66 // loop_exit
                  _
              $region67: #{action_network_forward.1} parent=51 // pred_fallthru
                _
              // Predicated region
              $region75: #{action_network_forward.1} parent=51 // pred_check
                _
              $region76: #{action_network_forward.1} parent=51 // pred_check_branch
                %366 = sbr.rel target = $region78
              $region77: #{action_network_forward.1} parent=51 // pred_region
                _
              $region78: #{action_network_forward.1} parent=51 // pred_fallthru
                _
            $region52: #{action_network_forward.1} parent=47 // pred_fallthru
              _
            // Predicated region
            $region53: #{action_network_forward.1} parent=47 // pred_check
              _
            $region54: #{action_network_forward.1} parent=47 // pred_check_branch
              %297 = sbr.rel target = $region56
            $region55: #{action_network_forward.1} parent=47 // pred_region
              loop: start=0, step=1, limit=1
              $region57: #{action_network_forward.1} parent=55 // loop_pre_header
                _
              $region58: #{action_network_forward.1} parent=55 // loop_header
                %s300 = sphi 0, %s304
                %p301 = scmp.ge.s32.totalorder %s300, 1
                %s305 = sphi %s291, %s291
                %s306 = sphi %s288, %s288
              $region59: #{action_network_forward.1} parent=55 // loop_header_branch
                %303 = sbr.rel (%p301) target = $region63
              $region60: #{action_network_forward.1} parent=55 // loop_body
                %v307 = vld [vmem:[%s305] sm:$0xff]
                %308 = vst [vmem:[%s306] sm:$0xff] %v307
                %v309 = vld [vmem:[%s305 + $0x8] sm:$0xff]
                %310 = vst [vmem:[%s306 + $0x8] sm:$0xff] %v309
                %v311 = vld [vmem:[%s305 + $0x10] sm:$0xff]
                %312 = vst [vmem:[%s306 + $0x10] sm:$0xff] %v311
                %v313 = vld [vmem:[%s305 + $0x18] sm:$0xff]
                %314 = vst [vmem:[%s306 + $0x18] sm:$0xff] %v313
                %v315 = vld [vmem:[%s305 + $0x40] sm:$0xff]
                %316 = vst [vmem:[%s306 + $0x20] sm:$0xff] %v315
                %v317 = vld [vmem:[%s305 + $0x48] sm:$0xff]
                %318 = vst [vmem:[%s306 + $0x28] sm:$0xff] %v317
                %v319 = vld [vmem:[%s305 + $0x50] sm:$0xff]
                %320 = vst [vmem:[%s306 + $0x30] sm:$0xff] %v319
                %v321 = vld [vmem:[%s305 + $0x58] sm:$0xff]
                %322 = vst [vmem:[%s306 + $0x38] sm:$0xff] %v321
                %v323 = vld [vmem:[%s305 + $0x80] sm:$0xff]
                %324 = vst [vmem:[%s306 + $0x40] sm:$0xff] %v323
                %v325 = vld [vmem:[%s305 + $0x88] sm:$0xff]
                %326 = vst [vmem:[%s306 + $0x48] sm:$0xff] %v325
                %v327 = vld [vmem:[%s305 + $0x90] sm:$0xff]
                %328 = vst [vmem:[%s306 + $0x50] sm:$0xff] %v327
                %v329 = vld [vmem:[%s305 + $0x98] sm:$0xff]
                %330 = vst [vmem:[%s306 + $0x58] sm:$0xff] %v329
              $region61: #{action_network_forward.1} parent=55 // loop_footer
                %s304 = sadd.s32 1, %s300
              $region62: #{action_network_forward.1} parent=55 // loop_footer_branch
                %299 = sbr.rel target = $region58
              $region63: #{action_network_forward.1} parent=55 // loop_exit
                _
            $region56: #{action_network_forward.1} parent=47 // pred_fallthru
              _
          $region48: #{action_network_forward.1} parent=43 // pred_fallthru
            _
          %367 = vnop
        $region44: #{action_network_forward.1} parent=39 // pred_fallthru
          _
        // Predicated region
        $region79: #{action_network_forward.1} parent=39 // pred_check
          %p368 = pneg %p61
        $region80: #{action_network_forward.1} parent=39 // pred_check_branch
          %370 = sbr.rel (%p368) target = $region82
        $region81: #{action_network_forward.1} parent=39 // pred_region
          %s371 = smul.u32 4, %s15
          %p372 = scmp.lt.s32.totalorder %s371, 7
          %s373 = scalar_select %p372, %s371, 7
          %s374 = smul.addr %s373, 8
          %s375 = scalar_lea.vmem %s1, %s374
          %s376 = smul.u32 4, %s15
        $region82: #{action_network_forward.1} parent=39 // pred_fallthru
          _
        // Predicated region
        $region83: #{action_network_forward.1} parent=39 // pred_check
          %p377 = pneg %p87
        $region84: #{action_network_forward.1} parent=39 // pred_check_branch
          %379 = sbr.rel (%p377) target = $region86
        $region85: #{action_network_forward.1} parent=39 // pred_region
          %s380 = smul.u32 4, %s15
          %p381 = scmp.lt.s32.totalorder %s380, 7
          %s382 = scalar_select %p381, %s380, 7
          %s383 = smul.addr %s382, 2
          %s384 = scalar_lea.vmem %s2, %s383
          %s385 = smul.u32 4, %s15
        $region86: #{action_network_forward.1} parent=39 // pred_fallthru
          _
      $region40: #{action_network_forward.1} parent=5 // pred_fallthru
        _
      %p386 = scmp.le.s32.totalorder 1, %s15
      %p387 = scmp.lt.s32.totalorder %s15, 3
      %p388 = pnand %p386, %p387
      %p389 = pneg %p388
      // Predicated region
      $region87: #{action_network_forward.1} parent=5 // pred_check
        _
      $region88: #{action_network_forward.1} parent=5 // pred_check_branch
        %391 = sbr.rel (%p388) target = $region90
      $region89: #{action_network_forward.1} parent=5 // pred_region
        %s392 = ssub.s32 %s15, 1
        %s393 = sand.u32 %s28, 1
        %s394 = sand.u32 %s28, 1
        %s395 = smul.addr %s394, 96
        %s396 = scalar_lea.vmem [#allocation2], %s395
        // Predicated region
        $region91: #{action_network_forward.1} parent=89 // pred_check
          %p397 = pneg %p41
        $region92: #{action_network_forward.1} parent=89 // pred_check_branch
          %399 = sbr.rel (%p397) target = $region94
        $region93: #{action_network_forward.1} parent=89 // pred_region
          _
        $region94: #{action_network_forward.1} parent=89 // pred_fallthru
          _
        %s400 = sand.u32 %s28, 1
        %s401 = sand.u32 %s28, 1
        %s402 = smul.addr %s401, 96
        %s403 = scalar_lea.vmem [#allocation2], %s402
        %p404 = pneg %p41
        %p405 = pneg %p38
        %s406 = smul.u32 4, %s20
        %p407 = scmp.lt.s32.totalorder %s406, 7
        %s408 = scalar_select %p407, %s406, 7
        %s409 = smul.addr %s408, 8
        %s410 = scalar_lea.vmem %s1, %s409
        %p411 = pneg %p67
        %p412 = pneg %p64
        %s413 = smul.u32 4, %s20
        %p414 = scmp.lt.s32.totalorder %s413, 7
        %s415 = scalar_select %p414, %s413, 7
        %s416 = smul.addr %s415, 2
        %s417 = scalar_lea.vmem %s2, %s416
        %p418 = pneg %p93
        %p419 = pneg %p90
        %p420 = pneg %p114
        %p421 = pneg %p111
        %p422 = pneg %p135
        %p423 = pneg %p132
        %p424 = pneg %p156
        %p425 = pneg %p153
        %p426 = pneg %p177
        %p427 = pneg %p174
        %p428 = pneg %p198
        %p429 = pneg %p195
        %p430 = pneg %p219
        %p431 = pneg %p216
        %p432 = pneg %p245
        %p433 = pneg %p242
        %s434 = smul.u32 4, %s20
        %p435 = scmp.lt.s32.totalorder %s434, 7
        %s436 = scalar_select %p435, %s434, 7
        %s437 = smul.addr %s436, 8
        %s438 = scalar_lea.vmem %s9, %s437
        %s439 = smul.u32 4, %s20
        %s440 = smul.u32 4, %s20
        %p441 = scmp.lt.s32.totalorder %s440, 7
        %s442 = scalar_select %p441, %s440, 7
        %s443 = smul.addr %s442, 8
        %s444 = scalar_lea.vmem %s1, %s443
        %s445 = smul.u32 4, %s20
        %s446 = smul.u32 4, %s20
        %p447 = scmp.lt.s32.totalorder %s446, 7
        %s448 = scalar_select %p447, %s446, 7
        %s449 = smul.addr %s448, 2
        %s450 = scalar_lea.vmem %s2, %s449
        %s451 = smul.u32 4, %s20
        %s452 = smul.u32 4, %s20
        %p453 = scmp.lt.s32.totalorder %s452, 7
        %s454 = scalar_select %p453, %s452, 7
        %s455 = smul.addr %s454, 8
        %s456 = scalar_lea.vmem %s9, %s455
        %s457 = smul.u32 4, %s20
        %v461 = vld [vmem:[%s396] sm:$0xff]
        %v462 = vld [vmem:[%s396 + $0x8] sm:$0xff]
        %v463 = vld [vmem:[%s396 + $0x10] sm:$0xff]
        %v464 = vld [vmem:[%s396 + $0x18] sm:$0xff]
        %s465 = scalar_lea.vmem %s396, 32 [#allocation2]
        %v466 = vld [vmem:[%s465] sm:$0xff]
        %v467 = vld [vmem:[%s465 + $0x8] sm:$0xff]
        %v468 = vld [vmem:[%s465 + $0x10] sm:$0xff]
        %v469 = vld [vmem:[%s465 + $0x18] sm:$0xff]
        %s470 = scalar_lea.vmem %s396, 64 [#allocation2]
        %v471 = vld [vmem:[%s470] sm:$0xff]
        %v472 = vld [vmem:[%s470 + $0x8] sm:$0xff]
        %v473 = vld [vmem:[%s470 + $0x10] sm:$0xff]
        %v474 = vld [vmem:[%s470 + $0x18] sm:$0xff]
        %v475 = vmul.f32 %v461, %v461
        %v476 = vmul.f32 %v462, %v462
        %v477 = vmul.f32 %v463, %v463
        %v478 = vmul.f32 %v464, %v464
        %v479 = vmul.f32 %v466, %v466
        %v480 = vmul.f32 %v467, %v467
        %v481 = vmul.f32 %v468, %v468
        %v482 = vmul.f32 %v469, %v469
        %v483 = vadd.f32 %v475, %v479
        %v484 = vadd.f32 %v476, %v480
        %v485 = vadd.f32 %v477, %v481
        %v486 = vadd.f32 %v478, %v482
        %v487 = vrsqrt.pop %v483
        %v488 = vrsqrt.pop %v484
        %v489 = vrsqrt.pop %v485
        %v490 = vrsqrt.pop %v486
        %v491 = vmul.f32 %v461, %v487
        %v492 = vmul.f32 %v462, %v488
        %v493 = vmul.f32 %v463, %v489
        %v494 = vmul.f32 %v464, %v490
        %v495 = vmul.f32 %v466, %v487
        %v496 = vmul.f32 %v467, %v488
        %v497 = vmul.f32 %v468, %v489
        %v498 = vmul.f32 %v469, %v490
        %v499 = vlaneseq
        %v500 = vshrl.u32 %v499, 7
        %v501 = vsub.s32 0, %v500
        %v502 = vrot.slane %v491, %v501
        %504 = vbcast.lane.b32.xlu0 %v502, 256
        %v505 = vpop.permute.xlu0 %504
        %v506 = vlaneseq
        %v507 = vshrl.u32 %v506, 7
        %v508 = vsub.s32 1, %v507
        %v509 = vrot.slane %v491, %v508
        %511 = vbcast.lane.b32.xlu0 %v509, 256
        %v512 = vpop.permute.xlu0 %511
        %v513 = vlaneseq
        %v514 = vshrl.u32 %v513, 7
        %v515 = vsub.s32 2, %v514
        %v516 = vrot.slane %v491, %v515
        %518 = vbcast.lane.b32.xlu0 %v516, 256
        %v519 = vpop.permute.xlu0 %518
        %v520 = vlaneseq
        %v521 = vshrl.u32 %v520, 7
        %v522 = vsub.s32 3, %v521
        %v523 = vrot.slane %v491, %v522
        %525 = vbcast.lane.b32.xlu0 %v523, 256
        %v526 = vpop.permute.xlu0 %525
        %v527 = vlaneseq
        %v528 = vshrl.u32 %v527, 7
        %v529 = vsub.s32 4, %v528
        %v530 = vrot.slane %v491, %v529
        %532 = vbcast.lane.b32.xlu0 %v530, 256
        %v533 = vpop.permute.xlu0 %532
        %v534 = vlaneseq
        %v535 = vshrl.u32 %v534, 7
        %v536 = vsub.s32 5, %v535
        %v537 = vrot.slane %v491, %v536
        %539 = vbcast.lane.b32.xlu0 %v537, 256
        %v540 = vpop.permute.xlu0 %539
        %v541 = vlaneseq
        %v542 = vshrl.u32 %v541, 7
        %v543 = vsub.s32 6, %v542
        %v544 = vrot.slane %v491, %v543
        %546 = vbcast.lane.b32.xlu0 %v544, 256
        %v547 = vpop.permute.xlu0 %546
        %v548 = vlaneseq
        %v549 = vshrl.u32 %v548, 7
        %v550 = vsub.s32 7, %v549
        %v551 = vrot.slane %v491, %v550
        %553 = vbcast.lane.b32.xlu0 %v551, 256
        %v554 = vpop.permute.xlu0 %553
        %v555 = vlaneseq
        %v556 = vshrl.u32 %v555, 7
        %v557 = vsub.s32 0, %v556
        %v558 = vrot.slane %v492, %v557
        %560 = vbcast.lane.b32.xlu0 %v558, 256
        %v561 = vpop.permute.xlu0 %560
        %v562 = vlaneseq
        %v563 = vshrl.u32 %v562, 7
        %v564 = vsub.s32 1, %v563
        %v565 = vrot.slane %v492, %v564
        %567 = vbcast.lane.b32.xlu0 %v565, 256
        %v568 = vpop.permute.xlu0 %567
        %v569 = vlaneseq
        %v570 = vshrl.u32 %v569, 7
        %v571 = vsub.s32 2, %v570
        %v572 = vrot.slane %v492, %v571
        %574 = vbcast.lane.b32.xlu0 %v572, 256
        %v575 = vpop.permute.xlu0 %574
        %v576 = vlaneseq
        %v577 = vshrl.u32 %v576, 7
        %v578 = vsub.s32 3, %v577
        %v579 = vrot.slane %v492, %v578
        %581 = vbcast.lane.b32.xlu0 %v579, 256
        %v582 = vpop.permute.xlu0 %581
        %v583 = vlaneseq
        %v584 = vshrl.u32 %v583, 7
        %v585 = vsub.s32 4, %v584
        %v586 = vrot.slane %v492, %v585
        %588 = vbcast.lane.b32.xlu0 %v586, 256
        %v589 = vpop.permute.xlu0 %588
        %v590 = vlaneseq
        %v591 = vshrl.u32 %v590, 7
        %v592 = vsub.s32 5, %v591
        %v593 = vrot.slane %v492, %v592
        %595 = vbcast.lane.b32.xlu0 %v593, 256
        %v596 = vpop.permute.xlu0 %595
        %v597 = vlaneseq
        %v598 = vshrl.u32 %v597, 7
        %v599 = vsub.s32 6, %v598
        %v600 = vrot.slane %v492, %v599
        %602 = vbcast.lane.b32.xlu0 %v600, 256
        %v603 = vpop.permute.xlu0 %602
        %v604 = vlaneseq
        %v605 = vshrl.u32 %v604, 7
        %v606 = vsub.s32 7, %v605
        %v607 = vrot.slane %v492, %v606
        %609 = vbcast.lane.b32.xlu0 %v607, 256
        %v610 = vpop.permute.xlu0 %609
        %v611 = vlaneseq
        %v612 = vshrl.u32 %v611, 7
        %v613 = vsub.s32 0, %v612
        %v614 = vrot.slane %v493, %v613
        %616 = vbcast.lane.b32.xlu0 %v614, 256
        %v617 = vpop.permute.xlu0 %616
        %v618 = vlaneseq
        %v619 = vshrl.u32 %v618, 7
        %v620 = vsub.s32 1, %v619
        %v621 = vrot.slane %v493, %v620
        %623 = vbcast.lane.b32.xlu0 %v621, 256
        %v624 = vpop.permute.xlu0 %623
        %v625 = vlaneseq
        %v626 = vshrl.u32 %v625, 7
        %v627 = vsub.s32 2, %v626
        %v628 = vrot.slane %v493, %v627
        %630 = vbcast.lane.b32.xlu0 %v628, 256
        %v631 = vpop.permute.xlu0 %630
        %v632 = vlaneseq
        %v633 = vshrl.u32 %v632, 7
        %v634 = vsub.s32 3, %v633
        %v635 = vrot.slane %v493, %v634
        %637 = vbcast.lane.b32.xlu0 %v635, 256
        %v638 = vpop.permute.xlu0 %637
        %v639 = vlaneseq
        %v640 = vshrl.u32 %v639, 7
        %v641 = vsub.s32 4, %v640
        %v642 = vrot.slane %v493, %v641
        %644 = vbcast.lane.b32.xlu0 %v642, 256
        %v645 = vpop.permute.xlu0 %644
        %v646 = vlaneseq
        %v647 = vshrl.u32 %v646, 7
        %v648 = vsub.s32 5, %v647
        %v649 = vrot.slane %v493, %v648
        %651 = vbcast.lane.b32.xlu0 %v649, 256
        %v652 = vpop.permute.xlu0 %651
        %v653 = vlaneseq
        %v654 = vshrl.u32 %v653, 7
        %v655 = vsub.s32 6, %v654
        %v656 = vrot.slane %v493, %v655
        %658 = vbcast.lane.b32.xlu0 %v656, 256
        %v659 = vpop.permute.xlu0 %658
        %v660 = vlaneseq
        %v661 = vshrl.u32 %v660, 7
        %v662 = vsub.s32 7, %v661
        %v663 = vrot.slane %v493, %v662
        %665 = vbcast.lane.b32.xlu0 %v663, 256
        %v666 = vpop.permute.xlu0 %665
        %v667 = vlaneseq
        %v668 = vshrl.u32 %v667, 7
        %v669 = vsub.s32 0, %v668
        %v670 = vrot.slane %v494, %v669
        %672 = vbcast.lane.b32.xlu0 %v670, 256
        %v673 = vpop.permute.xlu0 %672
        %v674 = vlaneseq
        %v675 = vshrl.u32 %v674, 7
        %v676 = vsub.s32 1, %v675
        %v677 = vrot.slane %v494, %v676
        %679 = vbcast.lane.b32.xlu0 %v677, 256
        %v680 = vpop.permute.xlu0 %679
        %v681 = vlaneseq
        %v682 = vshrl.u32 %v681, 7
        %v683 = vsub.s32 2, %v682
        %v684 = vrot.slane %v494, %v683
        %686 = vbcast.lane.b32.xlu0 %v684, 256
        %v687 = vpop.permute.xlu0 %686
        %v688 = vlaneseq
        %v689 = vshrl.u32 %v688, 7
        %v690 = vsub.s32 3, %v689
        %v691 = vrot.slane %v494, %v690
        %693 = vbcast.lane.b32.xlu0 %v691, 256
        %v694 = vpop.permute.xlu0 %693
        %v695 = vlaneseq
        %v696 = vshrl.u32 %v695, 7
        %v697 = vsub.s32 4, %v696
        %v698 = vrot.slane %v494, %v697
        %700 = vbcast.lane.b32.xlu0 %v698, 256
        %v701 = vpop.permute.xlu0 %700
        %v702 = vlaneseq
        %v703 = vshrl.u32 %v702, 7
        %v704 = vsub.s32 5, %v703
        %v705 = vrot.slane %v494, %v704
        %707 = vbcast.lane.b32.xlu0 %v705, 256
        %v708 = vpop.permute.xlu0 %707
        %v709 = vlaneseq
        %v710 = vshrl.u32 %v709, 7
        %v711 = vsub.s32 6, %v710
        %v712 = vrot.slane %v494, %v711
        %714 = vbcast.lane.b32.xlu0 %v712, 256
        %v715 = vpop.permute.xlu0 %714
        %v716 = vlaneseq
        %v717 = vshrl.u32 %v716, 7
        %v718 = vsub.s32 7, %v717
        %v719 = vrot.slane %v494, %v718
        %721 = vbcast.lane.b32.xlu0 %v719, 256
        %v722 = vpop.permute.xlu0 %721
        %v727 = vcombine.high %v491, %v491
        %v729 = vunpack.c.l.s4 1966171168
        %v730 = vunpack.c.0.s8 %v729
        %v731 = vlaneseq
        %v732 = vshrl.u32 %v731, 7
        %v733 = vsub.s32 %v730, %v732
        %v734 = vrot.slane %v491, %v733
        %v736 = vunpack.c.l.s4 1966171168
        %v737 = vunpack.c.0.s8 %v736
        %v738 = vlaneseq
        %v739 = vshrl.u32 %v738, 7
        %v740 = vsub.s32 %v737, %v739
        %v741 = vrot.slane %v727, %v740
        %v742 = vcombine.high %v734, %v734
        %v743 = vcombine.high %v741, %v741
        %v745 = vunpack.c.l.s4 1966171168
        %v746 = vunpack.c.0.s8 %v745
        %v747 = vlaneseq
        %v748 = vshrl.u32 %v747, 7
        %v749 = vsub.s32 %v746, %v748
        %v750 = vrot.slane %v734, %v749
        %v752 = vunpack.c.l.s4 1966171168
        %v753 = vunpack.c.0.s8 %v752
        %v754 = vlaneseq
        %v755 = vshrl.u32 %v754, 7
        %v756 = vsub.s32 %v753, %v755
        %v757 = vrot.slane %v741, %v756
        %v759 = vunpack.c.l.s4 1966171168
        %v760 = vunpack.c.0.s8 %v759
        %v761 = vlaneseq
        %v762 = vshrl.u32 %v761, 7
        %v763 = vsub.s32 %v760, %v762
        %v764 = vrot.slane %v742, %v763
        %v766 = vunpack.c.l.s4 1966171168
        %v767 = vunpack.c.0.s8 %v766
        %v768 = vlaneseq
        %v769 = vshrl.u32 %v768, 7
        %v770 = vsub.s32 %v767, %v769
        %v771 = vrot.slane %v743, %v770
        %v772 = vcombine.high %v750, %v750
        %v773 = vcombine.high %v757, %v757
        %v774 = vcombine.high %v764, %v764
        %v775 = vcombine.high %v771, %v771
        %v776 = vcombine.high %v492, %v492
        %v778 = vunpack.c.l.s4 1966171168
        %v779 = vunpack.c.0.s8 %v778
        %v780 = vlaneseq
        %v781 = vshrl.u32 %v780, 7
        %v782 = vsub.s32 %v779, %v781
        %v783 = vrot.slane %v492, %v782
        %v785 = vunpack.c.l.s4 1966171168
        %v786 = vunpack.c.0.s8 %v785
        %v787 = vlaneseq
        %v788 = vshrl.u32 %v787, 7
        %v789 = vsub.s32 %v786, %v788
        %v790 = vrot.slane %v776, %v789
        %v791 = vcombine.high %v783, %v783
        %v792 = vcombine.high %v790, %v790
        %v794 = vunpack.c.l.s4 1966171168
        %v795 = vunpack.c.0.s8 %v794
        %v796 = vlaneseq
        %v797 = vshrl.u32 %v796, 7
        %v798 = vsub.s32 %v795, %v797
        %v799 = vrot.slane %v783, %v798
        %v801 = vunpack.c.l.s4 1966171168
        %v802 = vunpack.c.0.s8 %v801
        %v803 = vlaneseq
        %v804 = vshrl.u32 %v803, 7
        %v805 = vsub.s32 %v802, %v804
        %v806 = vrot.slane %v790, %v805
        %v808 = vunpack.c.l.s4 1966171168
        %v809 = vunpack.c.0.s8 %v808
        %v810 = vlaneseq
        %v811 = vshrl.u32 %v810, 7
        %v812 = vsub.s32 %v809, %v811
        %v813 = vrot.slane %v791, %v812
        %v815 = vunpack.c.l.s4 1966171168
        %v816 = vunpack.c.0.s8 %v815
        %v817 = vlaneseq
        %v818 = vshrl.u32 %v817, 7
        %v819 = vsub.s32 %v816, %v818
        %v820 = vrot.slane %v792, %v819
        %v821 = vcombine.high %v799, %v799
        %v822 = vcombine.high %v806, %v806
        %v823 = vcombine.high %v813, %v813
        %v824 = vcombine.high %v820, %v820
        %v825 = vcombine.high %v493, %v493
        %v827 = vunpack.c.l.s4 1966171168
        %v828 = vunpack.c.0.s8 %v827
        %v829 = vlaneseq
        %v830 = vshrl.u32 %v829, 7
        %v831 = vsub.s32 %v828, %v830
        %v832 = vrot.slane %v493, %v831
        %v834 = vunpack.c.l.s4 1966171168
        %v835 = vunpack.c.0.s8 %v834
        %v836 = vlaneseq
        %v837 = vshrl.u32 %v836, 7
        %v838 = vsub.s32 %v835, %v837
        %v839 = vrot.slane %v825, %v838
        %v840 = vcombine.high %v832, %v832
        %v841 = vcombine.high %v839, %v839
        %v843 = vunpack.c.l.s4 1966171168
        %v844 = vunpack.c.0.s8 %v843
        %v845 = vlaneseq
        %v846 = vshrl.u32 %v845, 7
        %v847 = vsub.s32 %v844, %v846
        %v848 = vrot.slane %v832, %v847
        %v850 = vunpack.c.l.s4 1966171168
        %v851 = vunpack.c.0.s8 %v850
        %v852 = vlaneseq
        %v853 = vshrl.u32 %v852, 7
        %v854 = vsub.s32 %v851, %v853
        %v855 = vrot.slane %v839, %v854
        %v857 = vunpack.c.l.s4 1966171168
        %v858 = vunpack.c.0.s8 %v857
        %v859 = vlaneseq
        %v860 = vshrl.u32 %v859, 7
        %v861 = vsub.s32 %v858, %v860
        %v862 = vrot.slane %v840, %v861
        %v864 = vunpack.c.l.s4 1966171168
        %v865 = vunpack.c.0.s8 %v864
        %v866 = vlaneseq
        %v867 = vshrl.u32 %v866, 7
        %v868 = vsub.s32 %v865, %v867
        %v869 = vrot.slane %v841, %v868
        %v870 = vcombine.high %v848, %v848
        %v871 = vcombine.high %v855, %v855
        %v872 = vcombine.high %v862, %v862
        %v873 = vcombine.high %v869, %v869
        %v874 = vcombine.high %v494, %v494
        %v876 = vunpack.c.l.s4 1966171168
        %v877 = vunpack.c.0.s8 %v876
        %v878 = vlaneseq
        %v879 = vshrl.u32 %v878, 7
        %v880 = vsub.s32 %v877, %v879
        %v881 = vrot.slane %v494, %v880
        %v883 = vunpack.c.l.s4 1966171168
        %v884 = vunpack.c.0.s8 %v883
        %v885 = vlaneseq
        %v886 = vshrl.u32 %v885, 7
        %v887 = vsub.s32 %v884, %v886
        %v888 = vrot.slane %v874, %v887
        %v889 = vcombine.high %v881, %v881
        %v890 = vcombine.high %v888, %v888
        %v892 = vunpack.c.l.s4 1966171168
        %v893 = vunpack.c.0.s8 %v892
        %v894 = vlaneseq
        %v895 = vshrl.u32 %v894, 7
        %v896 = vsub.s32 %v893, %v895
        %v897 = vrot.slane %v881, %v896
        %v899 = vunpack.c.l.s4 1966171168
        %v900 = vunpack.c.0.s8 %v899
        %v901 = vlaneseq
        %v902 = vshrl.u32 %v901, 7
        %v903 = vsub.s32 %v900, %v902
        %v904 = vrot.slane %v888, %v903
        %v906 = vunpack.c.l.s4 1966171168
        %v907 = vunpack.c.0.s8 %v906
        %v908 = vlaneseq
        %v909 = vshrl.u32 %v908, 7
        %v910 = vsub.s32 %v907, %v909
        %v911 = vrot.slane %v889, %v910
        %v913 = vunpack.c.l.s4 1966171168
        %v914 = vunpack.c.0.s8 %v913
        %v915 = vlaneseq
        %v916 = vshrl.u32 %v915, 7
        %v917 = vsub.s32 %v914, %v916
        %v918 = vrot.slane %v890, %v917
        %v919 = vcombine.high %v897, %v897
        %v920 = vcombine.high %v904, %v904
        %v921 = vcombine.high %v911, %v911
        %v922 = vcombine.high %v918, %v918
        %v923 = vlaneseq
        %v924 = vshrl.u32 %v923, 7
        %v925 = vsub.s32 0, %v924
        %v926 = vrot.slane %v750, %v925
        %v927 = vlaneseq
        %v928 = vshrl.u32 %v927, 7
        %v929 = vsub.s32 0, %v928
        %v930 = vrot.slane %v764, %v929
        %v931 = vlaneseq
        %v932 = vshrl.u32 %v931, 7
        %v933 = vsub.s32 0, %v932
        %v934 = vrot.slane %v772, %v933
        %v935 = vlaneseq
        %v936 = vshrl.u32 %v935, 7
        %v937 = vsub.s32 0, %v936
        %v938 = vrot.slane %v774, %v937
        %v939 = vlaneseq
        %v940 = vshrl.u32 %v939, 7
        %v941 = vsub.s32 0, %v940
        %v942 = vrot.slane %v757, %v941
        %v943 = vlaneseq
        %v944 = vshrl.u32 %v943, 7
        %v945 = vsub.s32 0, %v944
        %v946 = vrot.slane %v771, %v945
        %v947 = vlaneseq
        %v948 = vshrl.u32 %v947, 7
        %v949 = vsub.s32 0, %v948
        %v950 = vrot.slane %v773, %v949
        %v951 = vlaneseq
        %v952 = vshrl.u32 %v951, 7
        %v953 = vsub.s32 0, %v952
        %v954 = vrot.slane %v775, %v953
        %v955 = vlaneseq
        %v956 = vshrl.u32 %v955, 7
        %v957 = vsub.s32 0, %v956
        %v958 = vrot.slane %v799, %v957
        %v959 = vlaneseq
        %v960 = vshrl.u32 %v959, 7
        %v961 = vsub.s32 0, %v960
        %v962 = vrot.slane %v813, %v961
        %v963 = vlaneseq
        %v964 = vshrl.u32 %v963, 7
        %v965 = vsub.s32 0, %v964
        %v966 = vrot.slane %v821, %v965
        %v967 = vlaneseq
        %v968 = vshrl.u32 %v967, 7
        %v969 = vsub.s32 0, %v968
        %v970 = vrot.slane %v823, %v969
        %v971 = vlaneseq
        %v972 = vshrl.u32 %v971, 7
        %v973 = vsub.s32 0, %v972
        %v974 = vrot.slane %v806, %v973
        %v975 = vlaneseq
        %v976 = vshrl.u32 %v975, 7
        %v977 = vsub.s32 0, %v976
        %v978 = vrot.slane %v820, %v977
        %v979 = vlaneseq
        %v980 = vshrl.u32 %v979, 7
        %v981 = vsub.s32 0, %v980
        %v982 = vrot.slane %v822, %v981
        %v983 = vlaneseq
        %v984 = vshrl.u32 %v983, 7
        %v985 = vsub.s32 0, %v984
        %v986 = vrot.slane %v824, %v985
        %v987 = vlaneseq
        %v988 = vshrl.u32 %v987, 7
        %v989 = vsub.s32 0, %v988
        %v990 = vrot.slane %v848, %v989
        %v991 = vlaneseq
        %v992 = vshrl.u32 %v991, 7
        %v993 = vsub.s32 0, %v992
        %v994 = vrot.slane %v862, %v993
        %v995 = vlaneseq
        %v996 = vshrl.u32 %v995, 7
        %v997 = vsub.s32 0, %v996
        %v998 = vrot.slane %v870, %v997
        %v999 = vlaneseq
        %v1000 = vshrl.u32 %v999, 7
        %v1001 = vsub.s32 0, %v1000
        %v1002 = vrot.slane %v872, %v1001
        %v1003 = vlaneseq
        %v1004 = vshrl.u32 %v1003, 7
        %v1005 = vsub.s32 0, %v1004
        %v1006 = vrot.slane %v855, %v1005
        %v1007 = vlaneseq
        %v1008 = vshrl.u32 %v1007, 7
        %v1009 = vsub.s32 0, %v1008
        %v1010 = vrot.slane %v869, %v1009
        %v1011 = vlaneseq
        %v1012 = vshrl.u32 %v1011, 7
        %v1013 = vsub.s32 0, %v1012
        %v1014 = vrot.slane %v871, %v1013
        %v1015 = vlaneseq
        %v1016 = vshrl.u32 %v1015, 7
        %v1017 = vsub.s32 0, %v1016
        %v1018 = vrot.slane %v873, %v1017
        %v1019 = vlaneseq
        %v1020 = vshrl.u32 %v1019, 7
        %v1021 = vsub.s32 0, %v1020
        %v1022 = vrot.slane %v897, %v1021
        %v1023 = vlaneseq
        %v1024 = vshrl.u32 %v1023, 7
        %v1025 = vsub.s32 0, %v1024
        %v1026 = vrot.slane %v911, %v1025
        %v1027 = vlaneseq
        %v1028 = vshrl.u32 %v1027, 7
        %v1029 = vsub.s32 0, %v1028
        %v1030 = vrot.slane %v919, %v1029
        %v1031 = vlaneseq
        %v1032 = vshrl.u32 %v1031, 7
        %v1033 = vsub.s32 0, %v1032
        %v1034 = vrot.slane %v921, %v1033
        %v1035 = vlaneseq
        %v1036 = vshrl.u32 %v1035, 7
        %v1037 = vsub.s32 0, %v1036
        %v1038 = vrot.slane %v904, %v1037
        %v1039 = vlaneseq
        %v1040 = vshrl.u32 %v1039, 7
        %v1041 = vsub.s32 0, %v1040
        %v1042 = vrot.slane %v918, %v1041
        %v1043 = vlaneseq
        %v1044 = vshrl.u32 %v1043, 7
        %v1045 = vsub.s32 0, %v1044
        %v1046 = vrot.slane %v920, %v1045
        %v1047 = vlaneseq
        %v1048 = vshrl.u32 %v1047, 7
        %v1049 = vsub.s32 0, %v1048
        %v1050 = vrot.slane %v922, %v1049
        %v1083 = vmul.f32 %v505, %v926
        %v1084 = vmul.f32 %v512, %v930
        %v1085 = vmul.f32 %v519, %v934
        %v1086 = vmul.f32 %v526, %v938
        %v1087 = vmul.f32 %v533, %v942
        %v1088 = vmul.f32 %v540, %v946
        %v1089 = vmul.f32 %v547, %v950
        %v1090 = vmul.f32 %v554, %v954
        %v1091 = vmul.f32 %v561, %v958
        %v1092 = vmul.f32 %v568, %v962
        %v1093 = vmul.f32 %v575, %v966
        %v1094 = vmul.f32 %v582, %v970
        %v1095 = vmul.f32 %v589, %v974
        %v1096 = vmul.f32 %v596, %v978
        %v1097 = vmul.f32 %v603, %v982
        %v1098 = vmul.f32 %v610, %v986
        %v1099 = vmul.f32 %v617, %v990
        %v1100 = vmul.f32 %v624, %v994
        %v1101 = vmul.f32 %v631, %v998
        %v1102 = vmul.f32 %v638, %v1002
        %v1103 = vmul.f32 %v645, %v1006
        %v1104 = vmul.f32 %v652, %v1010
        %v1105 = vmul.f32 %v659, %v1014
        %v1106 = vmul.f32 %v666, %v1018
        %v1107 = vmul.f32 %v673, %v1022
        %v1108 = vmul.f32 %v680, %v1026
        %v1109 = vmul.f32 %v687, %v1030
        %v1110 = vmul.f32 %v694, %v1034
        %v1111 = vmul.f32 %v701, %v1038
        %v1112 = vmul.f32 %v708, %v1042
        %v1113 = vmul.f32 %v715, %v1046
        %v1114 = vmul.f32 %v722, %v1050
        %v1115 = vlaneseq
        %v1116 = vshrl.u32 %v1115, 7
        %v1117 = vsub.s32 0, %v1116
        %v1118 = vrot.slane %v495, %v1117
        %1120 = vbcast.lane.b32.xlu0 %v1118, 256
        %v1121 = vpop.permute.xlu0 %1120
        %v1122 = vlaneseq
        %v1123 = vshrl.u32 %v1122, 7
        %v1124 = vsub.s32 1, %v1123
        %v1125 = vrot.slane %v495, %v1124
        %1127 = vbcast.lane.b32.xlu0 %v1125, 256
        %v1128 = vpop.permute.xlu0 %1127
        %v1129 = vlaneseq
        %v1130 = vshrl.u32 %v1129, 7
        %v1131 = vsub.s32 2, %v1130
        %v1132 = vrot.slane %v495, %v1131
        %1134 = vbcast.lane.b32.xlu0 %v1132, 256
        %v1135 = vpop.permute.xlu0 %1134
        %v1136 = vlaneseq
        %v1137 = vshrl.u32 %v1136, 7
        %v1138 = vsub.s32 3, %v1137
        %v1139 = vrot.slane %v495, %v1138
        %1141 = vbcast.lane.b32.xlu0 %v1139, 256
        %v1142 = vpop.permute.xlu0 %1141
        %v1143 = vlaneseq
        %v1144 = vshrl.u32 %v1143, 7
        %v1145 = vsub.s32 4, %v1144
        %v1146 = vrot.slane %v495, %v1145
        %1148 = vbcast.lane.b32.xlu0 %v1146, 256
        %v1149 = vpop.permute.xlu0 %1148
        %v1150 = vlaneseq
        %v1151 = vshrl.u32 %v1150, 7
        %v1152 = vsub.s32 5, %v1151
        %v1153 = vrot.slane %v495, %v1152
        %1155 = vbcast.lane.b32.xlu0 %v1153, 256
        %v1156 = vpop.permute.xlu0 %1155
        %v1157 = vlaneseq
        %v1158 = vshrl.u32 %v1157, 7
        %v1159 = vsub.s32 6, %v1158
        %v1160 = vrot.slane %v495, %v1159
        %1162 = vbcast.lane.b32.xlu0 %v1160, 256
        %v1163 = vpop.permute.xlu0 %1162
        %v1164 = vlaneseq
        %v1165 = vshrl.u32 %v1164, 7
        %v1166 = vsub.s32 7, %v1165
        %v1167 = vrot.slane %v495, %v1166
        %1169 = vbcast.lane.b32.xlu0 %v1167, 256
        %v1170 = vpop.permute.xlu0 %1169
        %v1171 = vlaneseq
        %v1172 = vshrl.u32 %v1171, 7
        %v1173 = vsub.s32 0, %v1172
        %v1174 = vrot.slane %v496, %v1173
        %1176 = vbcast.lane.b32.xlu0 %v1174, 256
        %v1177 = vpop.permute.xlu0 %1176
        %v1178 = vlaneseq
        %v1179 = vshrl.u32 %v1178, 7
        %v1180 = vsub.s32 1, %v1179
        %v1181 = vrot.slane %v496, %v1180
        %1183 = vbcast.lane.b32.xlu0 %v1181, 256
        %v1184 = vpop.permute.xlu0 %1183
        %v1185 = vlaneseq
        %v1186 = vshrl.u32 %v1185, 7
        %v1187 = vsub.s32 2, %v1186
        %v1188 = vrot.slane %v496, %v1187
        %1190 = vbcast.lane.b32.xlu0 %v1188, 256
        %v1191 = vpop.permute.xlu0 %1190
        %v1192 = vlaneseq
        %v1193 = vshrl.u32 %v1192, 7
        %v1194 = vsub.s32 3, %v1193
        %v1195 = vrot.slane %v496, %v1194
        %1197 = vbcast.lane.b32.xlu0 %v1195, 256
        %v1198 = vpop.permute.xlu0 %1197
        %v1199 = vlaneseq
        %v1200 = vshrl.u32 %v1199, 7
        %v1201 = vsub.s32 4, %v1200
        %v1202 = vrot.slane %v496, %v1201
        %1204 = vbcast.lane.b32.xlu0 %v1202, 256
        %v1205 = vpop.permute.xlu0 %1204
        %v1206 = vlaneseq
        %v1207 = vshrl.u32 %v1206, 7
        %v1208 = vsub.s32 5, %v1207
        %v1209 = vrot.slane %v496, %v1208
        %1211 = vbcast.lane.b32.xlu0 %v1209, 256
        %v1212 = vpop.permute.xlu0 %1211
        %v1213 = vlaneseq
        %v1214 = vshrl.u32 %v1213, 7
        %v1215 = vsub.s32 6, %v1214
        %v1216 = vrot.slane %v496, %v1215
        %1218 = vbcast.lane.b32.xlu0 %v1216, 256
        %v1219 = vpop.permute.xlu0 %1218
        %v1220 = vlaneseq
        %v1221 = vshrl.u32 %v1220, 7
        %v1222 = vsub.s32 7, %v1221
        %v1223 = vrot.slane %v496, %v1222
        %1225 = vbcast.lane.b32.xlu0 %v1223, 256
        %v1226 = vpop.permute.xlu0 %1225
        %v1227 = vlaneseq
        %v1228 = vshrl.u32 %v1227, 7
        %v1229 = vsub.s32 0, %v1228
        %v1230 = vrot.slane %v497, %v1229
        %1232 = vbcast.lane.b32.xlu0 %v1230, 256
        %v1233 = vpop.permute.xlu0 %1232
        %v1234 = vlaneseq
        %v1235 = vshrl.u32 %v1234, 7
        %v1236 = vsub.s32 1, %v1235
        %v1237 = vrot.slane %v497, %v1236
        %1239 = vbcast.lane.b32.xlu0 %v1237, 256
        %v1240 = vpop.permute.xlu0 %1239
        %v1241 = vlaneseq
        %v1242 = vshrl.u32 %v1241, 7
        %v1243 = vsub.s32 2, %v1242
        %v1244 = vrot.slane %v497, %v1243
        %1246 = vbcast.lane.b32.xlu0 %v1244, 256
        %v1247 = vpop.permute.xlu0 %1246
        %v1248 = vlaneseq
        %v1249 = vshrl.u32 %v1248, 7
        %v1250 = vsub.s32 3, %v1249
        %v1251 = vrot.slane %v497, %v1250
        %1253 = vbcast.lane.b32.xlu0 %v1251, 256
        %v1254 = vpop.permute.xlu0 %1253
        %v1255 = vlaneseq
        %v1256 = vshrl.u32 %v1255, 7
        %v1257 = vsub.s32 4, %v1256
        %v1258 = vrot.slane %v497, %v1257
        %1260 = vbcast.lane.b32.xlu0 %v1258, 256
        %v1261 = vpop.permute.xlu0 %1260
        %v1262 = vlaneseq
        %v1263 = vshrl.u32 %v1262, 7
        %v1264 = vsub.s32 5, %v1263
        %v1265 = vrot.slane %v497, %v1264
        %1267 = vbcast.lane.b32.xlu0 %v1265, 256
        %v1268 = vpop.permute.xlu0 %1267
        %v1269 = vlaneseq
        %v1270 = vshrl.u32 %v1269, 7
        %v1271 = vsub.s32 6, %v1270
        %v1272 = vrot.slane %v497, %v1271
        %1274 = vbcast.lane.b32.xlu0 %v1272, 256
        %v1275 = vpop.permute.xlu0 %1274
        %v1276 = vlaneseq
        %v1277 = vshrl.u32 %v1276, 7
        %v1278 = vsub.s32 7, %v1277
        %v1279 = vrot.slane %v497, %v1278
        %1281 = vbcast.lane.b32.xlu0 %v1279, 256
        %v1282 = vpop.permute.xlu0 %1281
        %v1283 = vlaneseq
        %v1284 = vshrl.u32 %v1283, 7
        %v1285 = vsub.s32 0, %v1284
        %v1286 = vrot.slane %v498, %v1285
        %1288 = vbcast.lane.b32.xlu0 %v1286, 256
        %v1289 = vpop.permute.xlu0 %1288
        %v1290 = vlaneseq
        %v1291 = vshrl.u32 %v1290, 7
        %v1292 = vsub.s32 1, %v1291
        %v1293 = vrot.slane %v498, %v1292
        %1295 = vbcast.lane.b32.xlu0 %v1293, 256
        %v1296 = vpop.permute.xlu0 %1295
        %v1297 = vlaneseq
        %v1298 = vshrl.u32 %v1297, 7
        %v1299 = vsub.s32 2, %v1298
        %v1300 = vrot.slane %v498, %v1299
        %1302 = vbcast.lane.b32.xlu0 %v1300, 256
        %v1303 = vpop.permute.xlu0 %1302
        %v1304 = vlaneseq
        %v1305 = vshrl.u32 %v1304, 7
        %v1306 = vsub.s32 3, %v1305
        %v1307 = vrot.slane %v498, %v1306
        %1309 = vbcast.lane.b32.xlu0 %v1307, 256
        %v1310 = vpop.permute.xlu0 %1309
        %v1311 = vlaneseq
        %v1312 = vshrl.u32 %v1311, 7
        %v1313 = vsub.s32 4, %v1312
        %v1314 = vrot.slane %v498, %v1313
        %1316 = vbcast.lane.b32.xlu0 %v1314, 256
        %v1317 = vpop.permute.xlu0 %1316
        %v1318 = vlaneseq
        %v1319 = vshrl.u32 %v1318, 7
        %v1320 = vsub.s32 5, %v1319
        %v1321 = vrot.slane %v498, %v1320
        %1323 = vbcast.lane.b32.xlu0 %v1321, 256
        %v1324 = vpop.permute.xlu0 %1323
        %v1325 = vlaneseq
        %v1326 = vshrl.u32 %v1325, 7
        %v1327 = vsub.s32 6, %v1326
        %v1328 = vrot.slane %v498, %v1327
        %1330 = vbcast.lane.b32.xlu0 %v1328, 256
        %v1331 = vpop.permute.xlu0 %1330
        %v1332 = vlaneseq
        %v1333 = vshrl.u32 %v1332, 7
        %v1334 = vsub.s32 7, %v1333
        %v1335 = vrot.slane %v498, %v1334
        %1337 = vbcast.lane.b32.xlu0 %v1335, 256
        %v1338 = vpop.permute.xlu0 %1337
        %v1343 = vcombine.high %v495, %v495
        %v1345 = vunpack.c.l.s4 1966171168
        %v1346 = vunpack.c.0.s8 %v1345
        %v1347 = vlaneseq
        %v1348 = vshrl.u32 %v1347, 7
        %v1349 = vsub.s32 %v1346, %v1348
        %v1350 = vrot.slane %v495, %v1349
        %v1352 = vunpack.c.l.s4 1966171168
        %v1353 = vunpack.c.0.s8 %v1352
        %v1354 = vlaneseq
        %v1355 = vshrl.u32 %v1354, 7
        %v1356 = vsub.s32 %v1353, %v1355
        %v1357 = vrot.slane %v1343, %v1356
        %v1358 = vcombine.high %v1350, %v1350
        %v1359 = vcombine.high %v1357, %v1357
        %v1361 = vunpack.c.l.s4 1966171168
        %v1362 = vunpack.c.0.s8 %v1361
        %v1363 = vlaneseq
        %v1364 = vshrl.u32 %v1363, 7
        %v1365 = vsub.s32 %v1362, %v1364
        %v1366 = vrot.slane %v1350, %v1365
        %v1368 = vunpack.c.l.s4 1966171168
        %v1369 = vunpack.c.0.s8 %v1368
        %v1370 = vlaneseq
        %v1371 = vshrl.u32 %v1370, 7
        %v1372 = vsub.s32 %v1369, %v1371
        %v1373 = vrot.slane %v1357, %v1372
        %v1375 = vunpack.c.l.s4 1966171168
        %v1376 = vunpack.c.0.s8 %v1375
        %v1377 = vlaneseq
        %v1378 = vshrl.u32 %v1377, 7
        %v1379 = vsub.s32 %v1376, %v1378
        %v1380 = vrot.slane %v1358, %v1379
        %v1382 = vunpack.c.l.s4 1966171168
        %v1383 = vunpack.c.0.s8 %v1382
        %v1384 = vlaneseq
        %v1385 = vshrl.u32 %v1384, 7
        %v1386 = vsub.s32 %v1383, %v1385
        %v1387 = vrot.slane %v1359, %v1386
        %v1388 = vcombine.high %v1366, %v1366
        %v1389 = vcombine.high %v1373, %v1373
        %v1390 = vcombine.high %v1380, %v1380
        %v1391 = vcombine.high %v1387, %v1387
        %v1392 = vcombine.high %v496, %v496
        %v1394 = vunpack.c.l.s4 1966171168
        %v1395 = vunpack.c.0.s8 %v1394
        %v1396 = vlaneseq
        %v1397 = vshrl.u32 %v1396, 7
        %v1398 = vsub.s32 %v1395, %v1397
        %v1399 = vrot.slane %v496, %v1398
        %v1401 = vunpack.c.l.s4 1966171168
        %v1402 = vunpack.c.0.s8 %v1401
        %v1403 = vlaneseq
        %v1404 = vshrl.u32 %v1403, 7
        %v1405 = vsub.s32 %v1402, %v1404
        %v1406 = vrot.slane %v1392, %v1405
        %v1407 = vcombine.high %v1399, %v1399
        %v1408 = vcombine.high %v1406, %v1406
        %v1410 = vunpack.c.l.s4 1966171168
        %v1411 = vunpack.c.0.s8 %v1410
        %v1412 = vlaneseq
        %v1413 = vshrl.u32 %v1412, 7
        %v1414 = vsub.s32 %v1411, %v1413
        %v1415 = vrot.slane %v1399, %v1414
        %v1417 = vunpack.c.l.s4 1966171168
        %v1418 = vunpack.c.0.s8 %v1417
        %v1419 = vlaneseq
        %v1420 = vshrl.u32 %v1419, 7
        %v1421 = vsub.s32 %v1418, %v1420
        %v1422 = vrot.slane %v1406, %v1421
        %v1424 = vunpack.c.l.s4 1966171168
        %v1425 = vunpack.c.0.s8 %v1424
        %v1426 = vlaneseq
        %v1427 = vshrl.u32 %v1426, 7
        %v1428 = vsub.s32 %v1425, %v1427
        %v1429 = vrot.slane %v1407, %v1428
        %v1431 = vunpack.c.l.s4 1966171168
        %v1432 = vunpack.c.0.s8 %v1431
        %v1433 = vlaneseq
        %v1434 = vshrl.u32 %v1433, 7
        %v1435 = vsub.s32 %v1432, %v1434
        %v1436 = vrot.slane %v1408, %v1435
        %v1437 = vcombine.high %v1415, %v1415
        %v1438 = vcombine.high %v1422, %v1422
        %v1439 = vcombine.high %v1429, %v1429
        %v1440 = vcombine.high %v1436, %v1436
        %v1441 = vcombine.high %v497, %v497
        %v1443 = vunpack.c.l.s4 1966171168
        %v1444 = vunpack.c.0.s8 %v1443
        %v1445 = vlaneseq
        %v1446 = vshrl.u32 %v1445, 7
        %v1447 = vsub.s32 %v1444, %v1446
        %v1448 = vrot.slane %v497, %v1447
        %v1450 = vunpack.c.l.s4 1966171168
        %v1451 = vunpack.c.0.s8 %v1450
        %v1452 = vlaneseq
        %v1453 = vshrl.u32 %v1452, 7
        %v1454 = vsub.s32 %v1451, %v1453
        %v1455 = vrot.slane %v1441, %v1454
        %v1456 = vcombine.high %v1448, %v1448
        %v1457 = vcombine.high %v1455, %v1455
        %v1459 = vunpack.c.l.s4 1966171168
        %v1460 = vunpack.c.0.s8 %v1459
        %v1461 = vlaneseq
        %v1462 = vshrl.u32 %v1461, 7
        %v1463 = vsub.s32 %v1460, %v1462
        %v1464 = vrot.slane %v1448, %v1463
        %v1466 = vunpack.c.l.s4 1966171168
        %v1467 = vunpack.c.0.s8 %v1466
        %v1468 = vlaneseq
        %v1469 = vshrl.u32 %v1468, 7
        %v1470 = vsub.s32 %v1467, %v1469
        %v1471 = vrot.slane %v1455, %v1470
        %v1473 = vunpack.c.l.s4 1966171168
        %v1474 = vunpack.c.0.s8 %v1473
        %v1475 = vlaneseq
        %v1476 = vshrl.u32 %v1475, 7
        %v1477 = vsub.s32 %v1474, %v1476
        %v1478 = vrot.slane %v1456, %v1477
        %v1480 = vunpack.c.l.s4 1966171168
        %v1481 = vunpack.c.0.s8 %v1480
        %v1482 = vlaneseq
        %v1483 = vshrl.u32 %v1482, 7
        %v1484 = vsub.s32 %v1481, %v1483
        %v1485 = vrot.slane %v1457, %v1484
        %v1486 = vcombine.high %v1464, %v1464
        %v1487 = vcombine.high %v1471, %v1471
        %v1488 = vcombine.high %v1478, %v1478
        %v1489 = vcombine.high %v1485, %v1485
        %v1490 = vcombine.high %v498, %v498
        %v1492 = vunpack.c.l.s4 1966171168
        %v1493 = vunpack.c.0.s8 %v1492
        %v1494 = vlaneseq
        %v1495 = vshrl.u32 %v1494, 7
        %v1496 = vsub.s32 %v1493, %v1495
        %v1497 = vrot.slane %v498, %v1496
        %v1499 = vunpack.c.l.s4 1966171168
        %v1500 = vunpack.c.0.s8 %v1499
        %v1501 = vlaneseq
        %v1502 = vshrl.u32 %v1501, 7
        %v1503 = vsub.s32 %v1500, %v1502
        %v1504 = vrot.slane %v1490, %v1503
        %v1505 = vcombine.high %v1497, %v1497
        %v1506 = vcombine.high %v1504, %v1504
        %v1508 = vunpack.c.l.s4 1966171168
        %v1509 = vunpack.c.0.s8 %v1508
        %v1510 = vlaneseq
        %v1511 = vshrl.u32 %v1510, 7
        %v1512 = vsub.s32 %v1509, %v1511
        %v1513 = vrot.slane %v1497, %v1512
        %v1515 = vunpack.c.l.s4 1966171168
        %v1516 = vunpack.c.0.s8 %v1515
        %v1517 = vlaneseq
        %v1518 = vshrl.u32 %v1517, 7
        %v1519 = vsub.s32 %v1516, %v1518
        %v1520 = vrot.slane %v1504, %v1519
        %v1522 = vunpack.c.l.s4 1966171168
        %v1523 = vunpack.c.0.s8 %v1522
        %v1524 = vlaneseq
        %v1525 = vshrl.u32 %v1524, 7
        %v1526 = vsub.s32 %v1523, %v1525
        %v1527 = vrot.slane %v1505, %v1526
        %v1529 = vunpack.c.l.s4 1966171168
        %v1530 = vunpack.c.0.s8 %v1529
        %v1531 = vlaneseq
        %v1532 = vshrl.u32 %v1531, 7
        %v1533 = vsub.s32 %v1530, %v1532
        %v1534 = vrot.slane %v1506, %v1533
        %v1535 = vcombine.high %v1513, %v1513
        %v1536 = vcombine.high %v1520, %v1520
        %v1537 = vcombine.high %v1527, %v1527
        %v1538 = vcombine.high %v1534, %v1534
        %v1539 = vlaneseq
        %v1540 = vshrl.u32 %v1539, 7
        %v1541 = vsub.s32 0, %v1540
        %v1542 = vrot.slane %v1366, %v1541
        %v1543 = vlaneseq
        %v1544 = vshrl.u32 %v1543, 7
        %v1545 = vsub.s32 0, %v1544
        %v1546 = vrot.slane %v1380, %v1545
        %v1547 = vlaneseq
        %v1548 = vshrl.u32 %v1547, 7
        %v1549 = vsub.s32 0, %v1548
        %v1550 = vrot.slane %v1388, %v1549
        %v1551 = vlaneseq
        %v1552 = vshrl.u32 %v1551, 7
        %v1553 = vsub.s32 0, %v1552
        %v1554 = vrot.slane %v1390, %v1553
        %v1555 = vlaneseq
        %v1556 = vshrl.u32 %v1555, 7
        %v1557 = vsub.s32 0, %v1556
        %v1558 = vrot.slane %v1373, %v1557
        %v1559 = vlaneseq
        %v1560 = vshrl.u32 %v1559, 7
        %v1561 = vsub.s32 0, %v1560
        %v1562 = vrot.slane %v1387, %v1561
        %v1563 = vlaneseq
        %v1564 = vshrl.u32 %v1563, 7
        %v1565 = vsub.s32 0, %v1564
        %v1566 = vrot.slane %v1389, %v1565
        %v1567 = vlaneseq
        %v1568 = vshrl.u32 %v1567, 7
        %v1569 = vsub.s32 0, %v1568
        %v1570 = vrot.slane %v1391, %v1569
        %v1571 = vlaneseq
        %v1572 = vshrl.u32 %v1571, 7
        %v1573 = vsub.s32 0, %v1572
        %v1574 = vrot.slane %v1415, %v1573
        %v1575 = vlaneseq
        %v1576 = vshrl.u32 %v1575, 7
        %v1577 = vsub.s32 0, %v1576
        %v1578 = vrot.slane %v1429, %v1577
        %v1579 = vlaneseq
        %v1580 = vshrl.u32 %v1579, 7
        %v1581 = vsub.s32 0, %v1580
        %v1582 = vrot.slane %v1437, %v1581
        %v1583 = vlaneseq
        %v1584 = vshrl.u32 %v1583, 7
        %v1585 = vsub.s32 0, %v1584
        %v1586 = vrot.slane %v1439, %v1585
        %v1587 = vlaneseq
        %v1588 = vshrl.u32 %v1587, 7
        %v1589 = vsub.s32 0, %v1588
        %v1590 = vrot.slane %v1422, %v1589
        %v1591 = vlaneseq
        %v1592 = vshrl.u32 %v1591, 7
        %v1593 = vsub.s32 0, %v1592
        %v1594 = vrot.slane %v1436, %v1593
        %v1595 = vlaneseq
        %v1596 = vshrl.u32 %v1595, 7
        %v1597 = vsub.s32 0, %v1596
        %v1598 = vrot.slane %v1438, %v1597
        %v1599 = vlaneseq
        %v1600 = vshrl.u32 %v1599, 7
        %v1601 = vsub.s32 0, %v1600
        %v1602 = vrot.slane %v1440, %v1601
        %v1603 = vlaneseq
        %v1604 = vshrl.u32 %v1603, 7
        %v1605 = vsub.s32 0, %v1604
        %v1606 = vrot.slane %v1464, %v1605
        %v1607 = vlaneseq
        %v1608 = vshrl.u32 %v1607, 7
        %v1609 = vsub.s32 0, %v1608
        %v1610 = vrot.slane %v1478, %v1609
        %v1611 = vlaneseq
        %v1612 = vshrl.u32 %v1611, 7
        %v1613 = vsub.s32 0, %v1612
        %v1614 = vrot.slane %v1486, %v1613
        %v1615 = vlaneseq
        %v1616 = vshrl.u32 %v1615, 7
        %v1617 = vsub.s32 0, %v1616
        %v1618 = vrot.slane %v1488, %v1617
        %v1619 = vlaneseq
        %v1620 = vshrl.u32 %v1619, 7
        %v1621 = vsub.s32 0, %v1620
        %v1622 = vrot.slane %v1471, %v1621
        %v1623 = vlaneseq
        %v1624 = vshrl.u32 %v1623, 7
        %v1625 = vsub.s32 0, %v1624
        %v1626 = vrot.slane %v1485, %v1625
        %v1627 = vlaneseq
        %v1628 = vshrl.u32 %v1627, 7
        %v1629 = vsub.s32 0, %v1628
        %v1630 = vrot.slane %v1487, %v1629
        %v1631 = vlaneseq
        %v1632 = vshrl.u32 %v1631, 7
        %v1633 = vsub.s32 0, %v1632
        %v1634 = vrot.slane %v1489, %v1633
        %v1635 = vlaneseq
        %v1636 = vshrl.u32 %v1635, 7
        %v1637 = vsub.s32 0, %v1636
        %v1638 = vrot.slane %v1513, %v1637
        %v1639 = vlaneseq
        %v1640 = vshrl.u32 %v1639, 7
        %v1641 = vsub.s32 0, %v1640
        %v1642 = vrot.slane %v1527, %v1641
        %v1643 = vlaneseq
        %v1644 = vshrl.u32 %v1643, 7
        %v1645 = vsub.s32 0, %v1644
        %v1646 = vrot.slane %v1535, %v1645
        %v1647 = vlaneseq
        %v1648 = vshrl.u32 %v1647, 7
        %v1649 = vsub.s32 0, %v1648
        %v1650 = vrot.slane %v1537, %v1649
        %v1651 = vlaneseq
        %v1652 = vshrl.u32 %v1651, 7
        %v1653 = vsub.s32 0, %v1652
        %v1654 = vrot.slane %v1520, %v1653
        %v1655 = vlaneseq
        %v1656 = vshrl.u32 %v1655, 7
        %v1657 = vsub.s32 0, %v1656
        %v1658 = vrot.slane %v1534, %v1657
        %v1659 = vlaneseq
        %v1660 = vshrl.u32 %v1659, 7
        %v1661 = vsub.s32 0, %v1660
        %v1662 = vrot.slane %v1536, %v1661
        %v1663 = vlaneseq
        %v1664 = vshrl.u32 %v1663, 7
        %v1665 = vsub.s32 0, %v1664
        %v1666 = vrot.slane %v1538, %v1665
        %v1699 = vmul.f32 %v1121, %v1542
        %v1700 = vmul.f32 %v1128, %v1546
        %v1701 = vmul.f32 %v1135, %v1550
        %v1702 = vmul.f32 %v1142, %v1554
        %v1703 = vmul.f32 %v1149, %v1558
        %v1704 = vmul.f32 %v1156, %v1562
        %v1705 = vmul.f32 %v1163, %v1566
        %v1706 = vmul.f32 %v1170, %v1570
        %v1707 = vmul.f32 %v1177, %v1574
        %v1708 = vmul.f32 %v1184, %v1578
        %v1709 = vmul.f32 %v1191, %v1582
        %v1710 = vmul.f32 %v1198, %v1586
        %v1711 = vmul.f32 %v1205, %v1590
        %v1712 = vmul.f32 %v1212, %v1594
        %v1713 = vmul.f32 %v1219, %v1598
        %v1714 = vmul.f32 %v1226, %v1602
        %v1715 = vmul.f32 %v1233, %v1606
        %v1716 = vmul.f32 %v1240, %v1610
        %v1717 = vmul.f32 %v1247, %v1614
        %v1718 = vmul.f32 %v1254, %v1618
        %v1719 = vmul.f32 %v1261, %v1622
        %v1720 = vmul.f32 %v1268, %v1626
        %v1721 = vmul.f32 %v1275, %v1630
        %v1722 = vmul.f32 %v1282, %v1634
        %v1723 = vmul.f32 %v1289, %v1638
        %v1724 = vmul.f32 %v1296, %v1642
        %v1725 = vmul.f32 %v1303, %v1646
        %v1726 = vmul.f32 %v1310, %v1650
        %v1727 = vmul.f32 %v1317, %v1654
        %v1728 = vmul.f32 %v1324, %v1658
        %v1729 = vmul.f32 %v1331, %v1662
        %v1730 = vmul.f32 %v1338, %v1666
        %v1731 = vadd.f32 %v1083, %v1699
        %v1732 = vadd.f32 %v1084, %v1700
        %v1733 = vadd.f32 %v1085, %v1701
        %v1734 = vadd.f32 %v1086, %v1702
        %v1735 = vadd.f32 %v1087, %v1703
        %v1736 = vadd.f32 %v1088, %v1704
        %v1737 = vadd.f32 %v1089, %v1705
        %v1738 = vadd.f32 %v1090, %v1706
        %v1739 = vadd.f32 %v1091, %v1707
        %v1740 = vadd.f32 %v1092, %v1708
        %v1741 = vadd.f32 %v1093, %v1709
        %v1742 = vadd.f32 %v1094, %v1710
        %v1743 = vadd.f32 %v1095, %v1711
        %v1744 = vadd.f32 %v1096, %v1712
        %v1745 = vadd.f32 %v1097, %v1713
        %v1746 = vadd.f32 %v1098, %v1714
        %v1747 = vadd.f32 %v1099, %v1715
        %v1748 = vadd.f32 %v1100, %v1716
        %v1749 = vadd.f32 %v1101, %v1717
        %v1750 = vadd.f32 %v1102, %v1718
        %v1751 = vadd.f32 %v1103, %v1719
        %v1752 = vadd.f32 %v1104, %v1720
        %v1753 = vadd.f32 %v1105, %v1721
        %v1754 = vadd.f32 %v1106, %v1722
        %v1755 = vadd.f32 %v1107, %v1723
        %v1756 = vadd.f32 %v1108, %v1724
        %v1757 = vadd.f32 %v1109, %v1725
        %v1758 = vadd.f32 %v1110, %v1726
        %v1759 = vadd.f32 %v1111, %v1727
        %v1760 = vadd.f32 %v1112, %v1728
        %v1761 = vadd.f32 %v1113, %v1729
        %v1762 = vadd.f32 %v1114, %v1730
        %v1763 = vmul.f32 %v1731, 0.70710677
        %v1764 = vmul.f32 %v1732, 0.70710677
        %v1765 = vmul.f32 %v1733, 0.70710677
        %v1766 = vmul.f32 %v1734, 0.70710677
        %v1767 = vmul.f32 %v1735, 0.70710677
        %v1768 = vmul.f32 %v1736, 0.70710677
        %v1769 = vmul.f32 %v1737, 0.70710677
        %v1770 = vmul.f32 %v1738, 0.70710677
        %v1771 = vmul.f32 %v1739, 0.70710677
        %v1772 = vmul.f32 %v1740, 0.70710677
        %v1773 = vmul.f32 %v1741, 0.70710677
        %v1774 = vmul.f32 %v1742, 0.70710677
        %v1775 = vmul.f32 %v1743, 0.70710677
        %v1776 = vmul.f32 %v1744, 0.70710677
        %v1777 = vmul.f32 %v1745, 0.70710677
        %v1778 = vmul.f32 %v1746, 0.70710677
        %v1779 = vmul.f32 %v1747, 0.70710677
        %v1780 = vmul.f32 %v1748, 0.70710677
        %v1781 = vmul.f32 %v1749, 0.70710677
        %v1782 = vmul.f32 %v1750, 0.70710677
        %v1783 = vmul.f32 %v1751, 0.70710677
        %v1784 = vmul.f32 %v1752, 0.70710677
        %v1785 = vmul.f32 %v1753, 0.70710677
        %v1786 = vmul.f32 %v1754, 0.70710677
        %v1787 = vmul.f32 %v1755, 0.70710677
        %v1788 = vmul.f32 %v1756, 0.70710677
        %v1789 = vmul.f32 %v1757, 0.70710677
        %v1790 = vmul.f32 %v1758, 0.70710677
        %v1791 = vmul.f32 %v1759, 0.70710677
        %v1792 = vmul.f32 %v1760, 0.70710677
        %v1793 = vmul.f32 %v1761, 0.70710677
        %v1794 = vmul.f32 %v1762, 0.70710677
        %v1795 = vmul.f32 %v1763, 1.442695
        %v1796 = vpow.pop %v1795
        %v1797 = vmul.f32 %v1764, 1.442695
        %v1798 = vpow.pop %v1797
        %v1799 = vmul.f32 %v1765, 1.442695
        %v1800 = vpow.pop %v1799
        %v1801 = vmul.f32 %v1766, 1.442695
        %v1802 = vpow.pop %v1801
        %v1803 = vmul.f32 %v1767, 1.442695
        %v1804 = vpow.pop %v1803
        %v1805 = vmul.f32 %v1768, 1.442695
        %v1806 = vpow.pop %v1805
        %v1807 = vmul.f32 %v1769, 1.442695
        %v1808 = vpow.pop %v1807
        %v1809 = vmul.f32 %v1770, 1.442695
        %v1810 = vpow.pop %v1809
        %v1811 = vmul.f32 %v1771, 1.442695
        %v1812 = vpow.pop %v1811
        %v1813 = vmul.f32 %v1772, 1.442695
        %v1814 = vpow.pop %v1813
        %v1815 = vmul.f32 %v1773, 1.442695
        %v1816 = vpow.pop %v1815
        %v1817 = vmul.f32 %v1774, 1.442695
        %v1818 = vpow.pop %v1817
        %v1819 = vmul.f32 %v1775, 1.442695
        %v1820 = vpow.pop %v1819
        %v1821 = vmul.f32 %v1776, 1.442695
        %v1822 = vpow.pop %v1821
        %v1823 = vmul.f32 %v1777, 1.442695
        %v1824 = vpow.pop %v1823
        %v1825 = vmul.f32 %v1778, 1.442695
        %v1826 = vpow.pop %v1825
        %v1827 = vmul.f32 %v1779, 1.442695
        %v1828 = vpow.pop %v1827
        %v1829 = vmul.f32 %v1780, 1.442695
        %v1830 = vpow.pop %v1829
        %v1831 = vmul.f32 %v1781, 1.442695
        %v1832 = vpow.pop %v1831
        %v1833 = vmul.f32 %v1782, 1.442695
        %v1834 = vpow.pop %v1833
        %v1835 = vmul.f32 %v1783, 1.442695
        %v1836 = vpow.pop %v1835
        %v1837 = vmul.f32 %v1784, 1.442695
        %v1838 = vpow.pop %v1837
        %v1839 = vmul.f32 %v1785, 1.442695
        %v1840 = vpow.pop %v1839
        %v1841 = vmul.f32 %v1786, 1.442695
        %v1842 = vpow.pop %v1841
        %v1843 = vmul.f32 %v1787, 1.442695
        %v1844 = vpow.pop %v1843
        %v1845 = vmul.f32 %v1788, 1.442695
        %v1846 = vpow.pop %v1845
        %v1847 = vmul.f32 %v1789, 1.442695
        %v1848 = vpow.pop %v1847
        %v1849 = vmul.f32 %v1790, 1.442695
        %v1850 = vpow.pop %v1849
        %v1851 = vmul.f32 %v1791, 1.442695
        %v1852 = vpow.pop %v1851
        %v1853 = vmul.f32 %v1792, 1.442695
        %v1854 = vpow.pop %v1853
        %v1855 = vmul.f32 %v1793, 1.442695
        %v1856 = vpow.pop %v1855
        %v1857 = vmul.f32 %v1794, 1.442695
        %v1858 = vpow.pop %v1857
        %v1863 = vcombine.high %v471, %v471
        %v1865 = vunpack.c.l.s4 1966171168
        %v1866 = vunpack.c.0.s8 %v1865
        %v1867 = vlaneseq
        %v1868 = vshrl.u32 %v1867, 7
        %v1869 = vsub.s32 %v1866, %v1868
        %v1870 = vrot.slane %v471, %v1869
        %v1872 = vunpack.c.l.s4 1966171168
        %v1873 = vunpack.c.0.s8 %v1872
        %v1874 = vlaneseq
        %v1875 = vshrl.u32 %v1874, 7
        %v1876 = vsub.s32 %v1873, %v1875
        %v1877 = vrot.slane %v1863, %v1876
        %v1878 = vcombine.high %v1870, %v1870
        %v1879 = vcombine.high %v1877, %v1877
        %v1881 = vunpack.c.l.s4 1966171168
        %v1882 = vunpack.c.0.s8 %v1881
        %v1883 = vlaneseq
        %v1884 = vshrl.u32 %v1883, 7
        %v1885 = vsub.s32 %v1882, %v1884
        %v1886 = vrot.slane %v1870, %v1885
        %v1888 = vunpack.c.l.s4 1966171168
        %v1889 = vunpack.c.0.s8 %v1888
        %v1890 = vlaneseq
        %v1891 = vshrl.u32 %v1890, 7
        %v1892 = vsub.s32 %v1889, %v1891
        %v1893 = vrot.slane %v1877, %v1892
        %v1895 = vunpack.c.l.s4 1966171168
        %v1896 = vunpack.c.0.s8 %v1895
        %v1897 = vlaneseq
        %v1898 = vshrl.u32 %v1897, 7
        %v1899 = vsub.s32 %v1896, %v1898
        %v1900 = vrot.slane %v1878, %v1899
        %v1902 = vunpack.c.l.s4 1966171168
        %v1903 = vunpack.c.0.s8 %v1902
        %v1904 = vlaneseq
        %v1905 = vshrl.u32 %v1904, 7
        %v1906 = vsub.s32 %v1903, %v1905
        %v1907 = vrot.slane %v1879, %v1906
        %v1908 = vcombine.high %v1886, %v1886
        %v1909 = vcombine.high %v1893, %v1893
        %v1910 = vcombine.high %v1900, %v1900
        %v1911 = vcombine.high %v1907, %v1907
        %v1912 = vcombine.high %v472, %v472
        %v1914 = vunpack.c.l.s4 1966171168
        %v1915 = vunpack.c.0.s8 %v1914
        %v1916 = vlaneseq
        %v1917 = vshrl.u32 %v1916, 7
        %v1918 = vsub.s32 %v1915, %v1917
        %v1919 = vrot.slane %v472, %v1918
        %v1921 = vunpack.c.l.s4 1966171168
        %v1922 = vunpack.c.0.s8 %v1921
        %v1923 = vlaneseq
        %v1924 = vshrl.u32 %v1923, 7
        %v1925 = vsub.s32 %v1922, %v1924
        %v1926 = vrot.slane %v1912, %v1925
        %v1927 = vcombine.high %v1919, %v1919
        %v1928 = vcombine.high %v1926, %v1926
        %v1930 = vunpack.c.l.s4 1966171168
        %v1931 = vunpack.c.0.s8 %v1930
        %v1932 = vlaneseq
        %v1933 = vshrl.u32 %v1932, 7
        %v1934 = vsub.s32 %v1931, %v1933
        %v1935 = vrot.slane %v1919, %v1934
        %v1937 = vunpack.c.l.s4 1966171168
        %v1938 = vunpack.c.0.s8 %v1937
        %v1939 = vlaneseq
        %v1940 = vshrl.u32 %v1939, 7
        %v1941 = vsub.s32 %v1938, %v1940
        %v1942 = vrot.slane %v1926, %v1941
        %v1944 = vunpack.c.l.s4 1966171168
        %v1945 = vunpack.c.0.s8 %v1944
        %v1946 = vlaneseq
        %v1947 = vshrl.u32 %v1946, 7
        %v1948 = vsub.s32 %v1945, %v1947
        %v1949 = vrot.slane %v1927, %v1948
        %v1951 = vunpack.c.l.s4 1966171168
        %v1952 = vunpack.c.0.s8 %v1951
        %v1953 = vlaneseq
        %v1954 = vshrl.u32 %v1953, 7
        %v1955 = vsub.s32 %v1952, %v1954
        %v1956 = vrot.slane %v1928, %v1955
        %v1957 = vcombine.high %v1935, %v1935
        %v1958 = vcombine.high %v1942, %v1942
        %v1959 = vcombine.high %v1949, %v1949
        %v1960 = vcombine.high %v1956, %v1956
        %v1961 = vcombine.high %v473, %v473
        %v1963 = vunpack.c.l.s4 1966171168
        %v1964 = vunpack.c.0.s8 %v1963
        %v1965 = vlaneseq
        %v1966 = vshrl.u32 %v1965, 7
        %v1967 = vsub.s32 %v1964, %v1966
        %v1968 = vrot.slane %v473, %v1967
        %v1970 = vunpack.c.l.s4 1966171168
        %v1971 = vunpack.c.0.s8 %v1970
        %v1972 = vlaneseq
        %v1973 = vshrl.u32 %v1972, 7
        %v1974 = vsub.s32 %v1971, %v1973
        %v1975 = vrot.slane %v1961, %v1974
        %v1976 = vcombine.high %v1968, %v1968
        %v1977 = vcombine.high %v1975, %v1975
        %v1979 = vunpack.c.l.s4 1966171168
        %v1980 = vunpack.c.0.s8 %v1979
        %v1981 = vlaneseq
        %v1982 = vshrl.u32 %v1981, 7
        %v1983 = vsub.s32 %v1980, %v1982
        %v1984 = vrot.slane %v1968, %v1983
        %v1986 = vunpack.c.l.s4 1966171168
        %v1987 = vunpack.c.0.s8 %v1986
        %v1988 = vlaneseq
        %v1989 = vshrl.u32 %v1988, 7
        %v1990 = vsub.s32 %v1987, %v1989
        %v1991 = vrot.slane %v1975, %v1990
        %v1993 = vunpack.c.l.s4 1966171168
        %v1994 = vunpack.c.0.s8 %v1993
        %v1995 = vlaneseq
        %v1996 = vshrl.u32 %v1995, 7
        %v1997 = vsub.s32 %v1994, %v1996
        %v1998 = vrot.slane %v1976, %v1997
        %v2000 = vunpack.c.l.s4 1966171168
        %v2001 = vunpack.c.0.s8 %v2000
        %v2002 = vlaneseq
        %v2003 = vshrl.u32 %v2002, 7
        %v2004 = vsub.s32 %v2001, %v2003
        %v2005 = vrot.slane %v1977, %v2004
        %v2006 = vcombine.high %v1984, %v1984
        %v2007 = vcombine.high %v1991, %v1991
        %v2008 = vcombine.high %v1998, %v1998
        %v2009 = vcombine.high %v2005, %v2005
        %v2010 = vcombine.high %v474, %v474
        %v2012 = vunpack.c.l.s4 1966171168
        %v2013 = vunpack.c.0.s8 %v2012
        %v2014 = vlaneseq
        %v2015 = vshrl.u32 %v2014, 7
        %v2016 = vsub.s32 %v2013, %v2015
        %v2017 = vrot.slane %v474, %v2016
        %v2019 = vunpack.c.l.s4 1966171168
        %v2020 = vunpack.c.0.s8 %v2019
        %v2021 = vlaneseq
        %v2022 = vshrl.u32 %v2021, 7
        %v2023 = vsub.s32 %v2020, %v2022
        %v2024 = vrot.slane %v2010, %v2023
        %v2025 = vcombine.high %v2017, %v2017
        %v2026 = vcombine.high %v2024, %v2024
        %v2028 = vunpack.c.l.s4 1966171168
        %v2029 = vunpack.c.0.s8 %v2028
        %v2030 = vlaneseq
        %v2031 = vshrl.u32 %v2030, 7
        %v2032 = vsub.s32 %v2029, %v2031
        %v2033 = vrot.slane %v2017, %v2032
        %v2035 = vunpack.c.l.s4 1966171168
        %v2036 = vunpack.c.0.s8 %v2035
        %v2037 = vlaneseq
        %v2038 = vshrl.u32 %v2037, 7
        %v2039 = vsub.s32 %v2036, %v2038
        %v2040 = vrot.slane %v2024, %v2039
        %v2042 = vunpack.c.l.s4 1966171168
        %v2043 = vunpack.c.0.s8 %v2042
        %v2044 = vlaneseq
        %v2045 = vshrl.u32 %v2044, 7
        %v2046 = vsub.s32 %v2043, %v2045
        %v2047 = vrot.slane %v2025, %v2046
        %v2049 = vunpack.c.l.s4 1966171168
        %v2050 = vunpack.c.0.s8 %v2049
        %v2051 = vlaneseq
        %v2052 = vshrl.u32 %v2051, 7
        %v2053 = vsub.s32 %v2050, %v2052
        %v2054 = vrot.slane %v2026, %v2053
        %v2055 = vcombine.high %v2033, %v2033
        %v2056 = vcombine.high %v2040, %v2040
        %v2057 = vcombine.high %v2047, %v2047
        %v2058 = vcombine.high %v2054, %v2054
        %v2059 = vlaneseq
        %v2060 = vshrl.u32 %v2059, 7
        %v2061 = vsub.s32 0, %v2060
        %v2062 = vrot.slane %v1886, %v2061
        %v2063 = vlaneseq
        %v2064 = vshrl.u32 %v2063, 7
        %v2065 = vsub.s32 0, %v2064
        %v2066 = vrot.slane %v1900, %v2065
        %v2067 = vlaneseq
        %v2068 = vshrl.u32 %v2067, 7
        %v2069 = vsub.s32 0, %v2068
        %v2070 = vrot.slane %v1908, %v2069
        %v2071 = vlaneseq
        %v2072 = vshrl.u32 %v2071, 7
        %v2073 = vsub.s32 0, %v2072
        %v2074 = vrot.slane %v1910, %v2073
        %v2075 = vlaneseq
        %v2076 = vshrl.u32 %v2075, 7
        %v2077 = vsub.s32 0, %v2076
        %v2078 = vrot.slane %v1893, %v2077
        %v2079 = vlaneseq
        %v2080 = vshrl.u32 %v2079, 7
        %v2081 = vsub.s32 0, %v2080
        %v2082 = vrot.slane %v1907, %v2081
        %v2083 = vlaneseq
        %v2084 = vshrl.u32 %v2083, 7
        %v2085 = vsub.s32 0, %v2084
        %v2086 = vrot.slane %v1909, %v2085
        %v2087 = vlaneseq
        %v2088 = vshrl.u32 %v2087, 7
        %v2089 = vsub.s32 0, %v2088
        %v2090 = vrot.slane %v1911, %v2089
        %v2091 = vlaneseq
        %v2092 = vshrl.u32 %v2091, 7
        %v2093 = vsub.s32 0, %v2092
        %v2094 = vrot.slane %v1935, %v2093
        %v2095 = vlaneseq
        %v2096 = vshrl.u32 %v2095, 7
        %v2097 = vsub.s32 0, %v2096
        %v2098 = vrot.slane %v1949, %v2097
        %v2099 = vlaneseq
        %v2100 = vshrl.u32 %v2099, 7
        %v2101 = vsub.s32 0, %v2100
        %v2102 = vrot.slane %v1957, %v2101
        %v2103 = vlaneseq
        %v2104 = vshrl.u32 %v2103, 7
        %v2105 = vsub.s32 0, %v2104
        %v2106 = vrot.slane %v1959, %v2105
        %v2107 = vlaneseq
        %v2108 = vshrl.u32 %v2107, 7
        %v2109 = vsub.s32 0, %v2108
        %v2110 = vrot.slane %v1942, %v2109
        %v2111 = vlaneseq
        %v2112 = vshrl.u32 %v2111, 7
        %v2113 = vsub.s32 0, %v2112
        %v2114 = vrot.slane %v1956, %v2113
        %v2115 = vlaneseq
        %v2116 = vshrl.u32 %v2115, 7
        %v2117 = vsub.s32 0, %v2116
        %v2118 = vrot.slane %v1958, %v2117
        %v2119 = vlaneseq
        %v2120 = vshrl.u32 %v2119, 7
        %v2121 = vsub.s32 0, %v2120
        %v2122 = vrot.slane %v1960, %v2121
        %v2123 = vlaneseq
        %v2124 = vshrl.u32 %v2123, 7
        %v2125 = vsub.s32 0, %v2124
        %v2126 = vrot.slane %v1984, %v2125
        %v2127 = vlaneseq
        %v2128 = vshrl.u32 %v2127, 7
        %v2129 = vsub.s32 0, %v2128
        %v2130 = vrot.slane %v1998, %v2129
        %v2131 = vlaneseq
        %v2132 = vshrl.u32 %v2131, 7
        %v2133 = vsub.s32 0, %v2132
        %v2134 = vrot.slane %v2006, %v2133
        %v2135 = vlaneseq
        %v2136 = vshrl.u32 %v2135, 7
        %v2137 = vsub.s32 0, %v2136
        %v2138 = vrot.slane %v2008, %v2137
        %v2139 = vlaneseq
        %v2140 = vshrl.u32 %v2139, 7
        %v2141 = vsub.s32 0, %v2140
        %v2142 = vrot.slane %v1991, %v2141
        %v2143 = vlaneseq
        %v2144 = vshrl.u32 %v2143, 7
        %v2145 = vsub.s32 0, %v2144
        %v2146 = vrot.slane %v2005, %v2145
        %v2147 = vlaneseq
        %v2148 = vshrl.u32 %v2147, 7
        %v2149 = vsub.s32 0, %v2148
        %v2150 = vrot.slane %v2007, %v2149
        %v2151 = vlaneseq
        %v2152 = vshrl.u32 %v2151, 7
        %v2153 = vsub.s32 0, %v2152
        %v2154 = vrot.slane %v2009, %v2153
        %v2155 = vlaneseq
        %v2156 = vshrl.u32 %v2155, 7
        %v2157 = vsub.s32 0, %v2156
        %v2158 = vrot.slane %v2033, %v2157
        %v2159 = vlaneseq
        %v2160 = vshrl.u32 %v2159, 7
        %v2161 = vsub.s32 0, %v2160
        %v2162 = vrot.slane %v2047, %v2161
        %v2163 = vlaneseq
        %v2164 = vshrl.u32 %v2163, 7
        %v2165 = vsub.s32 0, %v2164
        %v2166 = vrot.slane %v2055, %v2165
        %v2167 = vlaneseq
        %v2168 = vshrl.u32 %v2167, 7
        %v2169 = vsub.s32 0, %v2168
        %v2170 = vrot.slane %v2057, %v2169
        %v2171 = vlaneseq
        %v2172 = vshrl.u32 %v2171, 7
        %v2173 = vsub.s32 0, %v2172
        %v2174 = vrot.slane %v2040, %v2173
        %v2175 = vlaneseq
        %v2176 = vshrl.u32 %v2175, 7
        %v2177 = vsub.s32 0, %v2176
        %v2178 = vrot.slane %v2054, %v2177
        %v2179 = vlaneseq
        %v2180 = vshrl.u32 %v2179, 7
        %v2181 = vsub.s32 0, %v2180
        %v2182 = vrot.slane %v2056, %v2181
        %v2183 = vlaneseq
        %v2184 = vshrl.u32 %v2183, 7
        %v2185 = vsub.s32 0, %v2184
        %v2186 = vrot.slane %v2058, %v2185
        %v2219 = vmul.f32 %v1796, %v2062
        %v2220 = vmul.f32 %v1798, %v2066
        %v2221 = vmul.f32 %v1800, %v2070
        %v2222 = vmul.f32 %v1802, %v2074
        %v2223 = vmul.f32 %v1804, %v2078
        %v2224 = vmul.f32 %v1806, %v2082
        %v2225 = vmul.f32 %v1808, %v2086
        %v2226 = vmul.f32 %v1810, %v2090
        %v2227 = vmul.f32 %v1812, %v2094
        %v2228 = vmul.f32 %v1814, %v2098
        %v2229 = vmul.f32 %v1816, %v2102
        %v2230 = vmul.f32 %v1818, %v2106
        %v2231 = vmul.f32 %v1820, %v2110
        %v2232 = vmul.f32 %v1822, %v2114
        %v2233 = vmul.f32 %v1824, %v2118
        %v2234 = vmul.f32 %v1826, %v2122
        %v2235 = vmul.f32 %v1828, %v2126
        %v2236 = vmul.f32 %v1830, %v2130
        %v2237 = vmul.f32 %v1832, %v2134
        %v2238 = vmul.f32 %v1834, %v2138
        %v2239 = vmul.f32 %v1836, %v2142
        %v2240 = vmul.f32 %v1838, %v2146
        %v2241 = vmul.f32 %v1840, %v2150
        %v2242 = vmul.f32 %v1842, %v2154
        %v2243 = vmul.f32 %v1844, %v2158
        %v2244 = vmul.f32 %v1846, %v2162
        %v2245 = vmul.f32 %v1848, %v2166
        %v2246 = vmul.f32 %v1850, %v2170
        %v2247 = vmul.f32 %v1852, %v2174
        %v2248 = vmul.f32 %v1854, %v2178
        %v2249 = vmul.f32 %v1856, %v2182
        %v2250 = vmul.f32 %v1858, %v2186
        %vm2251 = vcmask 64512
        %v2252 = vsel %vm2251, %v2219, 0.0
        %2253 = vadd.xlane.f32.xlu0 %v2252
        %v2254 = vpop.xlane.xlu0 %2253
        %v2255 = vsel %vm2251, %v2220, 0.0
        %2256 = vadd.xlane.f32.xlu0 %v2255
        %v2257 = vpop.xlane.xlu0 %2256
        %v2258 = vsel %vm2251, %v2221, 0.0
        %2259 = vadd.xlane.f32.xlu0 %v2258
        %v2260 = vpop.xlane.xlu0 %2259
        %v2261 = vsel %vm2251, %v2222, 0.0
        %2262 = vadd.xlane.f32.xlu0 %v2261
        %v2263 = vpop.xlane.xlu0 %2262
        %v2264 = vsel %vm2251, %v2223, 0.0
        %2265 = vadd.xlane.f32.xlu0 %v2264
        %v2266 = vpop.xlane.xlu0 %2265
        %v2267 = vsel %vm2251, %v2224, 0.0
        %2268 = vadd.xlane.f32.xlu0 %v2267
        %v2269 = vpop.xlane.xlu0 %2268
        %v2270 = vsel %vm2251, %v2225, 0.0
        %2271 = vadd.xlane.f32.xlu0 %v2270
        %v2272 = vpop.xlane.xlu0 %2271
        %v2273 = vsel %vm2251, %v2226, 0.0
        %2274 = vadd.xlane.f32.xlu0 %v2273
        %v2275 = vpop.xlane.xlu0 %2274
        %v2276 = vsel %vm2251, %v2227, 0.0
        %2277 = vadd.xlane.f32.xlu0 %v2276
        %v2278 = vpop.xlane.xlu0 %2277
        %v2279 = vsel %vm2251, %v2228, 0.0
        %2280 = vadd.xlane.f32.xlu0 %v2279
        %v2281 = vpop.xlane.xlu0 %2280
        %v2282 = vsel %vm2251, %v2229, 0.0
        %2283 = vadd.xlane.f32.xlu0 %v2282
        %v2284 = vpop.xlane.xlu0 %2283
        %v2285 = vsel %vm2251, %v2230, 0.0
        %2286 = vadd.xlane.f32.xlu0 %v2285
        %v2287 = vpop.xlane.xlu0 %2286
        %v2288 = vsel %vm2251, %v2231, 0.0
        %2289 = vadd.xlane.f32.xlu0 %v2288
        %v2290 = vpop.xlane.xlu0 %2289
        %v2291 = vsel %vm2251, %v2232, 0.0
        %2292 = vadd.xlane.f32.xlu0 %v2291
        %v2293 = vpop.xlane.xlu0 %2292
        %v2294 = vsel %vm2251, %v2233, 0.0
        %2295 = vadd.xlane.f32.xlu0 %v2294
        %v2296 = vpop.xlane.xlu0 %2295
        %v2297 = vsel %vm2251, %v2234, 0.0
        %2298 = vadd.xlane.f32.xlu0 %v2297
        %v2299 = vpop.xlane.xlu0 %2298
        %v2300 = vsel %vm2251, %v2235, 0.0
        %2301 = vadd.xlane.f32.xlu0 %v2300
        %v2302 = vpop.xlane.xlu0 %2301
        %v2303 = vsel %vm2251, %v2236, 0.0
        %2304 = vadd.xlane.f32.xlu0 %v2303
        %v2305 = vpop.xlane.xlu0 %2304
        %v2306 = vsel %vm2251, %v2237, 0.0
        %2307 = vadd.xlane.f32.xlu0 %v2306
        %v2308 = vpop.xlane.xlu0 %2307
        %v2309 = vsel %vm2251, %v2238, 0.0
        %2310 = vadd.xlane.f32.xlu0 %v2309
        %v2311 = vpop.xlane.xlu0 %2310
        %v2312 = vsel %vm2251, %v2239, 0.0
        %2313 = vadd.xlane.f32.xlu0 %v2312
        %v2314 = vpop.xlane.xlu0 %2313
        %v2315 = vsel %vm2251, %v2240, 0.0
        %2316 = vadd.xlane.f32.xlu0 %v2315
        %v2317 = vpop.xlane.xlu0 %2316
        %v2318 = vsel %vm2251, %v2241, 0.0
        %2319 = vadd.xlane.f32.xlu0 %v2318
        %v2320 = vpop.xlane.xlu0 %2319
        %v2321 = vsel %vm2251, %v2242, 0.0
        %2322 = vadd.xlane.f32.xlu0 %v2321
        %v2323 = vpop.xlane.xlu0 %2322
        %v2324 = vsel %vm2251, %v2243, 0.0
        %2325 = vadd.xlane.f32.xlu0 %v2324
        %v2326 = vpop.xlane.xlu0 %2325
        %v2327 = vsel %vm2251, %v2244, 0.0
        %2328 = vadd.xlane.f32.xlu0 %v2327
        %v2329 = vpop.xlane.xlu0 %2328
        %v2330 = vsel %vm2251, %v2245, 0.0
        %2331 = vadd.xlane.f32.xlu0 %v2330
        %v2332 = vpop.xlane.xlu0 %2331
        %v2333 = vsel %vm2251, %v2246, 0.0
        %2334 = vadd.xlane.f32.xlu0 %v2333
        %v2335 = vpop.xlane.xlu0 %2334
        %v2336 = vsel %vm2251, %v2247, 0.0
        %2337 = vadd.xlane.f32.xlu0 %v2336
        %v2338 = vpop.xlane.xlu0 %2337
        %v2339 = vsel %vm2251, %v2248, 0.0
        %2340 = vadd.xlane.f32.xlu0 %v2339
        %v2341 = vpop.xlane.xlu0 %2340
        %v2342 = vsel %vm2251, %v2249, 0.0
        %2343 = vadd.xlane.f32.xlu0 %v2342
        %v2344 = vpop.xlane.xlu0 %2343
        %v2345 = vsel %vm2251, %v2250, 0.0
        %2346 = vadd.xlane.f32.xlu0 %v2345
        %v2347 = vpop.xlane.xlu0 %2346
        %v2348 = vsel %vm2251, %v1796, 0.0
        %2349 = vadd.xlane.f32.xlu0 %v2348
        %v2350 = vpop.xlane.xlu0 %2349
        %v2351 = vsel %vm2251, %v1798, 0.0
        %2352 = vadd.xlane.f32.xlu0 %v2351
        %v2353 = vpop.xlane.xlu0 %2352
        %v2354 = vsel %vm2251, %v1800, 0.0
        %2355 = vadd.xlane.f32.xlu0 %v2354
        %v2356 = vpop.xlane.xlu0 %2355
        %v2357 = vsel %vm2251, %v1802, 0.0
        %2358 = vadd.xlane.f32.xlu0 %v2357
        %v2359 = vpop.xlane.xlu0 %2358
        %v2360 = vsel %vm2251, %v1804, 0.0
        %2361 = vadd.xlane.f32.xlu0 %v2360
        %v2362 = vpop.xlane.xlu0 %2361
        %v2363 = vsel %vm2251, %v1806, 0.0
        %2364 = vadd.xlane.f32.xlu0 %v2363
        %v2365 = vpop.xlane.xlu0 %2364
        %v2366 = vsel %vm2251, %v1808, 0.0
        %2367 = vadd.xlane.f32.xlu0 %v2366
        %v2368 = vpop.xlane.xlu0 %2367
        %v2369 = vsel %vm2251, %v1810, 0.0
        %2370 = vadd.xlane.f32.xlu0 %v2369
        %v2371 = vpop.xlane.xlu0 %2370
        %v2372 = vsel %vm2251, %v1812, 0.0
        %2373 = vadd.xlane.f32.xlu0 %v2372
        %v2374 = vpop.xlane.xlu0 %2373
        %v2375 = vsel %vm2251, %v1814, 0.0
        %2376 = vadd.xlane.f32.xlu0 %v2375
        %v2377 = vpop.xlane.xlu0 %2376
        %v2378 = vsel %vm2251, %v1816, 0.0
        %2379 = vadd.xlane.f32.xlu0 %v2378
        %v2380 = vpop.xlane.xlu0 %2379
        %v2381 = vsel %vm2251, %v1818, 0.0
        %2382 = vadd.xlane.f32.xlu0 %v2381
        %v2383 = vpop.xlane.xlu0 %2382
        %v2384 = vsel %vm2251, %v1820, 0.0
        %2385 = vadd.xlane.f32.xlu0 %v2384
        %v2386 = vpop.xlane.xlu0 %2385
        %v2387 = vsel %vm2251, %v1822, 0.0
        %2388 = vadd.xlane.f32.xlu0 %v2387
        %v2389 = vpop.xlane.xlu0 %2388
        %v2390 = vsel %vm2251, %v1824, 0.0
        %2391 = vadd.xlane.f32.xlu0 %v2390
        %v2392 = vpop.xlane.xlu0 %2391
        %v2393 = vsel %vm2251, %v1826, 0.0
        %2394 = vadd.xlane.f32.xlu0 %v2393
        %v2395 = vpop.xlane.xlu0 %2394
        %v2396 = vsel %vm2251, %v1828, 0.0
        %2397 = vadd.xlane.f32.xlu0 %v2396
        %v2398 = vpop.xlane.xlu0 %2397
        %v2399 = vsel %vm2251, %v1830, 0.0
        %2400 = vadd.xlane.f32.xlu0 %v2399
        %v2401 = vpop.xlane.xlu0 %2400
        %v2402 = vsel %vm2251, %v1832, 0.0
        %2403 = vadd.xlane.f32.xlu0 %v2402
        %v2404 = vpop.xlane.xlu0 %2403
        %v2405 = vsel %vm2251, %v1834, 0.0
        %2406 = vadd.xlane.f32.xlu0 %v2405
        %v2407 = vpop.xlane.xlu0 %2406
        %v2408 = vsel %vm2251, %v1836, 0.0
        %2409 = vadd.xlane.f32.xlu0 %v2408
        %v2410 = vpop.xlane.xlu0 %2409
        %v2411 = vsel %vm2251, %v1838, 0.0
        %2412 = vadd.xlane.f32.xlu0 %v2411
        %v2413 = vpop.xlane.xlu0 %2412
        %v2414 = vsel %vm2251, %v1840, 0.0
        %2415 = vadd.xlane.f32.xlu0 %v2414
        %v2416 = vpop.xlane.xlu0 %2415
        %v2417 = vsel %vm2251, %v1842, 0.0
        %2418 = vadd.xlane.f32.xlu0 %v2417
        %v2419 = vpop.xlane.xlu0 %2418
        %v2420 = vsel %vm2251, %v1844, 0.0
        %2421 = vadd.xlane.f32.xlu0 %v2420
        %v2422 = vpop.xlane.xlu0 %2421
        %v2423 = vsel %vm2251, %v1846, 0.0
        %2424 = vadd.xlane.f32.xlu0 %v2423
        %v2425 = vpop.xlane.xlu0 %2424
        %v2426 = vsel %vm2251, %v1848, 0.0
        %2427 = vadd.xlane.f32.xlu0 %v2426
        %v2428 = vpop.xlane.xlu0 %2427
        %v2429 = vsel %vm2251, %v1850, 0.0
        %2430 = vadd.xlane.f32.xlu0 %v2429
        %v2431 = vpop.xlane.xlu0 %2430
        %v2432 = vsel %vm2251, %v1852, 0.0
        %2433 = vadd.xlane.f32.xlu0 %v2432
        %v2434 = vpop.xlane.xlu0 %2433
        %v2435 = vsel %vm2251, %v1854, 0.0
        %2436 = vadd.xlane.f32.xlu0 %v2435
        %v2437 = vpop.xlane.xlu0 %2436
        %v2438 = vsel %vm2251, %v1856, 0.0
        %2439 = vadd.xlane.f32.xlu0 %v2438
        %v2440 = vpop.xlane.xlu0 %2439
        %v2441 = vsel %vm2251, %v1858, 0.0
        %2442 = vadd.xlane.f32.xlu0 %v2441
        %v2443 = vpop.xlane.xlu0 %2442
        %v2444 = vrcp.pop %v2350
        %v2445 = vrcp.pop %v2353
        %v2446 = vrcp.pop %v2356
        %v2447 = vrcp.pop %v2359
        %v2448 = vrcp.pop %v2362
        %v2449 = vrcp.pop %v2365
        %v2450 = vrcp.pop %v2368
        %v2451 = vrcp.pop %v2371
        %v2452 = vrcp.pop %v2374
        %v2453 = vrcp.pop %v2377
        %v2454 = vrcp.pop %v2380
        %v2455 = vrcp.pop %v2383
        %v2456 = vrcp.pop %v2386
        %v2457 = vrcp.pop %v2389
        %v2458 = vrcp.pop %v2392
        %v2459 = vrcp.pop %v2395
        %v2460 = vrcp.pop %v2398
        %v2461 = vrcp.pop %v2401
        %v2462 = vrcp.pop %v2404
        %v2463 = vrcp.pop %v2407
        %v2464 = vrcp.pop %v2410
        %v2465 = vrcp.pop %v2413
        %v2466 = vrcp.pop %v2416
        %v2467 = vrcp.pop %v2419
        %v2468 = vrcp.pop %v2422
        %v2469 = vrcp.pop %v2425
        %v2470 = vrcp.pop %v2428
        %v2471 = vrcp.pop %v2431
        %v2472 = vrcp.pop %v2434
        %v2473 = vrcp.pop %v2437
        %v2474 = vrcp.pop %v2440
        %v2475 = vrcp.pop %v2443
        %v2476 = vmul.f32 %v2254, %v2444
        %v2477 = vmul.f32 %v2257, %v2445
        %v2478 = vmul.f32 %v2260, %v2446
        %v2479 = vmul.f32 %v2263, %v2447
        %v2480 = vmul.f32 %v2266, %v2448
        %v2481 = vmul.f32 %v2269, %v2449
        %v2482 = vmul.f32 %v2272, %v2450
        %v2483 = vmul.f32 %v2275, %v2451
        %v2484 = vmul.f32 %v2278, %v2452
        %v2485 = vmul.f32 %v2281, %v2453
        %v2486 = vmul.f32 %v2284, %v2454
        %v2487 = vmul.f32 %v2287, %v2455
        %v2488 = vmul.f32 %v2290, %v2456
        %v2489 = vmul.f32 %v2293, %v2457
        %v2490 = vmul.f32 %v2296, %v2458
        %v2491 = vmul.f32 %v2299, %v2459
        %v2492 = vmul.f32 %v2302, %v2460
        %v2493 = vmul.f32 %v2305, %v2461
        %v2494 = vmul.f32 %v2308, %v2462
        %v2495 = vmul.f32 %v2311, %v2463
        %v2496 = vmul.f32 %v2314, %v2464
        %v2497 = vmul.f32 %v2317, %v2465
        %v2498 = vmul.f32 %v2320, %v2466
        %v2499 = vmul.f32 %v2323, %v2467
        %v2500 = vmul.f32 %v2326, %v2468
        %v2501 = vmul.f32 %v2329, %v2469
        %v2502 = vmul.f32 %v2332, %v2470
        %v2503 = vmul.f32 %v2335, %v2471
        %v2504 = vmul.f32 %v2338, %v2472
        %v2505 = vmul.f32 %v2341, %v2473
        %v2506 = vmul.f32 %v2344, %v2474
        %v2507 = vmul.f32 %v2347, %v2475
        %v2508 = vld [vmem:[%s444] sm:$0xff]
        %v2509 = vld [vmem:[%s444 + $0x8] sm:$0xff]
        %v2510 = vld [vmem:[%s444 + $0x10] sm:$0xff]
        %v2511 = vld [vmem:[%s444 + $0x18] sm:$0xff]
        %v2512 = vlaneseq
        %v2513 = vshrl.u32 %v2512, 7
        %v2514 = vcombine.high %v2508, %v2508
        %v2516 = vunpack.c.l.s4 1966171168
        %v2517 = vunpack.c.0.s8 %v2516
        %v2518 = vlaneseq
        %v2519 = vshrl.u32 %v2518, 7
        %v2520 = vsub.s32 %v2517, %v2519
        %v2521 = vrot.slane %v2508, %v2520
        %v2523 = vunpack.c.l.s4 1966171168
        %v2524 = vunpack.c.0.s8 %v2523
        %v2525 = vlaneseq
        %v2526 = vshrl.u32 %v2525, 7
        %v2527 = vsub.s32 %v2524, %v2526
        %v2528 = vrot.slane %v2514, %v2527
        %v2529 = vcombine.high %v2521, %v2521
        %v2530 = vcombine.high %v2528, %v2528
        %v2532 = vunpack.c.l.s4 1966171168
        %v2533 = vunpack.c.0.s8 %v2532
        %v2534 = vlaneseq
        %v2535 = vshrl.u32 %v2534, 7
        %v2536 = vsub.s32 %v2533, %v2535
        %v2537 = vrot.slane %v2521, %v2536
        %v2539 = vunpack.c.l.s4 1966171168
        %v2540 = vunpack.c.0.s8 %v2539
        %v2541 = vlaneseq
        %v2542 = vshrl.u32 %v2541, 7
        %v2543 = vsub.s32 %v2540, %v2542
        %v2544 = vrot.slane %v2528, %v2543
        %v2546 = vunpack.c.l.s4 1966171168
        %v2547 = vunpack.c.0.s8 %v2546
        %v2548 = vlaneseq
        %v2549 = vshrl.u32 %v2548, 7
        %v2550 = vsub.s32 %v2547, %v2549
        %v2551 = vrot.slane %v2529, %v2550
        %v2553 = vunpack.c.l.s4 1966171168
        %v2554 = vunpack.c.0.s8 %v2553
        %v2555 = vlaneseq
        %v2556 = vshrl.u32 %v2555, 7
        %v2557 = vsub.s32 %v2554, %v2556
        %v2558 = vrot.slane %v2530, %v2557
        %v2559 = vcombine.high %v2537, %v2537
        %v2560 = vcombine.high %v2544, %v2544
        %v2561 = vcombine.high %v2551, %v2551
        %v2562 = vcombine.high %v2558, %v2558
        %v2563 = vcombine.high %v2509, %v2509
        %v2565 = vunpack.c.l.s4 1966171168
        %v2566 = vunpack.c.0.s8 %v2565
        %v2567 = vlaneseq
        %v2568 = vshrl.u32 %v2567, 7
        %v2569 = vsub.s32 %v2566, %v2568
        %v2570 = vrot.slane %v2509, %v2569
        %v2572 = vunpack.c.l.s4 1966171168
        %v2573 = vunpack.c.0.s8 %v2572
        %v2574 = vlaneseq
        %v2575 = vshrl.u32 %v2574, 7
        %v2576 = vsub.s32 %v2573, %v2575
        %v2577 = vrot.slane %v2563, %v2576
        %v2578 = vcombine.high %v2570, %v2570
        %v2579 = vcombine.high %v2577, %v2577
        %v2581 = vunpack.c.l.s4 1966171168
        %v2582 = vunpack.c.0.s8 %v2581
        %v2583 = vlaneseq
        %v2584 = vshrl.u32 %v2583, 7
        %v2585 = vsub.s32 %v2582, %v2584
        %v2586 = vrot.slane %v2570, %v2585
        %v2588 = vunpack.c.l.s4 1966171168
        %v2589 = vunpack.c.0.s8 %v2588
        %v2590 = vlaneseq
        %v2591 = vshrl.u32 %v2590, 7
        %v2592 = vsub.s32 %v2589, %v2591
        %v2593 = vrot.slane %v2577, %v2592
        %v2595 = vunpack.c.l.s4 1966171168
        %v2596 = vunpack.c.0.s8 %v2595
        %v2597 = vlaneseq
        %v2598 = vshrl.u32 %v2597, 7
        %v2599 = vsub.s32 %v2596, %v2598
        %v2600 = vrot.slane %v2578, %v2599
        %v2602 = vunpack.c.l.s4 1966171168
        %v2603 = vunpack.c.0.s8 %v2602
        %v2604 = vlaneseq
        %v2605 = vshrl.u32 %v2604, 7
        %v2606 = vsub.s32 %v2603, %v2605
        %v2607 = vrot.slane %v2579, %v2606
        %v2608 = vcombine.high %v2586, %v2586
        %v2609 = vcombine.high %v2593, %v2593
        %v2610 = vcombine.high %v2600, %v2600
        %v2611 = vcombine.high %v2607, %v2607
        %v2612 = vcombine.high %v2510, %v2510
        %v2614 = vunpack.c.l.s4 1966171168
        %v2615 = vunpack.c.0.s8 %v2614
        %v2616 = vlaneseq
        %v2617 = vshrl.u32 %v2616, 7
        %v2618 = vsub.s32 %v2615, %v2617
        %v2619 = vrot.slane %v2510, %v2618
        %v2621 = vunpack.c.l.s4 1966171168
        %v2622 = vunpack.c.0.s8 %v2621
        %v2623 = vlaneseq
        %v2624 = vshrl.u32 %v2623, 7
        %v2625 = vsub.s32 %v2622, %v2624
        %v2626 = vrot.slane %v2612, %v2625
        %v2627 = vcombine.high %v2619, %v2619
        %v2628 = vcombine.high %v2626, %v2626
        %v2630 = vunpack.c.l.s4 1966171168
        %v2631 = vunpack.c.0.s8 %v2630
        %v2632 = vlaneseq
        %v2633 = vshrl.u32 %v2632, 7
        %v2634 = vsub.s32 %v2631, %v2633
        %v2635 = vrot.slane %v2619, %v2634
        %v2637 = vunpack.c.l.s4 1966171168
        %v2638 = vunpack.c.0.s8 %v2637
        %v2639 = vlaneseq
        %v2640 = vshrl.u32 %v2639, 7
        %v2641 = vsub.s32 %v2638, %v2640
        %v2642 = vrot.slane %v2626, %v2641
        %v2644 = vunpack.c.l.s4 1966171168
        %v2645 = vunpack.c.0.s8 %v2644
        %v2646 = vlaneseq
        %v2647 = vshrl.u32 %v2646, 7
        %v2648 = vsub.s32 %v2645, %v2647
        %v2649 = vrot.slane %v2627, %v2648
        %v2651 = vunpack.c.l.s4 1966171168
        %v2652 = vunpack.c.0.s8 %v2651
        %v2653 = vlaneseq
        %v2654 = vshrl.u32 %v2653, 7
        %v2655 = vsub.s32 %v2652, %v2654
        %v2656 = vrot.slane %v2628, %v2655
        %v2657 = vcombine.high %v2635, %v2635
        %v2658 = vcombine.high %v2642, %v2642
        %v2659 = vcombine.high %v2649, %v2649
        %v2660 = vcombine.high %v2656, %v2656
        %v2661 = vcombine.high %v2511, %v2511
        %v2663 = vunpack.c.l.s4 1966171168
        %v2664 = vunpack.c.0.s8 %v2663
        %v2665 = vlaneseq
        %v2666 = vshrl.u32 %v2665, 7
        %v2667 = vsub.s32 %v2664, %v2666
        %v2668 = vrot.slane %v2511, %v2667
        %v2670 = vunpack.c.l.s4 1966171168
        %v2671 = vunpack.c.0.s8 %v2670
        %v2672 = vlaneseq
        %v2673 = vshrl.u32 %v2672, 7
        %v2674 = vsub.s32 %v2671, %v2673
        %v2675 = vrot.slane %v2661, %v2674
        %v2676 = vcombine.high %v2668, %v2668
        %v2677 = vcombine.high %v2675, %v2675
        %v2679 = vunpack.c.l.s4 1966171168
        %v2680 = vunpack.c.0.s8 %v2679
        %v2681 = vlaneseq
        %v2682 = vshrl.u32 %v2681, 7
        %v2683 = vsub.s32 %v2680, %v2682
        %v2684 = vrot.slane %v2668, %v2683
        %v2686 = vunpack.c.l.s4 1966171168
        %v2687 = vunpack.c.0.s8 %v2686
        %v2688 = vlaneseq
        %v2689 = vshrl.u32 %v2688, 7
        %v2690 = vsub.s32 %v2687, %v2689
        %v2691 = vrot.slane %v2675, %v2690
        %v2693 = vunpack.c.l.s4 1966171168
        %v2694 = vunpack.c.0.s8 %v2693
        %v2695 = vlaneseq
        %v2696 = vshrl.u32 %v2695, 7
        %v2697 = vsub.s32 %v2694, %v2696
        %v2698 = vrot.slane %v2676, %v2697
        %v2700 = vunpack.c.l.s4 1966171168
        %v2701 = vunpack.c.0.s8 %v2700
        %v2702 = vlaneseq
        %v2703 = vshrl.u32 %v2702, 7
        %v2704 = vsub.s32 %v2701, %v2703
        %v2705 = vrot.slane %v2677, %v2704
        %v2706 = vcombine.high %v2684, %v2684
        %v2707 = vcombine.high %v2691, %v2691
        %v2708 = vcombine.high %v2698, %v2698
        %v2709 = vcombine.high %v2705, %v2705
        %v2710 = vlaneseq
        %v2711 = vshrl.u32 %v2710, 7
        %v2712 = vsub.s32 0, %v2711
        %v2713 = vrot.slane %v2537, %v2712
        %v2714 = vlaneseq
        %v2715 = vshrl.u32 %v2714, 7
        %v2716 = vsub.s32 0, %v2715
        %v2717 = vrot.slane %v2551, %v2716
        %v2718 = vlaneseq
        %v2719 = vshrl.u32 %v2718, 7
        %v2720 = vsub.s32 0, %v2719
        %v2721 = vrot.slane %v2559, %v2720
        %v2722 = vlaneseq
        %v2723 = vshrl.u32 %v2722, 7
        %v2724 = vsub.s32 0, %v2723
        %v2725 = vrot.slane %v2561, %v2724
        %v2726 = vlaneseq
        %v2727 = vshrl.u32 %v2726, 7
        %v2728 = vsub.s32 0, %v2727
        %v2729 = vrot.slane %v2544, %v2728
        %v2730 = vlaneseq
        %v2731 = vshrl.u32 %v2730, 7
        %v2732 = vsub.s32 0, %v2731
        %v2733 = vrot.slane %v2558, %v2732
        %v2734 = vlaneseq
        %v2735 = vshrl.u32 %v2734, 7
        %v2736 = vsub.s32 0, %v2735
        %v2737 = vrot.slane %v2560, %v2736
        %v2738 = vlaneseq
        %v2739 = vshrl.u32 %v2738, 7
        %v2740 = vsub.s32 0, %v2739
        %v2741 = vrot.slane %v2562, %v2740
        %v2742 = vlaneseq
        %v2743 = vshrl.u32 %v2742, 7
        %v2744 = vsub.s32 0, %v2743
        %v2745 = vrot.slane %v2586, %v2744
        %v2746 = vlaneseq
        %v2747 = vshrl.u32 %v2746, 7
        %v2748 = vsub.s32 0, %v2747
        %v2749 = vrot.slane %v2600, %v2748
        %v2750 = vlaneseq
        %v2751 = vshrl.u32 %v2750, 7
        %v2752 = vsub.s32 0, %v2751
        %v2753 = vrot.slane %v2608, %v2752
        %v2754 = vlaneseq
        %v2755 = vshrl.u32 %v2754, 7
        %v2756 = vsub.s32 0, %v2755
        %v2757 = vrot.slane %v2610, %v2756
        %v2758 = vlaneseq
        %v2759 = vshrl.u32 %v2758, 7
        %v2760 = vsub.s32 0, %v2759
        %v2761 = vrot.slane %v2593, %v2760
        %v2762 = vlaneseq
        %v2763 = vshrl.u32 %v2762, 7
        %v2764 = vsub.s32 0, %v2763
        %v2765 = vrot.slane %v2607, %v2764
        %v2766 = vlaneseq
        %v2767 = vshrl.u32 %v2766, 7
        %v2768 = vsub.s32 0, %v2767
        %v2769 = vrot.slane %v2609, %v2768
        %v2770 = vlaneseq
        %v2771 = vshrl.u32 %v2770, 7
        %v2772 = vsub.s32 0, %v2771
        %v2773 = vrot.slane %v2611, %v2772
        %v2774 = vlaneseq
        %v2775 = vshrl.u32 %v2774, 7
        %v2776 = vsub.s32 0, %v2775
        %v2777 = vrot.slane %v2635, %v2776
        %v2778 = vlaneseq
        %v2779 = vshrl.u32 %v2778, 7
        %v2780 = vsub.s32 0, %v2779
        %v2781 = vrot.slane %v2649, %v2780
        %v2782 = vlaneseq
        %v2783 = vshrl.u32 %v2782, 7
        %v2784 = vsub.s32 0, %v2783
        %v2785 = vrot.slane %v2657, %v2784
        %v2786 = vlaneseq
        %v2787 = vshrl.u32 %v2786, 7
        %v2788 = vsub.s32 0, %v2787
        %v2789 = vrot.slane %v2659, %v2788
        %v2790 = vlaneseq
        %v2791 = vshrl.u32 %v2790, 7
        %v2792 = vsub.s32 0, %v2791
        %v2793 = vrot.slane %v2642, %v2792
        %v2794 = vlaneseq
        %v2795 = vshrl.u32 %v2794, 7
        %v2796 = vsub.s32 0, %v2795
        %v2797 = vrot.slane %v2656, %v2796
        %v2798 = vlaneseq
        %v2799 = vshrl.u32 %v2798, 7
        %v2800 = vsub.s32 0, %v2799
        %v2801 = vrot.slane %v2658, %v2800
        %v2802 = vlaneseq
        %v2803 = vshrl.u32 %v2802, 7
        %v2804 = vsub.s32 0, %v2803
        %v2805 = vrot.slane %v2660, %v2804
        %v2806 = vlaneseq
        %v2807 = vshrl.u32 %v2806, 7
        %v2808 = vsub.s32 0, %v2807
        %v2809 = vrot.slane %v2684, %v2808
        %v2810 = vlaneseq
        %v2811 = vshrl.u32 %v2810, 7
        %v2812 = vsub.s32 0, %v2811
        %v2813 = vrot.slane %v2698, %v2812
        %v2814 = vlaneseq
        %v2815 = vshrl.u32 %v2814, 7
        %v2816 = vsub.s32 0, %v2815
        %v2817 = vrot.slane %v2706, %v2816
        %v2818 = vlaneseq
        %v2819 = vshrl.u32 %v2818, 7
        %v2820 = vsub.s32 0, %v2819
        %v2821 = vrot.slane %v2708, %v2820
        %v2822 = vlaneseq
        %v2823 = vshrl.u32 %v2822, 7
        %v2824 = vsub.s32 0, %v2823
        %v2825 = vrot.slane %v2691, %v2824
        %v2826 = vlaneseq
        %v2827 = vshrl.u32 %v2826, 7
        %v2828 = vsub.s32 0, %v2827
        %v2829 = vrot.slane %v2705, %v2828
        %v2830 = vlaneseq
        %v2831 = vshrl.u32 %v2830, 7
        %v2832 = vsub.s32 0, %v2831
        %v2833 = vrot.slane %v2707, %v2832
        %v2834 = vlaneseq
        %v2835 = vshrl.u32 %v2834, 7
        %v2836 = vsub.s32 0, %v2835
        %v2837 = vrot.slane %v2709, %v2836
        %vm2838 = vcmp.eq.s32.totalorder %v2513, %v2713
        %vm2839 = vcmp.eq.s32.totalorder %v2513, %v2717
        %vm2840 = vcmp.eq.s32.totalorder %v2513, %v2721
        %vm2841 = vcmp.eq.s32.totalorder %v2513, %v2725
        %vm2842 = vcmp.eq.s32.totalorder %v2513, %v2729
        %vm2843 = vcmp.eq.s32.totalorder %v2513, %v2733
        %vm2844 = vcmp.eq.s32.totalorder %v2513, %v2737
        %vm2845 = vcmp.eq.s32.totalorder %v2513, %v2741
        %vm2846 = vcmp.eq.s32.totalorder %v2513, %v2745
        %vm2847 = vcmp.eq.s32.totalorder %v2513, %v2749
        %vm2848 = vcmp.eq.s32.totalorder %v2513, %v2753
        %vm2849 = vcmp.eq.s32.totalorder %v2513, %v2757
        %vm2850 = vcmp.eq.s32.totalorder %v2513, %v2761
        %vm2851 = vcmp.eq.s32.totalorder %v2513, %v2765
        %vm2852 = vcmp.eq.s32.totalorder %v2513, %v2769
        %vm2853 = vcmp.eq.s32.totalorder %v2513, %v2773
        %vm2854 = vcmp.eq.s32.totalorder %v2513, %v2777
        %vm2855 = vcmp.eq.s32.totalorder %v2513, %v2781
        %vm2856 = vcmp.eq.s32.totalorder %v2513, %v2785
        %vm2857 = vcmp.eq.s32.totalorder %v2513, %v2789
        %vm2858 = vcmp.eq.s32.totalorder %v2513, %v2793
        %vm2859 = vcmp.eq.s32.totalorder %v2513, %v2797
        %vm2860 = vcmp.eq.s32.totalorder %v2513, %v2801
        %vm2861 = vcmp.eq.s32.totalorder %v2513, %v2805
        %vm2862 = vcmp.eq.s32.totalorder %v2513, %v2809
        %vm2863 = vcmp.eq.s32.totalorder %v2513, %v2813
        %vm2864 = vcmp.eq.s32.totalorder %v2513, %v2817
        %vm2865 = vcmp.eq.s32.totalorder %v2513, %v2821
        %vm2866 = vcmp.eq.s32.totalorder %v2513, %v2825
        %vm2867 = vcmp.eq.s32.totalorder %v2513, %v2829
        %vm2868 = vcmp.eq.s32.totalorder %v2513, %v2833
        %vm2869 = vcmp.eq.s32.totalorder %v2513, %v2837
        %v2870 = vsel %vm2838, %v2476, 0.0
        %v2871 = vsel %vm2839, %v2477, 0.0
        %v2872 = vsel %vm2840, %v2478, 0.0
        %v2873 = vsel %vm2841, %v2479, 0.0
        %v2874 = vsel %vm2842, %v2480, 0.0
        %v2875 = vsel %vm2843, %v2481, 0.0
        %v2876 = vsel %vm2844, %v2482, 0.0
        %v2877 = vsel %vm2845, %v2483, 0.0
        %v2878 = vsel %vm2846, %v2484, 0.0
        %v2879 = vsel %vm2847, %v2485, 0.0
        %v2880 = vsel %vm2848, %v2486, 0.0
        %v2881 = vsel %vm2849, %v2487, 0.0
        %v2882 = vsel %vm2850, %v2488, 0.0
        %v2883 = vsel %vm2851, %v2489, 0.0
        %v2884 = vsel %vm2852, %v2490, 0.0
        %v2885 = vsel %vm2853, %v2491, 0.0
        %v2886 = vsel %vm2854, %v2492, 0.0
        %v2887 = vsel %vm2855, %v2493, 0.0
        %v2888 = vsel %vm2856, %v2494, 0.0
        %v2889 = vsel %vm2857, %v2495, 0.0
        %v2890 = vsel %vm2858, %v2496, 0.0
        %v2891 = vsel %vm2859, %v2497, 0.0
        %v2892 = vsel %vm2860, %v2498, 0.0
        %v2893 = vsel %vm2861, %v2499, 0.0
        %v2894 = vsel %vm2862, %v2500, 0.0
        %v2895 = vsel %vm2863, %v2501, 0.0
        %v2896 = vsel %vm2864, %v2502, 0.0
        %v2897 = vsel %vm2865, %v2503, 0.0
        %v2898 = vsel %vm2866, %v2504, 0.0
        %v2899 = vsel %vm2867, %v2505, 0.0
        %v2900 = vsel %vm2868, %v2506, 0.0
        %v2901 = vsel %vm2869, %v2507, 0.0
        %vm2902 = vcmask 7168
        %v2903 = vsel %vm2902, %v2870, 0.0
        %v2904 = vrot.slane %v2903, 4
        %v2905 = vadd.f32 %v2903, %v2904
        %v2906 = vrot.slane %v2905, 2
        %v2907 = vadd.f32 %v2905, %v2906
        %v2908 = vrot.slane %v2907, 1
        %v2909 = vadd.f32 %v2907, %v2908
        %v2910 = vsel %vm2902, %v2871, 0.0
        %v2911 = vrot.slane %v2910, 4
        %v2912 = vadd.f32 %v2910, %v2911
        %v2913 = vrot.slane %v2912, 2
        %v2914 = vadd.f32 %v2912, %v2913
        %v2915 = vrot.slane %v2914, 1
        %v2916 = vadd.f32 %v2914, %v2915
        %v2917 = vsel %vm2902, %v2872, 0.0
        %v2918 = vrot.slane %v2917, 4
        %v2919 = vadd.f32 %v2917, %v2918
        %v2920 = vrot.slane %v2919, 2
        %v2921 = vadd.f32 %v2919, %v2920
        %v2922 = vrot.slane %v2921, 1
        %v2923 = vadd.f32 %v2921, %v2922
        %v2924 = vsel %vm2902, %v2873, 0.0
        %v2925 = vrot.slane %v2924, 4
        %v2926 = vadd.f32 %v2924, %v2925
        %v2927 = vrot.slane %v2926, 2
        %v2928 = vadd.f32 %v2926, %v2927
        %v2929 = vrot.slane %v2928, 1
        %v2930 = vadd.f32 %v2928, %v2929
        %v2931 = vsel %vm2902, %v2874, 0.0
        %v2932 = vrot.slane %v2931, 4
        %v2933 = vadd.f32 %v2931, %v2932
        %v2934 = vrot.slane %v2933, 2
        %v2935 = vadd.f32 %v2933, %v2934
        %v2936 = vrot.slane %v2935, 1
        %v2937 = vadd.f32 %v2935, %v2936
        %v2938 = vsel %vm2902, %v2875, 0.0
        %v2939 = vrot.slane %v2938, 4
        %v2940 = vadd.f32 %v2938, %v2939
        %v2941 = vrot.slane %v2940, 2
        %v2942 = vadd.f32 %v2940, %v2941
        %v2943 = vrot.slane %v2942, 1
        %v2944 = vadd.f32 %v2942, %v2943
        %v2945 = vsel %vm2902, %v2876, 0.0
        %v2946 = vrot.slane %v2945, 4
        %v2947 = vadd.f32 %v2945, %v2946
        %v2948 = vrot.slane %v2947, 2
        %v2949 = vadd.f32 %v2947, %v2948
        %v2950 = vrot.slane %v2949, 1
        %v2951 = vadd.f32 %v2949, %v2950
        %v2952 = vsel %vm2902, %v2877, 0.0
        %v2953 = vrot.slane %v2952, 4
        %v2954 = vadd.f32 %v2952, %v2953
        %v2955 = vrot.slane %v2954, 2
        %v2956 = vadd.f32 %v2954, %v2955
        %v2957 = vrot.slane %v2956, 1
        %v2958 = vadd.f32 %v2956, %v2957
        %v2959 = vsel %vm2902, %v2878, 0.0
        %v2960 = vrot.slane %v2959, 4
        %v2961 = vadd.f32 %v2959, %v2960
        %v2962 = vrot.slane %v2961, 2
        %v2963 = vadd.f32 %v2961, %v2962
        %v2964 = vrot.slane %v2963, 1
        %v2965 = vadd.f32 %v2963, %v2964
        %v2966 = vsel %vm2902, %v2879, 0.0
        %v2967 = vrot.slane %v2966, 4
        %v2968 = vadd.f32 %v2966, %v2967
        %v2969 = vrot.slane %v2968, 2
        %v2970 = vadd.f32 %v2968, %v2969
        %v2971 = vrot.slane %v2970, 1
        %v2972 = vadd.f32 %v2970, %v2971
        %v2973 = vsel %vm2902, %v2880, 0.0
        %v2974 = vrot.slane %v2973, 4
        %v2975 = vadd.f32 %v2973, %v2974
        %v2976 = vrot.slane %v2975, 2
        %v2977 = vadd.f32 %v2975, %v2976
        %v2978 = vrot.slane %v2977, 1
        %v2979 = vadd.f32 %v2977, %v2978
        %v2980 = vsel %vm2902, %v2881, 0.0
        %v2981 = vrot.slane %v2980, 4
        %v2982 = vadd.f32 %v2980, %v2981
        %v2983 = vrot.slane %v2982, 2
        %v2984 = vadd.f32 %v2982, %v2983
        %v2985 = vrot.slane %v2984, 1
        %v2986 = vadd.f32 %v2984, %v2985
        %v2987 = vsel %vm2902, %v2882, 0.0
        %v2988 = vrot.slane %v2987, 4
        %v2989 = vadd.f32 %v2987, %v2988
        %v2990 = vrot.slane %v2989, 2
        %v2991 = vadd.f32 %v2989, %v2990
        %v2992 = vrot.slane %v2991, 1
        %v2993 = vadd.f32 %v2991, %v2992
        %v2994 = vsel %vm2902, %v2883, 0.0
        %v2995 = vrot.slane %v2994, 4
        %v2996 = vadd.f32 %v2994, %v2995
        %v2997 = vrot.slane %v2996, 2
        %v2998 = vadd.f32 %v2996, %v2997
        %v2999 = vrot.slane %v2998, 1
        %v3000 = vadd.f32 %v2998, %v2999
        %v3001 = vsel %vm2902, %v2884, 0.0
        %v3002 = vrot.slane %v3001, 4
        %v3003 = vadd.f32 %v3001, %v3002
        %v3004 = vrot.slane %v3003, 2
        %v3005 = vadd.f32 %v3003, %v3004
        %v3006 = vrot.slane %v3005, 1
        %v3007 = vadd.f32 %v3005, %v3006
        %v3008 = vsel %vm2902, %v2885, 0.0
        %v3009 = vrot.slane %v3008, 4
        %v3010 = vadd.f32 %v3008, %v3009
        %v3011 = vrot.slane %v3010, 2
        %v3012 = vadd.f32 %v3010, %v3011
        %v3013 = vrot.slane %v3012, 1
        %v3014 = vadd.f32 %v3012, %v3013
        %v3015 = vsel %vm2902, %v2886, 0.0
        %v3016 = vrot.slane %v3015, 4
        %v3017 = vadd.f32 %v3015, %v3016
        %v3018 = vrot.slane %v3017, 2
        %v3019 = vadd.f32 %v3017, %v3018
        %v3020 = vrot.slane %v3019, 1
        %v3021 = vadd.f32 %v3019, %v3020
        %v3022 = vsel %vm2902, %v2887, 0.0
        %v3023 = vrot.slane %v3022, 4
        %v3024 = vadd.f32 %v3022, %v3023
        %v3025 = vrot.slane %v3024, 2
        %v3026 = vadd.f32 %v3024, %v3025
        %v3027 = vrot.slane %v3026, 1
        %v3028 = vadd.f32 %v3026, %v3027
        %v3029 = vsel %vm2902, %v2888, 0.0
        %v3030 = vrot.slane %v3029, 4
        %v3031 = vadd.f32 %v3029, %v3030
        %v3032 = vrot.slane %v3031, 2
        %v3033 = vadd.f32 %v3031, %v3032
        %v3034 = vrot.slane %v3033, 1
        %v3035 = vadd.f32 %v3033, %v3034
        %v3036 = vsel %vm2902, %v2889, 0.0
        %v3037 = vrot.slane %v3036, 4
        %v3038 = vadd.f32 %v3036, %v3037
        %v3039 = vrot.slane %v3038, 2
        %v3040 = vadd.f32 %v3038, %v3039
        %v3041 = vrot.slane %v3040, 1
        %v3042 = vadd.f32 %v3040, %v3041
        %v3043 = vsel %vm2902, %v2890, 0.0
        %v3044 = vrot.slane %v3043, 4
        %v3045 = vadd.f32 %v3043, %v3044
        %v3046 = vrot.slane %v3045, 2
        %v3047 = vadd.f32 %v3045, %v3046
        %v3048 = vrot.slane %v3047, 1
        %v3049 = vadd.f32 %v3047, %v3048
        %v3050 = vsel %vm2902, %v2891, 0.0
        %v3051 = vrot.slane %v3050, 4
        %v3052 = vadd.f32 %v3050, %v3051
        %v3053 = vrot.slane %v3052, 2
        %v3054 = vadd.f32 %v3052, %v3053
        %v3055 = vrot.slane %v3054, 1
        %v3056 = vadd.f32 %v3054, %v3055
        %v3057 = vsel %vm2902, %v2892, 0.0
        %v3058 = vrot.slane %v3057, 4
        %v3059 = vadd.f32 %v3057, %v3058
        %v3060 = vrot.slane %v3059, 2
        %v3061 = vadd.f32 %v3059, %v3060
        %v3062 = vrot.slane %v3061, 1
        %v3063 = vadd.f32 %v3061, %v3062
        %v3064 = vsel %vm2902, %v2893, 0.0
        %v3065 = vrot.slane %v3064, 4
        %v3066 = vadd.f32 %v3064, %v3065
        %v3067 = vrot.slane %v3066, 2
        %v3068 = vadd.f32 %v3066, %v3067
        %v3069 = vrot.slane %v3068, 1
        %v3070 = vadd.f32 %v3068, %v3069
        %v3071 = vsel %vm2902, %v2894, 0.0
        %v3072 = vrot.slane %v3071, 4
        %v3073 = vadd.f32 %v3071, %v3072
        %v3074 = vrot.slane %v3073, 2
        %v3075 = vadd.f32 %v3073, %v3074
        %v3076 = vrot.slane %v3075, 1
        %v3077 = vadd.f32 %v3075, %v3076
        %v3078 = vsel %vm2902, %v2895, 0.0
        %v3079 = vrot.slane %v3078, 4
        %v3080 = vadd.f32 %v3078, %v3079
        %v3081 = vrot.slane %v3080, 2
        %v3082 = vadd.f32 %v3080, %v3081
        %v3083 = vrot.slane %v3082, 1
        %v3084 = vadd.f32 %v3082, %v3083
        %v3085 = vsel %vm2902, %v2896, 0.0
        %v3086 = vrot.slane %v3085, 4
        %v3087 = vadd.f32 %v3085, %v3086
        %v3088 = vrot.slane %v3087, 2
        %v3089 = vadd.f32 %v3087, %v3088
        %v3090 = vrot.slane %v3089, 1
        %v3091 = vadd.f32 %v3089, %v3090
        %v3092 = vsel %vm2902, %v2897, 0.0
        %v3093 = vrot.slane %v3092, 4
        %v3094 = vadd.f32 %v3092, %v3093
        %v3095 = vrot.slane %v3094, 2
        %v3096 = vadd.f32 %v3094, %v3095
        %v3097 = vrot.slane %v3096, 1
        %v3098 = vadd.f32 %v3096, %v3097
        %v3099 = vsel %vm2902, %v2898, 0.0
        %v3100 = vrot.slane %v3099, 4
        %v3101 = vadd.f32 %v3099, %v3100
        %v3102 = vrot.slane %v3101, 2
        %v3103 = vadd.f32 %v3101, %v3102
        %v3104 = vrot.slane %v3103, 1
        %v3105 = vadd.f32 %v3103, %v3104
        %v3106 = vsel %vm2902, %v2899, 0.0
        %v3107 = vrot.slane %v3106, 4
        %v3108 = vadd.f32 %v3106, %v3107
        %v3109 = vrot.slane %v3108, 2
        %v3110 = vadd.f32 %v3108, %v3109
        %v3111 = vrot.slane %v3110, 1
        %v3112 = vadd.f32 %v3110, %v3111
        %v3113 = vsel %vm2902, %v2900, 0.0
        %v3114 = vrot.slane %v3113, 4
        %v3115 = vadd.f32 %v3113, %v3114
        %v3116 = vrot.slane %v3115, 2
        %v3117 = vadd.f32 %v3115, %v3116
        %v3118 = vrot.slane %v3117, 1
        %v3119 = vadd.f32 %v3117, %v3118
        %v3120 = vsel %vm2902, %v2901, 0.0
        %v3121 = vrot.slane %v3120, 4
        %v3122 = vadd.f32 %v3120, %v3121
        %v3123 = vrot.slane %v3122, 2
        %v3124 = vadd.f32 %v3122, %v3123
        %v3125 = vrot.slane %v3124, 1
        %v3126 = vadd.f32 %v3124, %v3125
        %vm3159 = vcmask 1041409
        %v3160 = vsel %vm3159, %v2916, %v2909
        %vm3161 = vcmask 1042434
        %v3162 = vsel %vm3161, %v2923, %v3160
        %vm3163 = vcmask 1043459
        %v3164 = vsel %vm3163, %v2930, %v3162
        %vm3165 = vcmask 1044484
        %v3166 = vsel %vm3165, %v2937, %v3164
        %vm3167 = vcmask 1045509
        %v3168 = vsel %vm3167, %v2944, %v3166
        %vm3169 = vcmask 1046534
        %v3170 = vsel %vm3169, %v2951, %v3168
        %vm3171 = vcmask 1047559
        %v3172 = vsel %vm3171, %v2958, %v3170
        %v3173 = vsel %vm3159, %v2972, %v2965
        %v3174 = vsel %vm3161, %v2979, %v3173
        %v3175 = vsel %vm3163, %v2986, %v3174
        %v3176 = vsel %vm3165, %v2993, %v3175
        %v3177 = vsel %vm3167, %v3000, %v3176
        %v3178 = vsel %vm3169, %v3007, %v3177
        %v3179 = vsel %vm3171, %v3014, %v3178
        %v3180 = vsel %vm3159, %v3028, %v3021
        %v3181 = vsel %vm3161, %v3035, %v3180
        %v3182 = vsel %vm3163, %v3042, %v3181
        %v3183 = vsel %vm3165, %v3049, %v3182
        %v3184 = vsel %vm3167, %v3056, %v3183
        %v3185 = vsel %vm3169, %v3063, %v3184
        %v3186 = vsel %vm3171, %v3070, %v3185
        %v3187 = vsel %vm3159, %v3084, %v3077
        %v3188 = vsel %vm3161, %v3091, %v3187
        %v3189 = vsel %vm3163, %v3098, %v3188
        %v3190 = vsel %vm3165, %v3105, %v3189
        %v3191 = vsel %vm3167, %v3112, %v3190
        %v3192 = vsel %vm3169, %v3119, %v3191
        %v3193 = vsel %vm3171, %v3126, %v3192
        %v3194 = vld [vmem:[%s3] sm:$0x1]
        %v3195 = vld [vmem:[%s3 + $0x1] sm:$0x1]
        %3197 = vset.pattern.permute.xlu0 0
        %3198 = vperm.xlu0 %3197, %v2476
        %v3199 = vpop.permute.xlu0 %3198
        %3202 = vset.pattern.permute.xlu0 0
        %3203 = vperm.xlu0 %3202, %v2477
        %v3204 = vpop.permute.xlu0 %3203
        %3207 = vset.pattern.permute.xlu0 0
        %3208 = vperm.xlu0 %3207, %v2478
        %v3209 = vpop.permute.xlu0 %3208
        %3212 = vset.pattern.permute.xlu0 0
        %3213 = vperm.xlu0 %3212, %v2479
        %v3214 = vpop.permute.xlu0 %3213
        %3217 = vset.pattern.permute.xlu0 0
        %3218 = vperm.xlu0 %3217, %v2480
        %v3219 = vpop.permute.xlu0 %3218
        %3222 = vset.pattern.permute.xlu0 0
        %3223 = vperm.xlu0 %3222, %v2481
        %v3224 = vpop.permute.xlu0 %3223
        %3227 = vset.pattern.permute.xlu0 0
        %3228 = vperm.xlu0 %3227, %v2482
        %v3229 = vpop.permute.xlu0 %3228
        %3232 = vset.pattern.permute.xlu0 0
        %3233 = vperm.xlu0 %3232, %v2483
        %v3234 = vpop.permute.xlu0 %3233
        %3237 = vset.pattern.permute.xlu0 0
        %3238 = vperm.xlu0 %3237, %v2484
        %v3239 = vpop.permute.xlu0 %3238
        %3242 = vset.pattern.permute.xlu0 0
        %3243 = vperm.xlu0 %3242, %v2485
        %v3244 = vpop.permute.xlu0 %3243
        %3247 = vset.pattern.permute.xlu0 0
        %3248 = vperm.xlu0 %3247, %v2486
        %v3249 = vpop.permute.xlu0 %3248
        %3252 = vset.pattern.permute.xlu0 0
        %3253 = vperm.xlu0 %3252, %v2487
        %v3254 = vpop.permute.xlu0 %3253
        %3257 = vset.pattern.permute.xlu0 0
        %3258 = vperm.xlu0 %3257, %v2488
        %v3259 = vpop.permute.xlu0 %3258
        %3262 = vset.pattern.permute.xlu0 0
        %3263 = vperm.xlu0 %3262, %v2489
        %v3264 = vpop.permute.xlu0 %3263
        %3267 = vset.pattern.permute.xlu0 0
        %3268 = vperm.xlu0 %3267, %v2490
        %v3269 = vpop.permute.xlu0 %3268
        %3272 = vset.pattern.permute.xlu0 0
        %3273 = vperm.xlu0 %3272, %v2491
        %v3274 = vpop.permute.xlu0 %3273
        %3277 = vset.pattern.permute.xlu0 0
        %3278 = vperm.xlu0 %3277, %v2492
        %v3279 = vpop.permute.xlu0 %3278
        %3282 = vset.pattern.permute.xlu0 0
        %3283 = vperm.xlu0 %3282, %v2493
        %v3284 = vpop.permute.xlu0 %3283
        %3287 = vset.pattern.permute.xlu0 0
        %3288 = vperm.xlu0 %3287, %v2494
        %v3289 = vpop.permute.xlu0 %3288
        %3292 = vset.pattern.permute.xlu0 0
        %3293 = vperm.xlu0 %3292, %v2495
        %v3294 = vpop.permute.xlu0 %3293
        %3297 = vset.pattern.permute.xlu0 0
        %3298 = vperm.xlu0 %3297, %v2496
        %v3299 = vpop.permute.xlu0 %3298
        %3302 = vset.pattern.permute.xlu0 0
        %3303 = vperm.xlu0 %3302, %v2497
        %v3304 = vpop.permute.xlu0 %3303
        %3307 = vset.pattern.permute.xlu0 0
        %3308 = vperm.xlu0 %3307, %v2498
        %v3309 = vpop.permute.xlu0 %3308
        %3312 = vset.pattern.permute.xlu0 0
        %3313 = vperm.xlu0 %3312, %v2499
        %v3314 = vpop.permute.xlu0 %3313
        %3317 = vset.pattern.permute.xlu0 0
        %3318 = vperm.xlu0 %3317, %v2500
        %v3319 = vpop.permute.xlu0 %3318
        %3322 = vset.pattern.permute.xlu0 0
        %3323 = vperm.xlu0 %3322, %v2501
        %v3324 = vpop.permute.xlu0 %3323
        %3327 = vset.pattern.permute.xlu0 0
        %3328 = vperm.xlu0 %3327, %v2502
        %v3329 = vpop.permute.xlu0 %3328
        %3332 = vset.pattern.permute.xlu0 0
        %3333 = vperm.xlu0 %3332, %v2503
        %v3334 = vpop.permute.xlu0 %3333
        %3337 = vset.pattern.permute.xlu0 0
        %3338 = vperm.xlu0 %3337, %v2504
        %v3339 = vpop.permute.xlu0 %3338
        %3342 = vset.pattern.permute.xlu0 0
        %3343 = vperm.xlu0 %3342, %v2505
        %v3344 = vpop.permute.xlu0 %3343
        %3347 = vset.pattern.permute.xlu0 0
        %3348 = vperm.xlu0 %3347, %v2506
        %v3349 = vpop.permute.xlu0 %3348
        %3352 = vset.pattern.permute.xlu0 0
        %3353 = vperm.xlu0 %3352, %v2507
        %v3354 = vpop.permute.xlu0 %3353
        %3356 = vset.pattern.permute.xlu0 0
        %3357 = vperm.xlu0 %3356, %v3172
        %v3358 = vpop.permute.xlu0 %3357
        %3360 = vset.pattern.permute.xlu0 0
        %3361 = vperm.xlu0 %3360, %v3179
        %v3362 = vpop.permute.xlu0 %3361
        %3364 = vset.pattern.permute.xlu0 0
        %3365 = vperm.xlu0 %3364, %v3186
        %v3366 = vpop.permute.xlu0 %3365
        %3368 = vset.pattern.permute.xlu0 0
        %3369 = vperm.xlu0 %3368, %v3193
        %v3370 = vpop.permute.xlu0 %3369
        %v3372 = vlaneseq
        %v3373 = vshrl.u32 %v3372, 7
        %v3374 = vsub.s32 0, %v3373
        %v3375 = vrot.slane %v3194, %v3374
        %v3376 = vmul.f32 %v3199, %v3375
        %v3377 = vmul.f32 %v3204, %v3375
        %v3378 = vmul.f32 %v3209, %v3375
        %v3379 = vmul.f32 %v3214, %v3375
        %v3380 = vmul.f32 %v3219, %v3375
        %v3381 = vmul.f32 %v3224, %v3375
        %v3382 = vmul.f32 %v3229, %v3375
        %v3383 = vmul.f32 %v3234, %v3375
        %v3384 = vmul.f32 %v3239, %v3375
        %v3385 = vmul.f32 %v3244, %v3375
        %v3386 = vmul.f32 %v3249, %v3375
        %v3387 = vmul.f32 %v3254, %v3375
        %v3388 = vmul.f32 %v3259, %v3375
        %v3389 = vmul.f32 %v3264, %v3375
        %v3390 = vmul.f32 %v3269, %v3375
        %v3391 = vmul.f32 %v3274, %v3375
        %v3392 = vmul.f32 %v3279, %v3375
        %v3393 = vmul.f32 %v3284, %v3375
        %v3394 = vmul.f32 %v3289, %v3375
        %v3395 = vmul.f32 %v3294, %v3375
        %v3396 = vmul.f32 %v3299, %v3375
        %v3397 = vmul.f32 %v3304, %v3375
        %v3398 = vmul.f32 %v3309, %v3375
        %v3399 = vmul.f32 %v3314, %v3375
        %v3400 = vmul.f32 %v3319, %v3375
        %v3401 = vmul.f32 %v3324, %v3375
        %v3402 = vmul.f32 %v3329, %v3375
        %v3403 = vmul.f32 %v3334, %v3375
        %v3404 = vmul.f32 %v3339, %v3375
        %v3405 = vmul.f32 %v3344, %v3375
        %v3406 = vmul.f32 %v3349, %v3375
        %v3407 = vmul.f32 %v3354, %v3375
        %v3408 = vmul.f32 %v3358, %v3375
        %v3409 = vmul.f32 %v3362, %v3375
        %v3410 = vmul.f32 %v3366, %v3375
        %v3411 = vmul.f32 %v3370, %v3375
        %v3412 = vlaneseq
        %v3413 = vshrl.u32 %v3412, 7
        %v3414 = vsub.s32 0, %v3413
        %v3415 = vrot.slane %v3195, %v3414
        %v3416 = vadd.f32 %v3376, %v3415
        %v3417 = vadd.f32 %v3377, %v3415
        %v3418 = vadd.f32 %v3378, %v3415
        %v3419 = vadd.f32 %v3379, %v3415
        %v3420 = vadd.f32 %v3380, %v3415
        %v3421 = vadd.f32 %v3381, %v3415
        %v3422 = vadd.f32 %v3382, %v3415
        %v3423 = vadd.f32 %v3383, %v3415
        %v3424 = vadd.f32 %v3384, %v3415
        %v3425 = vadd.f32 %v3385, %v3415
        %v3426 = vadd.f32 %v3386, %v3415
        %v3427 = vadd.f32 %v3387, %v3415
        %v3428 = vadd.f32 %v3388, %v3415
        %v3429 = vadd.f32 %v3389, %v3415
        %v3430 = vadd.f32 %v3390, %v3415
        %v3431 = vadd.f32 %v3391, %v3415
        %v3432 = vadd.f32 %v3392, %v3415
        %v3433 = vadd.f32 %v3393, %v3415
        %v3434 = vadd.f32 %v3394, %v3415
        %v3435 = vadd.f32 %v3395, %v3415
        %v3436 = vadd.f32 %v3396, %v3415
        %v3437 = vadd.f32 %v3397, %v3415
        %v3438 = vadd.f32 %v3398, %v3415
        %v3439 = vadd.f32 %v3399, %v3415
        %v3440 = vadd.f32 %v3400, %v3415
        %v3441 = vadd.f32 %v3401, %v3415
        %v3442 = vadd.f32 %v3402, %v3415
        %v3443 = vadd.f32 %v3403, %v3415
        %v3444 = vadd.f32 %v3404, %v3415
        %v3445 = vadd.f32 %v3405, %v3415
        %v3446 = vadd.f32 %v3406, %v3415
        %v3447 = vadd.f32 %v3407, %v3415
        %v3448 = vadd.f32 %v3408, %v3415
        %v3449 = vadd.f32 %v3409, %v3415
        %v3450 = vadd.f32 %v3410, %v3415
        %v3451 = vadd.f32 %v3411, %v3415
        %v3452 = vld [vmem:[%s7] sm:$0x1]
        %v3453 = vpack.c.bf16 %v3417, %v3416
        %v3454 = vpack.c.bf16 %v3419, %v3418
        %v3455 = vpack.c.bf16 %v3421, %v3420
        %v3456 = vpack.c.bf16 %v3423, %v3422
        %v3457 = vpack.c.bf16 %v3425, %v3424
        %v3458 = vpack.c.bf16 %v3427, %v3426
        %v3459 = vpack.c.bf16 %v3429, %v3428
        %v3460 = vpack.c.bf16 %v3431, %v3430
        %v3461 = vpack.c.bf16 %v3433, %v3432
        %v3462 = vpack.c.bf16 %v3435, %v3434
        %v3463 = vpack.c.bf16 %v3437, %v3436
        %v3464 = vpack.c.bf16 %v3439, %v3438
        %v3465 = vpack.c.bf16 %v3441, %v3440
        %v3466 = vpack.c.bf16 %v3443, %v3442
        %v3467 = vpack.c.bf16 %v3445, %v3444
        %v3468 = vpack.c.bf16 %v3447, %v3446
        %v3469 = vpack.c.bf16 %v3449, %v3448
        %v3470 = vpack.c.bf16 %v3451, %v3450
        %v3471 = vld [vmem:[%s4] sm:$0xf]
        %v3472 = vld [vmem:[%s4 + $0x4] sm:$0xf]
        %v3473 = vld [vmem:[%s4 + $0x8] sm:$0xf]
        %v3474 = vld [vmem:[%s4 + $0xc] sm:$0xf]
        %v3475 = vld [vmem:[%s4 + $0x10] sm:$0xf]
        %v3476 = vld [vmem:[%s4 + $0x14] sm:$0xf]
        %v3477 = vld [vmem:[%s4 + $0x18] sm:$0xf]
        %v3478 = vld [vmem:[%s4 + $0x1c] sm:$0xf]
        %v3479 = vlaneseq
        %v3480 = vshrl.u32 %v3479, 7
        %v3481 = vsub.s32 0, %v3480
        %v3482 = vrot.slane %v3452, %v3481
        %v3491 = vunpack.c.l.b16 %v3471
        %v3492 = vunpack.c.l.b16 %v3472
        %v3493 = vunpack.c.l.b16 %v3473
        %v3494 = vunpack.c.l.b16 %v3474
        %v3495 = vunpack.c.l.b16 %v3475
        %v3496 = vunpack.c.l.b16 %v3476
        %v3497 = vunpack.c.l.b16 %v3477
        %v3498 = vunpack.c.l.b16 %v3478
        %v3499 = vpack.c.b16 %v3492, %v3491
        %v3500 = vpack.c.b16 %v3494, %v3493
        %v3501 = vpack.c.b16 %v3496, %v3495
        %v3502 = vpack.c.b16 %v3498, %v3497
        %vm3507 = vcmask 523264
        %v3509 = vsel %vm3507, %v3453, 0
        %v3512 = vsel %vm3507, %v3454, 0
        %v3515 = vsel %vm3507, %v3455, 0
        %v3518 = vsel %vm3507, %v3456, 0
        %v3521 = vsel %vm3507, %v3457, 0
        %v3524 = vsel %vm3507, %v3458, 0
        %v3527 = vsel %vm3507, %v3459, 0
        %v3530 = vsel %vm3507, %v3460, 0
        %v3533 = vsel %vm3507, %v3461, 0
        %v3536 = vsel %vm3507, %v3462, 0
        %v3539 = vsel %vm3507, %v3463, 0
        %v3542 = vsel %vm3507, %v3464, 0
        %v3545 = vsel %vm3507, %v3465, 0
        %v3548 = vsel %vm3507, %v3466, 0
        %v3551 = vsel %vm3507, %v3467, 0
        %v3554 = vsel %vm3507, %v3468, 0
        %v3557 = vsel %vm3507, %v3469, 0
        %v3560 = vsel %vm3507, %v3470, 0
        %3562 = vmatprep.subr.bf16.mxu0 0
        %3563 = vmatpush1.bf16.msra.mxu0 %v3499
        %3564 = vmatprep.subr.bf16.mxu0 0
        %3565 = vmatpush1.bf16.msra.mxu0 %v3500
        %3566 = vmatprep.subr.bf16.mxu0 0
        %3567 = vmatpush1.bf16.msra.mxu0 %v3501
        %3568 = vmatprep.subr.bf16.mxu0 0
        %3569 = vmatpush1.bf16.msra.mxu0 %v3502
        %3570 = vmatprep.subr.bf16.mxu0 0
        %3571 = vmatpush1.bf16.msra.mxu0 0
        %3572 = vmatprep.subr.bf16.mxu0 0
        %3573 = vmatpush1.bf16.msra.mxu0 0
        %3574 = vmatprep.subr.bf16.mxu0 0
        %3575 = vmatpush1.bf16.msra.mxu0 0
        %3576 = vmatprep.subr.bf16.mxu0 0
        %3577 = vmatpush1.bf16.msra.mxu0 0
        %3578 = vmatprep.subr.bf16.mxu0 0
        %3579 = vmatpush1.bf16.msra.mxu0 0
        %3580 = vmatprep.subr.bf16.mxu0 0
        %3581 = vmatpush1.bf16.msra.mxu0 0
        %3582 = vmatprep.subr.bf16.mxu0 0
        %3583 = vmatpush1.bf16.msra.mxu0 0
        %3584 = vmatprep.subr.bf16.mxu0 0
        %3585 = vmatpush1.bf16.msra.mxu0 0
        %3586 = vmatprep.subr.bf16.mxu0 0
        %3587 = vmatpush1.bf16.msra.mxu0 0
        %3588 = vmatprep.subr.bf16.mxu0 0
        %3589 = vmatpush1.bf16.msra.mxu0 0
        %3590 = vmatprep.subr.bf16.mxu0 0
        %3591 = vmatpush1.bf16.msra.mxu0 0
        %3592 = vmatprep.subr.bf16.mxu0 0
        %3593 = vmatpush1.bf16.msra.mxu0 0
        %3594 = vmatprep.mubr.bf16.mxu0 0
        %3595 = vmatmul.mubr.bf16.gmra.mrb[0].mxu0 %v3509
        %v3596 = vpop.f32.mrb[0].mxu0
        %v3597 = vadd.f32 %v3482, %v3596
        %v3598 = vpop.f32.mrb[0].mxu0
        %v3599 = vpop.f32.mrb[0].mxu0
        %v3600 = vadd.f32 %v3482, %v3599
        %v3601 = vpop.f32.mrb[0].mxu0
        %3602 = vmatprep.mubr.bf16.mxu0 0
        %3603 = vmatmul.mubr.bf16.gmra.mrb[0].mxu0 %v3512
        %v3604 = vpop.f32.mrb[0].mxu0
        %v3605 = vadd.f32 %v3482, %v3604
        %v3606 = vpop.f32.mrb[0].mxu0
        %v3607 = vpop.f32.mrb[0].mxu0
        %v3608 = vadd.f32 %v3482, %v3607
        %v3609 = vpop.f32.mrb[0].mxu0
        %3610 = vmatprep.mubr.bf16.mxu0 0
        %3611 = vmatmul.mubr.bf16.gmra.mrb[0].mxu0 %v3515
        %v3612 = vpop.f32.mrb[0].mxu0
        %v3613 = vadd.f32 %v3482, %v3612
        %v3614 = vpop.f32.mrb[0].mxu0
        %v3615 = vpop.f32.mrb[0].mxu0
        %v3616 = vadd.f32 %v3482, %v3615
        %v3617 = vpop.f32.mrb[0].mxu0
        %3618 = vmatprep.mubr.bf16.mxu0 0
        %3619 = vmatmul.mubr.bf16.gmra.mrb[0].mxu0 %v3518
        %v3620 = vpop.f32.mrb[0].mxu0
        %v3621 = vadd.f32 %v3482, %v3620
        %v3622 = vpop.f32.mrb[0].mxu0
        %v3623 = vpop.f32.mrb[0].mxu0
        %v3624 = vadd.f32 %v3482, %v3623
        %v3625 = vpop.f32.mrb[0].mxu0
        %3626 = vmatprep.mubr.bf16.mxu0 0
        %3627 = vmatmul.mubr.bf16.gmra.mrb[0].mxu0 %v3521
        %v3628 = vpop.f32.mrb[0].mxu0
        %v3629 = vadd.f32 %v3482, %v3628
        %v3630 = vpop.f32.mrb[0].mxu0
        %v3631 = vpop.f32.mrb[0].mxu0
        %v3632 = vadd.f32 %v3482, %v3631
        %v3633 = vpop.f32.mrb[0].mxu0
        %3634 = vmatprep.mubr.bf16.mxu0 0
        %3635 = vmatmul.mubr.bf16.gmra.mrb[0].mxu0 %v3524
        %v3636 = vpop.f32.mrb[0].mxu0
        %v3637 = vadd.f32 %v3482, %v3636
        %v3638 = vpop.f32.mrb[0].mxu0
        %v3639 = vpop.f32.mrb[0].mxu0
        %v3640 = vadd.f32 %v3482, %v3639
        %v3641 = vpop.f32.mrb[0].mxu0
        %3642 = vmatprep.mubr.bf16.mxu0 0
        %3643 = vmatmul.mubr.bf16.gmra.mrb[0].mxu0 %v3527
        %v3644 = vpop.f32.mrb[0].mxu0
        %v3645 = vadd.f32 %v3482, %v3644
        %v3646 = vpop.f32.mrb[0].mxu0
        %v3647 = vpop.f32.mrb[0].mxu0
        %v3648 = vadd.f32 %v3482, %v3647
        %v3649 = vpop.f32.mrb[0].mxu0
        %3650 = vmatprep.mubr.bf16.mxu0 0
        %3651 = vmatmul.mubr.bf16.gmra.mrb[0].mxu0 %v3530
        %v3652 = vpop.f32.mrb[0].mxu0
        %v3653 = vadd.f32 %v3482, %v3652
        %v3654 = vpop.f32.mrb[0].mxu0
        %v3655 = vpop.f32.mrb[0].mxu0
        %v3656 = vadd.f32 %v3482, %v3655
        %v3657 = vpop.f32.mrb[0].mxu0
        %3658 = vmatprep.mubr.bf16.mxu0 0
        %3659 = vmatmul.mubr.bf16.gmra.mrb[0].mxu0 %v3533
        %v3660 = vpop.f32.mrb[0].mxu0
        %v3661 = vadd.f32 %v3482, %v3660
        %v3662 = vpop.f32.mrb[0].mxu0
        %v3663 = vpop.f32.mrb[0].mxu0
        %v3664 = vadd.f32 %v3482, %v3663
        %v3665 = vpop.f32.mrb[0].mxu0
        %3666 = vmatprep.mubr.bf16.mxu0 0
        %3667 = vmatmul.mubr.bf16.gmra.mrb[0].mxu0 %v3536
        %v3668 = vpop.f32.mrb[0].mxu0
        %v3669 = vadd.f32 %v3482, %v3668
        %v3670 = vpop.f32.mrb[0].mxu0
        %v3671 = vpop.f32.mrb[0].mxu0
        %v3672 = vadd.f32 %v3482, %v3671
        %v3673 = vpop.f32.mrb[0].mxu0
        %3674 = vmatprep.mubr.bf16.mxu0 0
        %3675 = vmatmul.mubr.bf16.gmra.mrb[0].mxu0 %v3539
        %v3676 = vpop.f32.mrb[0].mxu0
        %v3677 = vadd.f32 %v3482, %v3676
        %v3678 = vpop.f32.mrb[0].mxu0
        %v3679 = vpop.f32.mrb[0].mxu0
        %v3680 = vadd.f32 %v3482, %v3679
        %v3681 = vpop.f32.mrb[0].mxu0
        %3682 = vmatprep.mubr.bf16.mxu0 0
        %3683 = vmatmul.mubr.bf16.gmra.mrb[0].mxu0 %v3542
        %v3684 = vpop.f32.mrb[0].mxu0
        %v3685 = vadd.f32 %v3482, %v3684
        %v3686 = vpop.f32.mrb[0].mxu0
        %v3687 = vpop.f32.mrb[0].mxu0
        %v3688 = vadd.f32 %v3482, %v3687
        %v3689 = vpop.f32.mrb[0].mxu0
        %3690 = vmatprep.mubr.bf16.mxu0 0
        %3691 = vmatmul.mubr.bf16.gmra.mrb[0].mxu0 %v3545
        %v3692 = vpop.f32.mrb[0].mxu0
        %v3693 = vadd.f32 %v3482, %v3692
        %v3694 = vpop.f32.mrb[0].mxu0
        %v3695 = vpop.f32.mrb[0].mxu0
        %v3696 = vadd.f32 %v3482, %v3695
        %v3697 = vpop.f32.mrb[0].mxu0
        %3698 = vmatprep.mubr.bf16.mxu0 0
        %3699 = vmatmul.mubr.bf16.gmra.mrb[0].mxu0 %v3548
        %v3700 = vpop.f32.mrb[0].mxu0
        %v3701 = vadd.f32 %v3482, %v3700
        %v3702 = vpop.f32.mrb[0].mxu0
        %v3703 = vpop.f32.mrb[0].mxu0
        %v3704 = vadd.f32 %v3482, %v3703
        %v3705 = vpop.f32.mrb[0].mxu0
        %3706 = vmatprep.mubr.bf16.mxu0 0
        %3707 = vmatmul.mubr.bf16.gmra.mrb[0].mxu0 %v3551
        %v3708 = vpop.f32.mrb[0].mxu0
        %v3709 = vadd.f32 %v3482, %v3708
        %v3710 = vpop.f32.mrb[0].mxu0
        %v3711 = vpop.f32.mrb[0].mxu0
        %v3712 = vadd.f32 %v3482, %v3711
        %v3713 = vpop.f32.mrb[0].mxu0
        %3714 = vmatprep.mubr.bf16.mxu0 0
        %3715 = vmatmul.mubr.bf16.gmra.mrb[0].mxu0 %v3554
        %v3716 = vpop.f32.mrb[0].mxu0
        %v3717 = vadd.f32 %v3482, %v3716
        %v3718 = vpop.f32.mrb[0].mxu0
        %v3719 = vpop.f32.mrb[0].mxu0
        %v3720 = vadd.f32 %v3482, %v3719
        %v3721 = vpop.f32.mrb[0].mxu0
        %3722 = vmatprep.mubr.bf16.mxu0 0
        %3723 = vmatmul.mubr.bf16.gmra.mrb[0].mxu0 %v3557
        %v3724 = vpop.f32.mrb[0].mxu0
        %v3725 = vadd.f32 %v3482, %v3724
        %v3726 = vpop.f32.mrb[0].mxu0
        %v3727 = vpop.f32.mrb[0].mxu0
        %v3728 = vadd.f32 %v3482, %v3727
        %v3729 = vpop.f32.mrb[0].mxu0
        %3730 = vmatprep.mubr.bf16.mxu0 0
        %3731 = vmatmul.mubr.bf16.gmra.mrb[0].mxu0 %v3560
        %v3732 = vpop.f32.mrb[0].mxu0
        %v3733 = vadd.f32 %v3482, %v3732
        %v3734 = vpop.f32.mrb[0].mxu0
        %v3735 = vpop.f32.mrb[0].mxu0
        %v3736 = vadd.f32 %v3482, %v3735
        %v3737 = vpop.f32.mrb[0].mxu0
        %3738 = vdwg.mxu0
        %v3739 = vmax.f32 %v3597, 0.0
        %v3740 = vmax.f32 %v3600, 0.0
        %v3741 = vmax.f32 %v3605, 0.0
        %v3742 = vmax.f32 %v3608, 0.0
        %v3743 = vmax.f32 %v3613, 0.0
        %v3744 = vmax.f32 %v3616, 0.0
        %v3745 = vmax.f32 %v3621, 0.0
        %v3746 = vmax.f32 %v3624, 0.0
        %v3747 = vmax.f32 %v3629, 0.0
        %v3748 = vmax.f32 %v3632, 0.0
        %v3749 = vmax.f32 %v3637, 0.0
        %v3750 = vmax.f32 %v3640, 0.0
        %v3751 = vmax.f32 %v3645, 0.0
        %v3752 = vmax.f32 %v3648, 0.0
        %v3753 = vmax.f32 %v3653, 0.0
        %v3754 = vmax.f32 %v3656, 0.0
        %v3755 = vmax.f32 %v3661, 0.0
        %v3756 = vmax.f32 %v3664, 0.0
        %v3757 = vmax.f32 %v3669, 0.0
        %v3758 = vmax.f32 %v3672, 0.0
        %v3759 = vmax.f32 %v3677, 0.0
        %v3760 = vmax.f32 %v3680, 0.0
        %v3761 = vmax.f32 %v3685, 0.0
        %v3762 = vmax.f32 %v3688, 0.0
        %v3763 = vmax.f32 %v3693, 0.0
        %v3764 = vmax.f32 %v3696, 0.0
        %v3765 = vmax.f32 %v3701, 0.0
        %v3766 = vmax.f32 %v3704, 0.0
        %v3767 = vmax.f32 %v3709, 0.0
        %v3768 = vmax.f32 %v3712, 0.0
        %v3769 = vmax.f32 %v3717, 0.0
        %v3770 = vmax.f32 %v3720, 0.0
        %v3771 = vmax.f32 %v3725, 0.0
        %v3772 = vmax.f32 %v3728, 0.0
        %v3773 = vmax.f32 %v3733, 0.0
        %v3774 = vmax.f32 %v3736, 0.0
        %v3775 = vld [vmem:[%s7 + $0x1] sm:$0x1]
        %v3776 = vpack.c.bf16 %v3740, %v3739
        %v3777 = vpack.c.bf16 %v3742, %v3741
        %v3778 = vpack.c.bf16 %v3744, %v3743
        %v3779 = vpack.c.bf16 %v3746, %v3745
        %v3780 = vpack.c.bf16 %v3748, %v3747
        %v3781 = vpack.c.bf16 %v3750, %v3749
        %v3782 = vpack.c.bf16 %v3752, %v3751
        %v3783 = vpack.c.bf16 %v3754, %v3753
        %v3784 = vpack.c.bf16 %v3756, %v3755
        %v3785 = vpack.c.bf16 %v3758, %v3757
        %v3786 = vpack.c.bf16 %v3760, %v3759
        %v3787 = vpack.c.bf16 %v3762, %v3761
        %v3788 = vpack.c.bf16 %v3764, %v3763
        %v3789 = vpack.c.bf16 %v3766, %v3765
        %v3790 = vpack.c.bf16 %v3768, %v3767
        %v3791 = vpack.c.bf16 %v3770, %v3769
        %v3792 = vpack.c.bf16 %v3772, %v3771
        %v3793 = vpack.c.bf16 %v3774, %v3773
        %v3794 = vld [vmem:[%s5] sm:$0xf]
        %v3795 = vld [vmem:[%s5 + $0x4] sm:$0xf]
        %v3796 = vld [vmem:[%s5 + $0x8] sm:$0xf]
        %v3797 = vld [vmem:[%s5 + $0xc] sm:$0xf]
        %v3798 = vld [vmem:[%s5 + $0x10] sm:$0xf]
        %v3799 = vld [vmem:[%s5 + $0x14] sm:$0xf]
        %v3800 = vld [vmem:[%s5 + $0x18] sm:$0xf]
        %v3801 = vld [vmem:[%s5 + $0x1c] sm:$0xf]
        %v3802 = vld [vmem:[%s5 + $0x20] sm:$0xf]
        %v3803 = vld [vmem:[%s5 + $0x24] sm:$0xf]
        %v3804 = vld [vmem:[%s5 + $0x28] sm:$0xf]
        %v3805 = vld [vmem:[%s5 + $0x2c] sm:$0xf]
        %v3806 = vld [vmem:[%s5 + $0x30] sm:$0xf]
        %v3807 = vld [vmem:[%s5 + $0x34] sm:$0xf]
        %v3808 = vld [vmem:[%s5 + $0x38] sm:$0xf]
        %v3809 = vld [vmem:[%s5 + $0x3c] sm:$0xf]
        %v3810 = vlaneseq
        %v3811 = vshrl.u32 %v3810, 7
        %v3812 = vsub.s32 0, %v3811
        %v3813 = vrot.slane %v3775, %v3812
        %v3830 = vunpack.c.l.b16 %v3794
        %v3831 = vunpack.c.l.b16 %v3795
        %v3832 = vunpack.c.l.b16 %v3796
        %v3833 = vunpack.c.l.b16 %v3797
        %v3834 = vunpack.c.l.b16 %v3798
        %v3835 = vunpack.c.l.b16 %v3799
        %v3836 = vunpack.c.l.b16 %v3800
        %v3837 = vunpack.c.l.b16 %v3801
        %v3838 = vunpack.c.l.b16 %v3802
        %v3839 = vunpack.c.l.b16 %v3803
        %v3840 = vunpack.c.l.b16 %v3804
        %v3841 = vunpack.c.l.b16 %v3805
        %v3842 = vunpack.c.l.b16 %v3806
        %v3843 = vunpack.c.l.b16 %v3807
        %v3844 = vunpack.c.l.b16 %v3808
        %v3845 = vunpack.c.l.b16 %v3809
        %v3846 = vpack.c.b16 %v3831, %v3830
        %v3847 = vpack.c.b16 %v3833, %v3832
        %v3848 = vpack.c.b16 %v3835, %v3834
        %v3849 = vpack.c.b16 %v3837, %v3836
        %v3850 = vpack.c.b16 %v3839, %v3838
        %v3851 = vpack.c.b16 %v3841, %v3840
        %v3852 = vpack.c.b16 %v3843, %v3842
        %v3853 = vpack.c.b16 %v3845, %v3844
        %3862 = vmatprep.subr.bf16.mxu0 0
        %3863 = vmatpush1.bf16.msra.mxu0 %v3846
        %3864 = vmatprep.subr.bf16.mxu0 0
        %3865 = vmatpush1.bf16.msra.mxu0 %v3847
        %3866 = vmatprep.subr.bf16.mxu0 0
        %3867 = vmatpush1.bf16.msra.mxu0 %v3848
        %3868 = vmatprep.subr.bf16.mxu0 0
        %3869 = vmatpush1.bf16.msra.mxu0 %v3849
        %3870 = vmatprep.subr.bf16.mxu0 0
        %3871 = vmatpush1.bf16.msra.mxu0 %v3850
        %3872 = vmatprep.subr.bf16.mxu0 0
        %3873 = vmatpush1.bf16.msra.mxu0 %v3851
        %3874 = vmatprep.subr.bf16.mxu0 0
        %3875 = vmatpush1.bf16.msra.mxu0 %v3852
        %3876 = vmatprep.subr.bf16.mxu0 0
        %3877 = vmatpush1.bf16.msra.mxu0 %v3853
        %3878 = vmatprep.subr.bf16.mxu0 0
        %3879 = vmatpush1.bf16.msra.mxu0 0
        %3880 = vmatprep.subr.bf16.mxu0 0
        %3881 = vmatpush1.bf16.msra.mxu0 0
        %3882 = vmatprep.subr.bf16.mxu0 0
        %3883 = vmatpush1.bf16.msra.mxu0 0
        %3884 = vmatprep.subr.bf16.mxu0 0
        %3885 = vmatpush1.bf16.msra.mxu0 0
        %3886 = vmatprep.subr.bf16.mxu0 0
        %3887 = vmatpush1.bf16.msra.mxu0 0
        %3888 = vmatprep.subr.bf16.mxu0 0
        %3889 = vmatpush1.bf16.msra.mxu0 0
        %3890 = vmatprep.subr.bf16.mxu0 0
        %3891 = vmatpush1.bf16.msra.mxu0 0
        %3892 = vmatprep.subr.bf16.mxu0 0
        %3893 = vmatpush1.bf16.msra.mxu0 0
        %3894 = vmatprep.mubr.bf16.mxu0 0
        %3895 = vmatmul.mubr.bf16.gmra.mrb[0].mxu0 %v3776
        %v3896 = vpop.f32.mrb[0].mxu0
        %v3897 = vadd.f32 %v3813, %v3896
        %v3898 = vpop.f32.mrb[0].mxu0
        %v3899 = vpop.f32.mrb[0].mxu0
        %v3900 = vadd.f32 %v3813, %v3899
        %v3901 = vpop.f32.mrb[0].mxu0
        %3902 = vmatprep.mubr.bf16.mxu0 0
        %3903 = vmatmul.mubr.bf16.gmra.mrb[0].mxu0 %v3777
        %v3904 = vpop.f32.mrb[0].mxu0
        %v3905 = vadd.f32 %v3813, %v3904
        %v3906 = vpop.f32.mrb[0].mxu0
        %v3907 = vpop.f32.mrb[0].mxu0
        %v3908 = vadd.f32 %v3813, %v3907
        %v3909 = vpop.f32.mrb[0].mxu0
        %3910 = vmatprep.mubr.bf16.mxu0 0
        %3911 = vmatmul.mubr.bf16.gmra.mrb[0].mxu0 %v3778
        %v3912 = vpop.f32.mrb[0].mxu0
        %v3913 = vadd.f32 %v3813, %v3912
        %v3914 = vpop.f32.mrb[0].mxu0
        %v3915 = vpop.f32.mrb[0].mxu0
        %v3916 = vadd.f32 %v3813, %v3915
        %v3917 = vpop.f32.mrb[0].mxu0
        %3918 = vmatprep.mubr.bf16.mxu0 0
        %3919 = vmatmul.mubr.bf16.gmra.mrb[0].mxu0 %v3779
        %v3920 = vpop.f32.mrb[0].mxu0
        %v3921 = vadd.f32 %v3813, %v3920
        %v3922 = vpop.f32.mrb[0].mxu0
        %v3923 = vpop.f32.mrb[0].mxu0
        %v3924 = vadd.f32 %v3813, %v3923
        %v3925 = vpop.f32.mrb[0].mxu0
        %3926 = vmatprep.mubr.bf16.mxu0 0
        %3927 = vmatmul.mubr.bf16.gmra.mrb[0].mxu0 %v3780
        %v3928 = vpop.f32.mrb[0].mxu0
        %v3929 = vadd.f32 %v3813, %v3928
        %v3930 = vpop.f32.mrb[0].mxu0
        %v3931 = vpop.f32.mrb[0].mxu0
        %v3932 = vadd.f32 %v3813, %v3931
        %v3933 = vpop.f32.mrb[0].mxu0
        %3934 = vmatprep.mubr.bf16.mxu0 0
        %3935 = vmatmul.mubr.bf16.gmra.mrb[0].mxu0 %v3781
        %v3936 = vpop.f32.mrb[0].mxu0
        %v3937 = vadd.f32 %v3813, %v3936
        %v3938 = vpop.f32.mrb[0].mxu0
        %v3939 = vpop.f32.mrb[0].mxu0
        %v3940 = vadd.f32 %v3813, %v3939
        %v3941 = vpop.f32.mrb[0].mxu0
        %3942 = vmatprep.mubr.bf16.mxu0 0
        %3943 = vmatmul.mubr.bf16.gmra.mrb[0].mxu0 %v3782
        %v3944 = vpop.f32.mrb[0].mxu0
        %v3945 = vadd.f32 %v3813, %v3944
        %v3946 = vpop.f32.mrb[0].mxu0
        %v3947 = vpop.f32.mrb[0].mxu0
        %v3948 = vadd.f32 %v3813, %v3947
        %v3949 = vpop.f32.mrb[0].mxu0
        %3950 = vmatprep.mubr.bf16.mxu0 0
        %3951 = vmatmul.mubr.bf16.gmra.mrb[0].mxu0 %v3783
        %v3952 = vpop.f32.mrb[0].mxu0
        %v3953 = vadd.f32 %v3813, %v3952
        %v3954 = vpop.f32.mrb[0].mxu0
        %v3955 = vpop.f32.mrb[0].mxu0
        %v3956 = vadd.f32 %v3813, %v3955
        %v3957 = vpop.f32.mrb[0].mxu0
        %3958 = vmatprep.mubr.bf16.mxu0 0
        %3959 = vmatmul.mubr.bf16.gmra.mrb[0].mxu0 %v3784
        %v3960 = vpop.f32.mrb[0].mxu0
        %v3961 = vadd.f32 %v3813, %v3960
        %v3962 = vpop.f32.mrb[0].mxu0
        %v3963 = vpop.f32.mrb[0].mxu0
        %v3964 = vadd.f32 %v3813, %v3963
        %v3965 = vpop.f32.mrb[0].mxu0
        %3966 = vmatprep.mubr.bf16.mxu0 0
        %3967 = vmatmul.mubr.bf16.gmra.mrb[0].mxu0 %v3785
        %v3968 = vpop.f32.mrb[0].mxu0
        %v3969 = vadd.f32 %v3813, %v3968
        %v3970 = vpop.f32.mrb[0].mxu0
        %v3971 = vpop.f32.mrb[0].mxu0
        %v3972 = vadd.f32 %v3813, %v3971
        %v3973 = vpop.f32.mrb[0].mxu0
        %3974 = vmatprep.mubr.bf16.mxu0 0
        %3975 = vmatmul.mubr.bf16.gmra.mrb[0].mxu0 %v3786
        %v3976 = vpop.f32.mrb[0].mxu0
        %v3977 = vadd.f32 %v3813, %v3976
        %v3978 = vpop.f32.mrb[0].mxu0
        %v3979 = vpop.f32.mrb[0].mxu0
        %v3980 = vadd.f32 %v3813, %v3979
        %v3981 = vpop.f32.mrb[0].mxu0
        %3982 = vmatprep.mubr.bf16.mxu0 0
        %3983 = vmatmul.mubr.bf16.gmra.mrb[0].mxu0 %v3787
        %v3984 = vpop.f32.mrb[0].mxu0
        %v3985 = vadd.f32 %v3813, %v3984
        %v3986 = vpop.f32.mrb[0].mxu0
        %v3987 = vpop.f32.mrb[0].mxu0
        %v3988 = vadd.f32 %v3813, %v3987
        %v3989 = vpop.f32.mrb[0].mxu0
        %3990 = vmatprep.mubr.bf16.mxu0 0
        %3991 = vmatmul.mubr.bf16.gmra.mrb[0].mxu0 %v3788
        %v3992 = vpop.f32.mrb[0].mxu0
        %v3993 = vadd.f32 %v3813, %v3992
        %v3994 = vpop.f32.mrb[0].mxu0
        %v3995 = vpop.f32.mrb[0].mxu0
        %v3996 = vadd.f32 %v3813, %v3995
        %v3997 = vpop.f32.mrb[0].mxu0
        %3998 = vmatprep.mubr.bf16.mxu0 0
        %3999 = vmatmul.mubr.bf16.gmra.mrb[0].mxu0 %v3789
        %v4000 = vpop.f32.mrb[0].mxu0
        %v4001 = vadd.f32 %v3813, %v4000
        %v4002 = vpop.f32.mrb[0].mxu0
        %v4003 = vpop.f32.mrb[0].mxu0
        %v4004 = vadd.f32 %v3813, %v4003
        %v4005 = vpop.f32.mrb[0].mxu0
        %4006 = vmatprep.mubr.bf16.mxu0 0
        %4007 = vmatmul.mubr.bf16.gmra.mrb[0].mxu0 %v3790
        %v4008 = vpop.f32.mrb[0].mxu0
        %v4009 = vadd.f32 %v3813, %v4008
        %v4010 = vpop.f32.mrb[0].mxu0
        %v4011 = vpop.f32.mrb[0].mxu0
        %v4012 = vadd.f32 %v3813, %v4011
        %v4013 = vpop.f32.mrb[0].mxu0
        %4014 = vmatprep.mubr.bf16.mxu0 0
        %4015 = vmatmul.mubr.bf16.gmra.mrb[0].mxu0 %v3791
        %v4016 = vpop.f32.mrb[0].mxu0
        %v4017 = vadd.f32 %v3813, %v4016
        %v4018 = vpop.f32.mrb[0].mxu0
        %v4019 = vpop.f32.mrb[0].mxu0
        %v4020 = vadd.f32 %v3813, %v4019
        %v4021 = vpop.f32.mrb[0].mxu0
        %4022 = vmatprep.mubr.bf16.mxu0 0
        %4023 = vmatmul.mubr.bf16.gmra.mrb[0].mxu0 %v3792
        %v4024 = vpop.f32.mrb[0].mxu0
        %v4025 = vadd.f32 %v3813, %v4024
        %v4026 = vpop.f32.mrb[0].mxu0
        %v4027 = vpop.f32.mrb[0].mxu0
        %v4028 = vadd.f32 %v3813, %v4027
        %v4029 = vpop.f32.mrb[0].mxu0
        %4030 = vmatprep.mubr.bf16.mxu0 0
        %4031 = vmatmul.mubr.bf16.gmra.mrb[0].mxu0 %v3793
        %v4032 = vpop.f32.mrb[0].mxu0
        %v4033 = vadd.f32 %v3813, %v4032
        %v4034 = vpop.f32.mrb[0].mxu0
        %v4035 = vpop.f32.mrb[0].mxu0
        %v4036 = vadd.f32 %v3813, %v4035
        %v4037 = vpop.f32.mrb[0].mxu0
        %4038 = vdwg.mxu0
        %v4039 = vmax.f32 %v3897, 0.0
        %v4040 = vmax.f32 %v3900, 0.0
        %v4041 = vmax.f32 %v3905, 0.0
        %v4042 = vmax.f32 %v3908, 0.0
        %v4043 = vmax.f32 %v3913, 0.0
        %v4044 = vmax.f32 %v3916, 0.0
        %v4045 = vmax.f32 %v3921, 0.0
        %v4046 = vmax.f32 %v3924, 0.0
        %v4047 = vmax.f32 %v3929, 0.0
        %v4048 = vmax.f32 %v3932, 0.0
        %v4049 = vmax.f32 %v3937, 0.0
        %v4050 = vmax.f32 %v3940, 0.0
        %v4051 = vmax.f32 %v3945, 0.0
        %v4052 = vmax.f32 %v3948, 0.0
        %v4053 = vmax.f32 %v3953, 0.0
        %v4054 = vmax.f32 %v3956, 0.0
        %v4055 = vmax.f32 %v3961, 0.0
        %v4056 = vmax.f32 %v3964, 0.0
        %v4057 = vmax.f32 %v3969, 0.0
        %v4058 = vmax.f32 %v3972, 0.0
        %v4059 = vmax.f32 %v3977, 0.0
        %v4060 = vmax.f32 %v3980, 0.0
        %v4061 = vmax.f32 %v3985, 0.0
        %v4062 = vmax.f32 %v3988, 0.0
        %v4063 = vmax.f32 %v3993, 0.0
        %v4064 = vmax.f32 %v3996, 0.0
        %v4065 = vmax.f32 %v4001, 0.0
        %v4066 = vmax.f32 %v4004, 0.0
        %v4067 = vmax.f32 %v4009, 0.0
        %v4068 = vmax.f32 %v4012, 0.0
        %v4069 = vmax.f32 %v4017, 0.0
        %v4070 = vmax.f32 %v4020, 0.0
        %v4071 = vmax.f32 %v4025, 0.0
        %v4072 = vmax.f32 %v4028, 0.0
        %v4073 = vmax.f32 %v4033, 0.0
        %v4074 = vmax.f32 %v4036, 0.0
        %v4075 = vld [vmem:[%s8] sm:$0x1]
        %v4076 = vpack.c.bf16 %v4040, %v4039
        %v4077 = vpack.c.bf16 %v4042, %v4041
        %v4078 = vpack.c.bf16 %v4044, %v4043
        %v4079 = vpack.c.bf16 %v4046, %v4045
        %v4080 = vpack.c.bf16 %v4048, %v4047
        %v4081 = vpack.c.bf16 %v4050, %v4049
        %v4082 = vpack.c.bf16 %v4052, %v4051
        %v4083 = vpack.c.bf16 %v4054, %v4053
        %v4084 = vpack.c.bf16 %v4056, %v4055
        %v4085 = vpack.c.bf16 %v4058, %v4057
        %v4086 = vpack.c.bf16 %v4060, %v4059
        %v4087 = vpack.c.bf16 %v4062, %v4061
        %v4088 = vpack.c.bf16 %v4064, %v4063
        %v4089 = vpack.c.bf16 %v4066, %v4065
        %v4090 = vpack.c.bf16 %v4068, %v4067
        %v4091 = vpack.c.bf16 %v4070, %v4069
        %v4092 = vpack.c.bf16 %v4072, %v4071
        %v4093 = vpack.c.bf16 %v4074, %v4073
        %v4094 = vld [vmem:[%s6] sm:$0xf]
        %v4095 = vld [vmem:[%s6 + $0x4] sm:$0xf]
        %v4096 = vld [vmem:[%s6 + $0x8] sm:$0xf]
        %v4097 = vld [vmem:[%s6 + $0xc] sm:$0xf]
        %v4098 = vld [vmem:[%s6 + $0x10] sm:$0xf]
        %v4099 = vld [vmem:[%s6 + $0x14] sm:$0xf]
        %v4100 = vld [vmem:[%s6 + $0x18] sm:$0xf]
        %v4101 = vld [vmem:[%s6 + $0x1c] sm:$0xf]
        %v4102 = vld [vmem:[%s6 + $0x20] sm:$0xf]
        %v4103 = vld [vmem:[%s6 + $0x24] sm:$0xf]
        %v4104 = vld [vmem:[%s6 + $0x28] sm:$0xf]
        %v4105 = vld [vmem:[%s6 + $0x2c] sm:$0xf]
        %v4106 = vld [vmem:[%s6 + $0x30] sm:$0xf]
        %v4107 = vld [vmem:[%s6 + $0x34] sm:$0xf]
        %v4108 = vld [vmem:[%s6 + $0x38] sm:$0xf]
        %v4109 = vld [vmem:[%s6 + $0x3c] sm:$0xf]
        %v4111 = vlaneseq
        %v4112 = vshrl.u32 %v4111, 7
        %v4113 = vsub.s32 0, %v4112
        %v4114 = vrot.slane %v4075, %v4113
        %v4132 = vunpack.c.l.b16 %v4094
        %v4133 = vunpack.c.l.b16 %v4095
        %v4134 = vunpack.c.l.b16 %v4096
        %v4135 = vunpack.c.l.b16 %v4097
        %v4136 = vunpack.c.l.b16 %v4098
        %v4137 = vunpack.c.l.b16 %v4099
        %v4138 = vunpack.c.l.b16 %v4100
        %v4139 = vunpack.c.l.b16 %v4101
        %v4140 = vunpack.c.l.b16 %v4102
        %v4141 = vunpack.c.l.b16 %v4103
        %v4142 = vunpack.c.l.b16 %v4104
        %v4143 = vunpack.c.l.b16 %v4105
        %v4144 = vunpack.c.l.b16 %v4106
        %v4145 = vunpack.c.l.b16 %v4107
        %v4146 = vunpack.c.l.b16 %v4108
        %v4147 = vunpack.c.l.b16 %v4109
        %v4148 = vpack.c.b16 %v4133, %v4132
        %v4149 = vpack.c.b16 %v4135, %v4134
        %v4150 = vpack.c.b16 %v4137, %v4136
        %v4151 = vpack.c.b16 %v4139, %v4138
        %v4152 = vpack.c.b16 %v4141, %v4140
        %v4153 = vpack.c.b16 %v4143, %v4142
        %v4154 = vpack.c.b16 %v4145, %v4144
        %v4155 = vpack.c.b16 %v4147, %v4146
        %4164 = vmatprep.subr.bf16.mxu0 0
        %4165 = vmatpush1.bf16.msra.mxu0 %v4148
        %4166 = vmatprep.subr.bf16.mxu0 0
        %4167 = vmatpush1.bf16.msra.mxu0 %v4149
        %4168 = vmatprep.subr.bf16.mxu0 0
        %4169 = vmatpush1.bf16.msra.mxu0 %v4150
        %4170 = vmatprep.subr.bf16.mxu0 0
        %4171 = vmatpush1.bf16.msra.mxu0 %v4151
        %4172 = vmatprep.subr.bf16.mxu0 0
        %4173 = vmatpush1.bf16.msra.mxu0 %v4152
        %4174 = vmatprep.subr.bf16.mxu0 0
        %4175 = vmatpush1.bf16.msra.mxu0 %v4153
        %4176 = vmatprep.subr.bf16.mxu0 0
        %4177 = vmatpush1.bf16.msra.mxu0 %v4154
        %4178 = vmatprep.subr.bf16.mxu0 0
        %4179 = vmatpush1.bf16.msra.mxu0 %v4155
        %4180 = vmatprep.subr.bf16.mxu0 0
        %4181 = vmatpush1.bf16.msra.mxu0 0
        %4182 = vmatprep.subr.bf16.mxu0 0
        %4183 = vmatpush1.bf16.msra.mxu0 0
        %4184 = vmatprep.subr.bf16.mxu0 0
        %4185 = vmatpush1.bf16.msra.mxu0 0
        %4186 = vmatprep.subr.bf16.mxu0 0
        %4187 = vmatpush1.bf16.msra.mxu0 0
        %4188 = vmatprep.subr.bf16.mxu0 0
        %4189 = vmatpush1.bf16.msra.mxu0 0
        %4190 = vmatprep.subr.bf16.mxu0 0
        %4191 = vmatpush1.bf16.msra.mxu0 0
        %4192 = vmatprep.subr.bf16.mxu0 0
        %4193 = vmatpush1.bf16.msra.mxu0 0
        %4194 = vmatprep.subr.bf16.mxu0 0
        %4195 = vmatpush1.bf16.msra.mxu0 0
        %4196 = vmatprep.mubr.bf16.mxu0 0
        %4197 = vmatmul.mubr.bf16.gmra.mrb[0].mxu0 %v4076
        %v4198 = vpop.f32.mrb[0].mxu0
        %v4199 = vadd.f32 %v4114, %v4198
        %v4200 = vpop.f32.mrb[0].mxu0
        %v4201 = vpop.f32.mrb[0].mxu0
        %v4202 = vadd.f32 %v4114, %v4201
        %v4203 = vpop.f32.mrb[0].mxu0
        %4204 = vmatprep.mubr.bf16.mxu0 0
        %4205 = vmatmul.mubr.bf16.gmra.mrb[0].mxu0 %v4077
        %v4206 = vpop.f32.mrb[0].mxu0
        %v4207 = vadd.f32 %v4114, %v4206
        %v4208 = vpop.f32.mrb[0].mxu0
        %v4209 = vpop.f32.mrb[0].mxu0
        %v4210 = vadd.f32 %v4114, %v4209
        %v4211 = vpop.f32.mrb[0].mxu0
        %4212 = vmatprep.mubr.bf16.mxu0 0
        %4213 = vmatmul.mubr.bf16.gmra.mrb[0].mxu0 %v4078
        %v4214 = vpop.f32.mrb[0].mxu0
        %v4215 = vadd.f32 %v4114, %v4214
        %v4216 = vpop.f32.mrb[0].mxu0
        %v4217 = vpop.f32.mrb[0].mxu0
        %v4218 = vadd.f32 %v4114, %v4217
        %v4219 = vpop.f32.mrb[0].mxu0
        %4220 = vmatprep.mubr.bf16.mxu0 0
        %4221 = vmatmul.mubr.bf16.gmra.mrb[0].mxu0 %v4079
        %v4222 = vpop.f32.mrb[0].mxu0
        %v4223 = vadd.f32 %v4114, %v4222
        %v4224 = vpop.f32.mrb[0].mxu0
        %v4225 = vpop.f32.mrb[0].mxu0
        %v4226 = vadd.f32 %v4114, %v4225
        %v4227 = vpop.f32.mrb[0].mxu0
        %4228 = vmatprep.mubr.bf16.mxu0 0
        %4229 = vmatmul.mubr.bf16.gmra.mrb[0].mxu0 %v4080
        %v4230 = vpop.f32.mrb[0].mxu0
        %v4231 = vadd.f32 %v4114, %v4230
        %v4232 = vpop.f32.mrb[0].mxu0
        %v4233 = vpop.f32.mrb[0].mxu0
        %v4234 = vadd.f32 %v4114, %v4233
        %v4235 = vpop.f32.mrb[0].mxu0
        %4236 = vmatprep.mubr.bf16.mxu0 0
        %4237 = vmatmul.mubr.bf16.gmra.mrb[0].mxu0 %v4081
        %v4238 = vpop.f32.mrb[0].mxu0
        %v4239 = vadd.f32 %v4114, %v4238
        %v4240 = vpop.f32.mrb[0].mxu0
        %v4241 = vpop.f32.mrb[0].mxu0
        %v4242 = vadd.f32 %v4114, %v4241
        %v4243 = vpop.f32.mrb[0].mxu0
        %4244 = vmatprep.mubr.bf16.mxu0 0
        %4245 = vmatmul.mubr.bf16.gmra.mrb[0].mxu0 %v4082
        %v4246 = vpop.f32.mrb[0].mxu0
        %v4247 = vadd.f32 %v4114, %v4246
        %v4248 = vpop.f32.mrb[0].mxu0
        %v4249 = vpop.f32.mrb[0].mxu0
        %v4250 = vadd.f32 %v4114, %v4249
        %v4251 = vpop.f32.mrb[0].mxu0
        %4252 = vmatprep.mubr.bf16.mxu0 0
        %4253 = vmatmul.mubr.bf16.gmra.mrb[0].mxu0 %v4083
        %v4254 = vpop.f32.mrb[0].mxu0
        %v4255 = vadd.f32 %v4114, %v4254
        %v4256 = vpop.f32.mrb[0].mxu0
        %v4257 = vpop.f32.mrb[0].mxu0
        %v4258 = vadd.f32 %v4114, %v4257
        %v4259 = vpop.f32.mrb[0].mxu0
        %4260 = vmatprep.mubr.bf16.mxu0 0
        %4261 = vmatmul.mubr.bf16.gmra.mrb[0].mxu0 %v4084
        %v4262 = vpop.f32.mrb[0].mxu0
        %v4263 = vadd.f32 %v4114, %v4262
        %v4264 = vpop.f32.mrb[0].mxu0
        %v4265 = vpop.f32.mrb[0].mxu0
        %v4266 = vadd.f32 %v4114, %v4265
        %v4267 = vpop.f32.mrb[0].mxu0
        %4268 = vmatprep.mubr.bf16.mxu0 0
        %4269 = vmatmul.mubr.bf16.gmra.mrb[0].mxu0 %v4085
        %v4270 = vpop.f32.mrb[0].mxu0
        %v4271 = vadd.f32 %v4114, %v4270
        %v4272 = vpop.f32.mrb[0].mxu0
        %v4273 = vpop.f32.mrb[0].mxu0
        %v4274 = vadd.f32 %v4114, %v4273
        %v4275 = vpop.f32.mrb[0].mxu0
        %4276 = vmatprep.mubr.bf16.mxu0 0
        %4277 = vmatmul.mubr.bf16.gmra.mrb[0].mxu0 %v4086
        %v4278 = vpop.f32.mrb[0].mxu0
        %v4279 = vadd.f32 %v4114, %v4278
        %v4280 = vpop.f32.mrb[0].mxu0
        %v4281 = vpop.f32.mrb[0].mxu0
        %v4282 = vadd.f32 %v4114, %v4281
        %v4283 = vpop.f32.mrb[0].mxu0
        %4284 = vmatprep.mubr.bf16.mxu0 0
        %4285 = vmatmul.mubr.bf16.gmra.mrb[0].mxu0 %v4087
        %v4286 = vpop.f32.mrb[0].mxu0
        %v4287 = vadd.f32 %v4114, %v4286
        %v4288 = vpop.f32.mrb[0].mxu0
        %v4289 = vpop.f32.mrb[0].mxu0
        %v4290 = vadd.f32 %v4114, %v4289
        %v4291 = vpop.f32.mrb[0].mxu0
        %4292 = vmatprep.mubr.bf16.mxu0 0
        %4293 = vmatmul.mubr.bf16.gmra.mrb[0].mxu0 %v4088
        %v4294 = vpop.f32.mrb[0].mxu0
        %v4295 = vadd.f32 %v4114, %v4294
        %v4296 = vpop.f32.mrb[0].mxu0
        %v4297 = vpop.f32.mrb[0].mxu0
        %v4298 = vadd.f32 %v4114, %v4297
        %v4299 = vpop.f32.mrb[0].mxu0
        %4300 = vmatprep.mubr.bf16.mxu0 0
        %4301 = vmatmul.mubr.bf16.gmra.mrb[0].mxu0 %v4089
        %v4302 = vpop.f32.mrb[0].mxu0
        %v4303 = vadd.f32 %v4114, %v4302
        %v4304 = vpop.f32.mrb[0].mxu0
        %v4305 = vpop.f32.mrb[0].mxu0
        %v4306 = vadd.f32 %v4114, %v4305
        %v4307 = vpop.f32.mrb[0].mxu0
        %4308 = vmatprep.mubr.bf16.mxu0 0
        %4309 = vmatmul.mubr.bf16.gmra.mrb[0].mxu0 %v4090
        %v4310 = vpop.f32.mrb[0].mxu0
        %v4311 = vadd.f32 %v4114, %v4310
        %v4312 = vpop.f32.mrb[0].mxu0
        %v4313 = vpop.f32.mrb[0].mxu0
        %v4314 = vadd.f32 %v4114, %v4313
        %v4315 = vpop.f32.mrb[0].mxu0
        %4316 = vmatprep.mubr.bf16.mxu0 0
        %4317 = vmatmul.mubr.bf16.gmra.mrb[0].mxu0 %v4091
        %v4318 = vpop.f32.mrb[0].mxu0
        %v4319 = vadd.f32 %v4114, %v4318
        %v4320 = vpop.f32.mrb[0].mxu0
        %v4321 = vpop.f32.mrb[0].mxu0
        %v4322 = vadd.f32 %v4114, %v4321
        %v4323 = vpop.f32.mrb[0].mxu0
        %4324 = vmatprep.mubr.bf16.mxu0 0
        %4325 = vmatmul.mubr.bf16.gmra.mrb[0].mxu0 %v4092
        %v4326 = vpop.f32.mrb[0].mxu0
        %v4327 = vadd.f32 %v4114, %v4326
        %v4328 = vpop.f32.mrb[0].mxu0
        %v4329 = vpop.f32.mrb[0].mxu0
        %v4330 = vadd.f32 %v4114, %v4329
        %v4331 = vpop.f32.mrb[0].mxu0
        %4332 = vmatprep.mubr.bf16.mxu0 0
        %4333 = vmatmul.mubr.bf16.gmra.mrb[0].mxu0 %v4093
        %v4334 = vpop.f32.mrb[0].mxu0
        %v4335 = vadd.f32 %v4114, %v4334
        %v4336 = vpop.f32.mrb[0].mxu0
        %v4337 = vpop.f32.mrb[0].mxu0
        %v4338 = vadd.f32 %v4114, %v4337
        %v4339 = vpop.f32.mrb[0].mxu0
        %4340 = vdwg.mxu0
        %4373 = vset.pattern.permute.xlu0 0
        %4374 = vperm.xlu0 %4373, %v4199
        %v4375 = vpop.permute.xlu0 %4374
        %4376 = vset.pattern.permute.xlu0 0
        %4377 = vperm.xlu0 %4376, %v4202
        %v4378 = vpop.permute.xlu0 %4377
        %4379 = vset.pattern.permute.xlu0 0
        %4380 = vperm.xlu0 %4379, %v4207
        %v4381 = vpop.permute.xlu0 %4380
        %4382 = vset.pattern.permute.xlu0 0
        %4383 = vperm.xlu0 %4382, %v4210
        %v4384 = vpop.permute.xlu0 %4383
        %4385 = vset.pattern.permute.xlu0 0
        %4386 = vperm.xlu0 %4385, %v4215
        %v4387 = vpop.permute.xlu0 %4386
        %4388 = vset.pattern.permute.xlu0 0
        %4389 = vperm.xlu0 %4388, %v4218
        %v4390 = vpop.permute.xlu0 %4389
        %4391 = vset.pattern.permute.xlu0 0
        %4392 = vperm.xlu0 %4391, %v4223
        %v4393 = vpop.permute.xlu0 %4392
        %4394 = vset.pattern.permute.xlu0 0
        %4395 = vperm.xlu0 %4394, %v4226
        %v4396 = vpop.permute.xlu0 %4395
        %4397 = vset.pattern.permute.xlu0 0
        %4398 = vperm.xlu0 %4397, %v4231
        %v4399 = vpop.permute.xlu0 %4398
        %4400 = vset.pattern.permute.xlu0 0
        %4401 = vperm.xlu0 %4400, %v4234
        %v4402 = vpop.permute.xlu0 %4401
        %4403 = vset.pattern.permute.xlu0 0
        %4404 = vperm.xlu0 %4403, %v4239
        %v4405 = vpop.permute.xlu0 %4404
        %4406 = vset.pattern.permute.xlu0 0
        %4407 = vperm.xlu0 %4406, %v4242
        %v4408 = vpop.permute.xlu0 %4407
        %4409 = vset.pattern.permute.xlu0 0
        %4410 = vperm.xlu0 %4409, %v4247
        %v4411 = vpop.permute.xlu0 %4410
        %4412 = vset.pattern.permute.xlu0 0
        %4413 = vperm.xlu0 %4412, %v4250
        %v4414 = vpop.permute.xlu0 %4413
        %4415 = vset.pattern.permute.xlu0 0
        %4416 = vperm.xlu0 %4415, %v4255
        %v4417 = vpop.permute.xlu0 %4416
        %4418 = vset.pattern.permute.xlu0 0
        %4419 = vperm.xlu0 %4418, %v4258
        %v4420 = vpop.permute.xlu0 %4419
        %4421 = vset.pattern.permute.xlu0 0
        %4422 = vperm.xlu0 %4421, %v4263
        %v4423 = vpop.permute.xlu0 %4422
        %4424 = vset.pattern.permute.xlu0 0
        %4425 = vperm.xlu0 %4424, %v4266
        %v4426 = vpop.permute.xlu0 %4425
        %4427 = vset.pattern.permute.xlu0 0
        %4428 = vperm.xlu0 %4427, %v4271
        %v4429 = vpop.permute.xlu0 %4428
        %4430 = vset.pattern.permute.xlu0 0
        %4431 = vperm.xlu0 %4430, %v4274
        %v4432 = vpop.permute.xlu0 %4431
        %4433 = vset.pattern.permute.xlu0 0
        %4434 = vperm.xlu0 %4433, %v4279
        %v4435 = vpop.permute.xlu0 %4434
        %4436 = vset.pattern.permute.xlu0 0
        %4437 = vperm.xlu0 %4436, %v4282
        %v4438 = vpop.permute.xlu0 %4437
        %4439 = vset.pattern.permute.xlu0 0
        %4440 = vperm.xlu0 %4439, %v4287
        %v4441 = vpop.permute.xlu0 %4440
        %4442 = vset.pattern.permute.xlu0 0
        %4443 = vperm.xlu0 %4442, %v4290
        %v4444 = vpop.permute.xlu0 %4443
        %4445 = vset.pattern.permute.xlu0 0
        %4446 = vperm.xlu0 %4445, %v4295
        %v4447 = vpop.permute.xlu0 %4446
        %4448 = vset.pattern.permute.xlu0 0
        %4449 = vperm.xlu0 %4448, %v4298
        %v4450 = vpop.permute.xlu0 %4449
        %4451 = vset.pattern.permute.xlu0 0
        %4452 = vperm.xlu0 %4451, %v4303
        %v4453 = vpop.permute.xlu0 %4452
        %4454 = vset.pattern.permute.xlu0 0
        %4455 = vperm.xlu0 %4454, %v4306
        %v4456 = vpop.permute.xlu0 %4455
        %4457 = vset.pattern.permute.xlu0 0
        %4458 = vperm.xlu0 %4457, %v4311
        %v4459 = vpop.permute.xlu0 %4458
        %4460 = vset.pattern.permute.xlu0 0
        %4461 = vperm.xlu0 %4460, %v4314
        %v4462 = vpop.permute.xlu0 %4461
        %4463 = vset.pattern.permute.xlu0 0
        %4464 = vperm.xlu0 %4463, %v4319
        %v4465 = vpop.permute.xlu0 %4464
        %4466 = vset.pattern.permute.xlu0 0
        %4467 = vperm.xlu0 %4466, %v4322
        %v4468 = vpop.permute.xlu0 %4467
        %v4469 = vlaneseq
        %v4470 = vand.u32 %v4469, 127
        %v4471 = vlaneseq
        %v4472 = vshrl.u32 %v4471, 7
        %v4473 = vsub.s32 %v4470, %v4472
        %v4474 = vrot.slane %v4375, %v4473
        %v4475 = vlaneseq
        %v4476 = vshrl.u32 %v4475, 7
        %v4477 = vsub.s32 %v4470, %v4476
        %v4478 = vrot.slane %v4378, %v4477
        %v4479 = vlaneseq
        %v4480 = vshrl.u32 %v4479, 7
        %v4481 = vsub.s32 %v4470, %v4480
        %v4482 = vrot.slane %v4381, %v4481
        %v4483 = vlaneseq
        %v4484 = vshrl.u32 %v4483, 7
        %v4485 = vsub.s32 %v4470, %v4484
        %v4486 = vrot.slane %v4384, %v4485
        %v4487 = vlaneseq
        %v4488 = vshrl.u32 %v4487, 7
        %v4489 = vsub.s32 %v4470, %v4488
        %v4490 = vrot.slane %v4387, %v4489
        %v4491 = vlaneseq
        %v4492 = vshrl.u32 %v4491, 7
        %v4493 = vsub.s32 %v4470, %v4492
        %v4494 = vrot.slane %v4390, %v4493
        %v4495 = vlaneseq
        %v4496 = vshrl.u32 %v4495, 7
        %v4497 = vsub.s32 %v4470, %v4496
        %v4498 = vrot.slane %v4393, %v4497
        %v4499 = vlaneseq
        %v4500 = vshrl.u32 %v4499, 7
        %v4501 = vsub.s32 %v4470, %v4500
        %v4502 = vrot.slane %v4396, %v4501
        %v4503 = vlaneseq
        %v4504 = vshrl.u32 %v4503, 7
        %v4505 = vsub.s32 %v4470, %v4504
        %v4506 = vrot.slane %v4399, %v4505
        %v4507 = vlaneseq
        %v4508 = vshrl.u32 %v4507, 7
        %v4509 = vsub.s32 %v4470, %v4508
        %v4510 = vrot.slane %v4402, %v4509
        %v4511 = vlaneseq
        %v4512 = vshrl.u32 %v4511, 7
        %v4513 = vsub.s32 %v4470, %v4512
        %v4514 = vrot.slane %v4405, %v4513
        %v4515 = vlaneseq
        %v4516 = vshrl.u32 %v4515, 7
        %v4517 = vsub.s32 %v4470, %v4516
        %v4518 = vrot.slane %v4408, %v4517
        %v4519 = vlaneseq
        %v4520 = vshrl.u32 %v4519, 7
        %v4521 = vsub.s32 %v4470, %v4520
        %v4522 = vrot.slane %v4411, %v4521
        %v4523 = vlaneseq
        %v4524 = vshrl.u32 %v4523, 7
        %v4525 = vsub.s32 %v4470, %v4524
        %v4526 = vrot.slane %v4414, %v4525
        %v4527 = vlaneseq
        %v4528 = vshrl.u32 %v4527, 7
        %v4529 = vsub.s32 %v4470, %v4528
        %v4530 = vrot.slane %v4417, %v4529
        %v4531 = vlaneseq
        %v4532 = vshrl.u32 %v4531, 7
        %v4533 = vsub.s32 %v4470, %v4532
        %v4534 = vrot.slane %v4420, %v4533
        %v4535 = vlaneseq
        %v4536 = vshrl.u32 %v4535, 7
        %v4537 = vsub.s32 %v4470, %v4536
        %v4538 = vrot.slane %v4423, %v4537
        %v4539 = vlaneseq
        %v4540 = vshrl.u32 %v4539, 7
        %v4541 = vsub.s32 %v4470, %v4540
        %v4542 = vrot.slane %v4426, %v4541
        %v4543 = vlaneseq
        %v4544 = vshrl.u32 %v4543, 7
        %v4545 = vsub.s32 %v4470, %v4544
        %v4546 = vrot.slane %v4429, %v4545
        %v4547 = vlaneseq
        %v4548 = vshrl.u32 %v4547, 7
        %v4549 = vsub.s32 %v4470, %v4548
        %v4550 = vrot.slane %v4432, %v4549
        %v4551 = vlaneseq
        %v4552 = vshrl.u32 %v4551, 7
        %v4553 = vsub.s32 %v4470, %v4552
        %v4554 = vrot.slane %v4435, %v4553
        %v4555 = vlaneseq
        %v4556 = vshrl.u32 %v4555, 7
        %v4557 = vsub.s32 %v4470, %v4556
        %v4558 = vrot.slane %v4438, %v4557
        %v4559 = vlaneseq
        %v4560 = vshrl.u32 %v4559, 7
        %v4561 = vsub.s32 %v4470, %v4560
        %v4562 = vrot.slane %v4441, %v4561
        %v4563 = vlaneseq
        %v4564 = vshrl.u32 %v4563, 7
        %v4565 = vsub.s32 %v4470, %v4564
        %v4566 = vrot.slane %v4444, %v4565
        %v4567 = vlaneseq
        %v4568 = vshrl.u32 %v4567, 7
        %v4569 = vsub.s32 %v4470, %v4568
        %v4570 = vrot.slane %v4447, %v4569
        %v4571 = vlaneseq
        %v4572 = vshrl.u32 %v4571, 7
        %v4573 = vsub.s32 %v4470, %v4572
        %v4574 = vrot.slane %v4450, %v4573
        %v4575 = vlaneseq
        %v4576 = vshrl.u32 %v4575, 7
        %v4577 = vsub.s32 %v4470, %v4576
        %v4578 = vrot.slane %v4453, %v4577
        %v4579 = vlaneseq
        %v4580 = vshrl.u32 %v4579, 7
        %v4581 = vsub.s32 %v4470, %v4580
        %v4582 = vrot.slane %v4456, %v4581
        %v4583 = vlaneseq
        %v4584 = vshrl.u32 %v4583, 7
        %v4585 = vsub.s32 %v4470, %v4584
        %v4586 = vrot.slane %v4459, %v4585
        %v4587 = vlaneseq
        %v4588 = vshrl.u32 %v4587, 7
        %v4589 = vsub.s32 %v4470, %v4588
        %v4590 = vrot.slane %v4462, %v4589
        %v4591 = vlaneseq
        %v4592 = vshrl.u32 %v4591, 7
        %v4593 = vsub.s32 %v4470, %v4592
        %v4594 = vrot.slane %v4465, %v4593
        %v4595 = vlaneseq
        %v4596 = vshrl.u32 %v4595, 7
        %v4597 = vsub.s32 %v4470, %v4596
        %v4598 = vrot.slane %v4468, %v4597
        %v4599 = vsel %vm3159, %v4478, %v4474
        %v4600 = vsel %vm3161, %v4482, %v4599
        %v4601 = vsel %vm3163, %v4486, %v4600
        %v4602 = vsel %vm3165, %v4490, %v4601
        %v4603 = vsel %vm3167, %v4494, %v4602
        %v4604 = vsel %vm3169, %v4498, %v4603
        %v4605 = vsel %vm3171, %v4502, %v4604
        %v4606 = vsel %vm3159, %v4510, %v4506
        %v4607 = vsel %vm3161, %v4514, %v4606
        %v4608 = vsel %vm3163, %v4518, %v4607
        %v4609 = vsel %vm3165, %v4522, %v4608
        %v4610 = vsel %vm3167, %v4526, %v4609
        %v4611 = vsel %vm3169, %v4530, %v4610
        %v4612 = vsel %vm3171, %v4534, %v4611
        %v4613 = vsel %vm3159, %v4542, %v4538
        %v4614 = vsel %vm3161, %v4546, %v4613
        %v4615 = vsel %vm3163, %v4550, %v4614
        %v4616 = vsel %vm3165, %v4554, %v4615
        %v4617 = vsel %vm3167, %v4558, %v4616
        %v4618 = vsel %vm3169, %v4562, %v4617
        %v4619 = vsel %vm3171, %v4566, %v4618
        %v4620 = vsel %vm3159, %v4574, %v4570
        %v4621 = vsel %vm3161, %v4578, %v4620
        %v4622 = vsel %vm3163, %v4582, %v4621
        %v4623 = vsel %vm3165, %v4586, %v4622
        %v4624 = vsel %vm3167, %v4590, %v4623
        %v4625 = vsel %vm3169, %v4594, %v4624
        %v4626 = vsel %vm3171, %v4598, %v4625
        %4635 = vrot.lane.b32.xlu0 %v4327, 7
        %v4636 = vpop.permute.xlu0 %4635
        %4637 = vrot.lane.b32.xlu0 %v4330, 7
        %v4638 = vpop.permute.xlu0 %4637
        %4639 = vrot.lane.b32.xlu0 %v4335, 7
        %v4640 = vpop.permute.xlu0 %4639
        %4641 = vrot.lane.b32.xlu0 %v4338, 7
        %v4642 = vpop.permute.xlu0 %4641
        %v4647 = vsel %vm2251, %v4605, %v4636
        %v4648 = vsel %vm2251, %v4612, %v4638
        %v4649 = vsel %vm2251, %v4619, %v4640
        %v4650 = vsel %vm2251, %v4626, %v4642
        %v4651 = vld [vmem:[%s450] sm:$0x3]
        %v4652 = vld [vmem:[%s450 + $0x2] sm:$0x3]
        %v4653 = vld [vmem:[%s450 + $0x4] sm:$0x3]
        %v4654 = vld [vmem:[%s450 + $0x6] sm:$0x3]
        %vm4655 = vnez %v4651
        %vm4656 = vnez %v4652
        %vm4657 = vnez %v4653
        %vm4658 = vnez %v4654
        %v4659 = vsel %vm4655, 16843009, 0
        %v4660 = vsel %vm4656, 16843009, 0
        %v4661 = vsel %vm4657, 16843009, 0
        %v4662 = vsel %vm4658, 16843009, 0
        %v4663 = vunpack.c.0.s8 %v4659
        %v4664 = vunpack.c.0.s8 %v4660
        %v4665 = vunpack.c.0.s8 %v4661
        %v4666 = vunpack.c.0.s8 %v4662
        %vm4667 = vcmp.ne.s32.totalorder %v4663, 0
        %vm4668 = vcmp.ne.s32.totalorder %v4664, 0
        %vm4669 = vcmp.ne.s32.totalorder %v4665, 0
        %vm4670 = vcmp.ne.s32.totalorder %v4666, 0
        %v4671 = vsel %vm4667, -inf, %v4647
        %v4672 = vsel %vm4668, -inf, %v4648
        %v4673 = vsel %vm4669, -inf, %v4649
        %v4674 = vsel %vm4670, -inf, %v4650
        %vm4675 = vcmask 72704
        %v4676 = vsel %vm4675, %v4671, 0.0
        %v4677 = vsel %vm4675, %v4672, 0.0
        %v4678 = vsel %vm4675, %v4673, 0.0
        %v4679 = vsel %vm4675, %v4674, 0.0
        %4680 = vst [vmem:[%s456] sm:$0xff] %v4676
        %4681 = vst [vmem:[%s456 + $0x8] sm:$0xff] %v4677
        %4682 = vst [vmem:[%s456 + $0x10] sm:$0xff] %v4678
        %4683 = vst [vmem:[%s456 + $0x18] sm:$0xff] %v4679
        %s4684 = smul.u32 4, %s20
        %p4685 = scmp.lt.s32.totalorder %s4684, 7
        %s4686 = scalar_select %p4685, %s4684, 7
        %s4687 = smul.addr %s4686, 8
        %s4688 = scalar_lea.vmem %s9, %s4687
        // Predicated region
        $region95: #{action_network_forward.1} parent=89 // pred_check
          %p4689 = pneg %p242
        $region96: #{action_network_forward.1} parent=89 // pred_check_branch
          %4691 = sbr.rel (%p4689) target = $region98
        $region97: #{action_network_forward.1} parent=89 // pred_region
          %s4692 = smul.u32 4, %s20
        $region98: #{action_network_forward.1} parent=89 // pred_fallthru
          _
      $region90: #{action_network_forward.1} parent=5 // pred_fallthru
        _
      %p4693 = scmp.le.s32.totalorder 2, %s15
      // Predicated region
      $region99: #{action_network_forward.1} parent=5 // pred_check
        %p4694 = pneg %p4693
      $region100: #{action_network_forward.1} parent=5 // pred_check_branch
        %4696 = sbr.rel (%p4694) target = $region102
      $region101: #{action_network_forward.1} parent=5 // pred_region
        %s4697 = ssub.s32 %s15, 2
        // Predicated region
        $region103: #{action_network_forward.1} parent=101 // pred_check
          %p4698 = pneg %p248
        $region104: #{action_network_forward.1} parent=101 // pred_check_branch
          %4700 = sbr.rel (%p4698) target = $region106
        $region105: #{action_network_forward.1} parent=101 // pred_region
          %s4701 = smul.u32 4, %s21
          %p4702 = scmp.lt.s32.totalorder %s4701, 7
          %s4703 = scalar_select %p4702, %s4701, 7
          %s4704 = smul.addr %s4703, 8
          %s4705 = scalar_lea.vmem %s9, %s4704
        $region106: #{action_network_forward.1} parent=101 // pred_fallthru
          _
      $region102: #{action_network_forward.1} parent=5 // pred_fallthru
        _
    $region6: #{action_network_forward.1} parent=1 // loop_footer
      %s19 = sadd.s32 1, %s15
    $region7: #{action_network_forward.1} parent=1 // loop_footer_branch
      %14 = sbr.rel target = $region3
    $region8: #{action_network_forward.1} parent=1 // loop_exit
      _

</llo_original>
